<compile_context>
chip_gen: v7x
topology: tpu7x:2x2x1
jax: 0.10.0
libtpu: 0.0.40
codegen_flags: <defaults>
</compile_context>

<pallas_src>
import functools

import jax
import jax.numpy as jnp
from jax import lax
from jax.experimental import pallas as pl
from jax.experimental.pallas import tpu as pltpu


# ----------------------------------------------------------------------------
# Generic single-block linear kernel (used for hoisted gate matmuls and the
# per-object attention feature projection).
# ----------------------------------------------------------------------------
def _linear_kernel(x_ref, w_ref, b_ref, o_ref, *, relu):
    y = jnp.dot(x_ref[...], w_ref[...], preferred_element_type=jnp.float32)
    y = y + b_ref[...]
    if relu:
        y = jnp.maximum(y, 0.0)
    o_ref[...] = y.astype(o_ref.dtype)


def linear_pallas(x, w, b, *, relu=False):
    """y = x @ w + b (optionally ReLU).  x:(M,K) w:(K,N) b:(N,)"""
    M, K = x.shape
    N = w.shape[1]
    b2 = b.reshape(1, N)
    return pl.pallas_call(
        functools.partial(_linear_kernel, relu=relu),
        out_shape=jax.ShapeDtypeStruct((M, N), x.dtype),
        grid=(1,),
        in_specs=[
            pl.BlockSpec((M, K), lambda i: (0, 0)),
            pl.BlockSpec((K, N), lambda i: (0, 0)),
            pl.BlockSpec((1, N), lambda i: (0, 0)),
        ],
        out_specs=pl.BlockSpec((M, N), lambda i: (0, 0)),
    )(x, w, b2)


# ----------------------------------------------------------------------------
# Fused single-direction LSTM recurrence: one pallas_call per layer/direction.
#   gates_x : (T, B, 4H)  precomputed x@Wx + b, streamed one step per grid iter
#   mask    : (B, T)      float step-valid mask, resident in VMEM
#   wh      : (H, 4H)     recurrent weight, resident in VMEM
# Outputs: out_seq (T, B, H)   masked hidden states (0 at padded steps)
#          h_last  (B, H)      final hidden (used as VMEM-resident carry)
#          c_last  (B, H)      final cell   (used as VMEM-resident carry)
# ----------------------------------------------------------------------------
def _lstm_seq_kernel(gx_ref, mask_ref, wh_ref, out_ref, h_ref, c_ref,
                     *, H, T, reverse):
    t = pl.program_id(0)

    @pl.when(t == 0)
    def _init():
        h_ref[...] = jnp.zeros_like(h_ref)
        c_ref[...] = jnp.zeros_like(c_ref)

    h = h_ref[...]                              # (B, H)  carry (VMEM resident)
    c = c_ref[...]                              # (B, H)
    gx = gx_ref[0]                              # (B, 4H)
    gates = gx + jnp.dot(h, wh_ref[...], preferred_element_type=jnp.float32)

    i_g = jax.nn.sigmoid(gates[:, 0:H])
    f_g = jax.nn.sigmoid(gates[:, H:2 * H])
    g_g = jnp.tanh(gates[:, 2 * H:3 * H])
    o_g = jax.nn.sigmoid(gates[:, 3 * H:4 * H])
    c_new = f_g * c + i_g * g_g
    h_new = o_g * jnp.tanh(c_new)

    # Physical time index of this grid step (reversed for the backward dir).
    te = (T - 1 - t) if reverse else t
    # Select column `te` of the resident (B, T) mask without dynamic slicing.
    col = lax.broadcasted_iota(jnp.int32, mask_ref.shape, 1)
    m = jnp.sum(jnp.where(col == te, mask_ref[...], 0.0),
                axis=1, keepdims=True)          # (B, 1) in {0, 1}

    h_upd = jnp.where(m > 0, h_new, h)
    c_upd = jnp.where(m > 0, c_new, c)
    h_ref[...] = h_upd.astype(h_ref.dtype)
    c_ref[...] = c_upd.astype(c_ref.dtype)
    out_ref[...] = ((h_upd * m).astype(out_ref.dtype))[None]


def lstm_seq_pallas(gates_x, mask_bt, wh, *, reverse):
    T, B, G4 = gates_x.shape
    H = G4 // 4

    if reverse:
        def tmap(t):
            return (T - 1 - t, 0, 0)
    else:
        def tmap(t):
            return (t, 0, 0)

    out_seq, h_last, c_last = pl.pallas_call(
        functools.partial(_lstm_seq_kernel, H=H, T=T, reverse=reverse),
        out_shape=(jax.ShapeDtypeStruct((T, B, H), gates_x.dtype),
                   jax.ShapeDtypeStruct((B, H), gates_x.dtype),
                   jax.ShapeDtypeStruct((B, H), gates_x.dtype)),
        grid=(T,),
        in_specs=[
            pl.BlockSpec((1, B, G4), tmap),            # per-step gate block
            pl.BlockSpec((B, T), lambda t: (0, 0)),    # resident mask
            pl.BlockSpec((H, G4), lambda t: (0, 0)),   # resident Wh
        ],
        out_specs=(pl.BlockSpec((1, B, H), tmap),
                   pl.BlockSpec((B, H), lambda t: (0, 0)),
                   pl.BlockSpec((B, H), lambda t: (0, 0))),
        compiler_params=pltpu.CompilerParams(
            dimension_semantics=("arbitrary",)),
    )(gates_x, mask_bt, wh)
    return out_seq, h_last, c_last


# ----------------------------------------------------------------------------
# Fused model tail: co-attention score (VPU multiply + lane reduce) + masked
# softmax + attention-weighted feature sum + v_proj + q_proj + classifier.
# Whole batch processed in one block (single launch).
# ----------------------------------------------------------------------------
def _tail_kernel(vpa_ref, feat_ref, cell_ref, nobj_ref,
                 awq_ref, abq_ref, aws_ref, abs_ref,
                 vw_ref, vb_ref, qw_ref, qb_ref, cw_ref, cb_ref, out_ref):
    vpa = vpa_ref[...]                 # (B, N, C)  relu(features @ Wv + bv)
    f = feat_ref[...]                  # (B, N, V)
    cell = cell_ref[...]               # (B, Q)

    # q-side attention projection.
    qpa = jnp.maximum(
        jnp.dot(cell, awq_ref[...], preferred_element_type=jnp.float32)
        + abq_ref[...], 0.0)                                   # (B, C)

    # Gated score: logits[b, n] = sum_c vpa[b,n,c] * qpa[b,c] * ws[c] + bs
    w_eff = qpa * aws_ref[...]                                 # (B, C)
    logits = jnp.sum(vpa * w_eff[:, None, :], axis=-1) + abs_ref[...]  # (B, N)

    # Masked softmax over objects.
    n = nobj_ref[...]                                          # (B, 1) int32
    valid = lax.broadcasted_iota(jnp.int32, logits.shape, 1) < n
    logits = jnp.where(valid, logits, -1e30)
    mmax = jnp.max(logits, axis=1, keepdims=True)
    e = jnp.exp(logits - mmax)
    att = e / jnp.sum(e, axis=1, keepdims=True)                # (B, N)

    # att * features, summed over objects.
    att_feat = jnp.sum(att[:, :, None] * f, axis=1)            # (B, V)

    v = jnp.maximum(
        jnp.dot(att_feat, vw_ref[...], preferred_element_type=jnp.float32)
        + vb_ref[...], 0.0)                                    # (B, C)
    q = jnp.maximum(
        jnp.dot(cell, qw_ref[...], preferred_element_type=jnp.float32)
        + qb_ref[...], 0.0)                                    # (B, C)

    # TODO(synk): classifier dropout(0.5) skipped (eval-mode semantics).
    pred = (jnp.dot(q * v, cw_ref[...], preferred_element_type=jnp.float32)
            + cb_ref[...])                                     # (B, A)
    out_ref[...] = pred.astype(out_ref.dtype)


def tail_fused_pallas(vpa, features, cell, n_objs_2d, params):
    B, N, V = features.shape
    C = vpa.shape[2]
    A = params["cls_w"].shape[1]

    args = (
        vpa, features, cell, n_objs_2d,
        params["att_wq"], params["att_bq"].reshape(1, C),
        params["att_ws"].reshape(1, C), params["att_bs"].reshape(1, 1),
        params["vproj_w"], params["vproj_b"].reshape(1, C),
        params["qproj_w"], params["qproj_b"].reshape(1, C),
        params["cls_w"], params["cls_b"].reshape(1, A),
    )

    def full_spec(arr):
        nd = arr.ndim
        return pl.BlockSpec(arr.shape, lambda i, _nd=nd: (0,) * _nd)

    return pl.pallas_call(
        _tail_kernel,
        out_shape=jax.ShapeDtypeStruct((B, A), features.dtype),
        grid=(1,),
        in_specs=[full_spec(a) for a in args],
        out_specs=pl.BlockSpec((B, A), lambda i: (0, 0)),
    )(*args)


# ----------------------------------------------------------------------------
# Model glue (embedding lookup, layer stacking).  Works in time-major layout
# so the recurrence kernels stream (1, B, .) blocks directly.
# ----------------------------------------------------------------------------
def encoder_forward(params, emb_tm, mask_bt, q_dim, num_layers):
    H = q_dim // 2
    x = emb_tm                                   # (T, B, D)
    h_f = c_f = h_b = c_b = None
    for layer in range(num_layers):
        T, B, D = x.shape
        x2 = x.reshape(T * B, D)
        pf = params["lstm"][layer]["fwd"]
        pb = params["lstm"][layer]["bwd"]
        # Hoisted input-gate matmuls: one big MXU matmul per direction.
        gx_f = linear_pallas(x2, pf["wx"], pf["b"]).reshape(T, B, 4 * H)
        gx_b = linear_pallas(x2, pb["wx"], pb["b"]).reshape(T, B, 4 * H)
        out_f, h_f, c_f = lstm_seq_pallas(gx_f, mask_bt, pf["wh"], reverse=False)
        out_b, h_b, c_b = lstm_seq_pallas(gx_b, mask_bt, pb["wh"], reverse=True)
        x = jnp.concatenate([out_f, out_b], axis=-1)   # (T, B, q_dim)
    cell = jnp.concatenate([c_f, c_b], axis=-1)        # (B, q_dim)
    hidden = jnp.concatenate([h_f, h_b], axis=-1)      # (B, q_dim)
    outputs = jnp.transpose(x, (1, 0, 2))              # (B, T, q_dim) (unused)
    return cell, hidden, outputs


def model_forward(params, question, q_lens, features, n_objs, *, q_dim, enc_layers):
    B, T = question.shape
    # Embedding lookup (gather; plain-JAX glue), time-major.
    emb_tm = params["embedding"][question.T]                     # (T, B, glove)
    mask_bt = (jnp.arange(T)[None, :] < q_lens[:, None]).astype(jnp.float32)

    cell, hidden, outputs = encoder_forward(params, emb_tm, mask_bt, q_dim, enc_layers)

    Bf, N, V = features.shape
    C = params["att_wv"].shape[1]
    # Per-object attention feature projection as one (B*N, V) @ (V, C) matmul.
    vpa = linear_pallas(features.reshape(Bf * N, V),
                        params["att_wv"], params["att_bv"],
                        relu=True).reshape(Bf, N, C)
    pred = tail_fused_pallas(vpa, features, cell,
                             n_objs.astype(jnp.int32).reshape(Bf, 1), params)
    return pred


# ----------------------------------------------------------------------------
# Deterministic parameter init
# ----------------------------------------------------------------------------
def init_params(key, *, vocab, glove_dim, q_dim, v_dim, common_dim, a_dim, enc_layers):
    H = q_dim // 2
    keys = iter(jax.random.split(key, 64))

    def nrm(shape, scale=0.1):
        return scale * jax.random.normal(next(keys), shape, dtype=jnp.float32)

    params = {"embedding": nrm((vocab, glove_dim), 0.5), "lstm": []}
    in_dim = glove_dim
    for _ in range(enc_layers):
        layer = {}
        for d in ("fwd", "bwd"):
            layer[d] = {"wx": nrm((in_dim, 4 * H)),
                        "wh": nrm((H, 4 * H)),
                        "b": nrm((4 * H,))}
        params["lstm"].append(layer)
        in_dim = q_dim  # bidirectional concat feeds the next layer

    params.update(
        att_wv=nrm((v_dim, common_dim)), att_bv=nrm((common_dim,)),
        att_wq=nrm((q_dim, common_dim)), att_bq=nrm((common_dim,)),
        att_ws=nrm((1, common_dim)), att_bs=nrm((1,)),
        vproj_w=nrm((v_dim, common_dim)), vproj_b=nrm((common_dim,)),
        qproj_w=nrm((q_dim, common_dim)), qproj_b=nrm((common_dim,)),
        cls_w=nrm((common_dim, a_dim)), cls_b=nrm((a_dim,)),
    )
    return params


# ----------------------------------------------------------------------------
if __name__ == "__main__":
    # Small shapes consistent with the module's forward signature.
    B, T, N_OBJ = 2, 8, 6
    VOCAB, GLOVE = 50, 16
    V_DIM, Q_DIM, COMMON, A_DIM, ENC_LAYERS = 32, 16, 16, 12, 2

    key = jax.random.PRNGKey(0)
    kp, kq, kl, kf, kn = jax.random.split(key, 5)

    params = init_params(kp, vocab=VOCAB, glove_dim=GLOVE, q_dim=Q_DIM,
                         v_dim=V_DIM, common_dim=COMMON, a_dim=A_DIM,
                         enc_layers=ENC_LAYERS)

    question = jax.random.randint(kq, (B, T), 0, VOCAB, dtype=jnp.int32)
    q_lens = jnp.array([T, T - 3], dtype=jnp.int32)
    features = jax.random.normal(kf, (B, N_OBJ, V_DIM), dtype=jnp.float32)
    n_objs = jnp.array([N_OBJ, N_OBJ - 2], dtype=jnp.int32)

    fwd = jax.jit(functools.partial(model_forward, q_dim=Q_DIM, enc_layers=ENC_LAYERS))
    pred = fwd(params, question, q_lens, features, n_objs)
    jax.block_until_ready(pred)
    assert pred.shape == (B, A_DIM), pred.shape
    print("KERNEL_OK")
</pallas_src>

<mosaic_0001>
module attributes {stable_mosaic.version = 11 : i64} {
  func.func @_lstm_seq_kernel(%arg0: i32, %arg1: memref<1x2x32xf32, #tpu.memory_space<vmem>>, %arg2: memref<2x8xf32, #tpu.memory_space<vmem>>, %arg3: memref<8x32xf32, #tpu.memory_space<vmem>>, %arg4: memref<1x2x8xf32, #tpu.memory_space<vmem>>, %arg5: memref<2x8xf32, #tpu.memory_space<vmem>>, %arg6: memref<2x8xf32, #tpu.memory_space<vmem>>) attributes {dimension_semantics = [#tpu.dimension_semantics<arbitrary>], iteration_bounds = array<i64: 8>, scalar_prefetch = 0 : i64, scratch_operands = 0 : i64, tpu.core_type = #tpu.core_type<tc>, window_params = [{transform_indices = @transform_0, window_bounds = array<i64: 1, 2, 32>}, {pipeline_mode = #tpu.pipeline_mode<synchronous>, transform_indices = @transform_1, window_bounds = array<i64: 2, 8>}, {pipeline_mode = #tpu.pipeline_mode<synchronous>, transform_indices = @transform_2, window_bounds = array<i64: 8, 32>}, {transform_indices = @transform_3, window_bounds = array<i64: 1, 2, 8>}, {pipeline_mode = #tpu.pipeline_mode<synchronous>, transform_indices = @transform_4, window_bounds = array<i64: 2, 8>}, {pipeline_mode = #tpu.pipeline_mode<synchronous>, transform_indices = @transform_5, window_bounds = array<i64: 2, 8>}]} {
    %c0_i32 = arith.constant 0 : i32
    %0 = arith.cmpi eq, %arg0, %c0_i32 : i32
    %1 = arith.extui %0 : i1 to i32
    %c0_i32_0 = arith.constant 0 : i32
    %2 = arith.cmpi ne, %1, %c0_i32_0 : i32
    scf.if %2 {
      %cst_25 = arith.constant 0.000000e+00 : f32
      %59 = vector.broadcast %cst_25 : f32 to vector<2x8xf32>
      %c0_26 = arith.constant 0 : index
      %c0_27 = arith.constant 0 : index
      %60 = vector.load %arg5[%c0_26, %c0_27] : memref<2x8xf32, #tpu.memory_space<vmem>>, vector<2x8xf32>
      tpu.vector_store %arg5[%c0_26, %c0_27], %59 {strides = array<i32>} : memref<2x8xf32, #tpu.memory_space<vmem>>, vector<2x8xf32>,
      %cst_28 = arith.constant 0.000000e+00 : f32
      %61 = vector.broadcast %cst_28 : f32 to vector<2x8xf32>
      %c0_29 = arith.constant 0 : index
      %c0_30 = arith.constant 0 : index
      %62 = vector.load %arg6[%c0_29, %c0_30] : memref<2x8xf32, #tpu.memory_space<vmem>>, vector<2x8xf32>
      tpu.vector_store %arg6[%c0_29, %c0_30], %61 {strides = array<i32>} : memref<2x8xf32, #tpu.memory_space<vmem>>, vector<2x8xf32>,
    } else {
    }
    %c0 = arith.constant 0 : index
    %c0_1 = arith.constant 0 : index
    %3 = vector.load %arg5[%c0, %c0_1] : memref<2x8xf32, #tpu.memory_space<vmem>>, vector<2x8xf32>
    %c0_2 = arith.constant 0 : index
    %c0_3 = arith.constant 0 : index
    %4 = vector.load %arg6[%c0_2, %c0_3] : memref<2x8xf32, #tpu.memory_space<vmem>>, vector<2x8xf32>
    %c0_4 = arith.constant 0 : index
    %c0_5 = arith.constant 0 : index
    %c0_6 = arith.constant 0 : index
    %5 = vector.load %arg1[%c0_4, %c0_5, %c0_6] : memref<1x2x32xf32, #tpu.memory_space<vmem>>, vector<1x2x32xf32>
    %6 = vector.shape_cast %5 : vector<1x2x32xf32> to vector<2x32xf32>
    %c0_7 = arith.constant 0 : index
    %c0_8 = arith.constant 0 : index
    %7 = vector.load %arg3[%c0_7, %c0_8] : memref<8x32xf32, #tpu.memory_space<vmem>>, vector<8x32xf32>
    %cst = arith.constant dense<0.000000e+00> : vector<2x32xf32>
    %8 = tpu.matmul %3, %7, %cst {dimension_numbers = #tpu.dot_dimension_numbers<[1], [0], [0], [1], [0, 0, 1, 1], [], []>} : vector<2x8xf32>, vector<8x32xf32>, vector<2x32xf32> -> vector<2x32xf32>
    %9 = arith.addf %6, %8 : vector<2x32xf32>
    %10 = vector.extract_strided_slice %9 {offsets = [0, 0], sizes = [2, 8], strides = [1, 1]} : vector<2x32xf32> to vector<2x8xf32>
    %11 = arith.negf %10 : vector<2x8xf32>
    %12 = math.exp %11 : vector<2x8xf32>
    %cst_9 = arith.constant 1.000000e+00 : f32
    %13 = vector.broadcast %cst_9 : f32 to vector<2x8xf32>
    %14 = arith.addf %13, %12 : vector<2x8xf32>
    %15 = arith.divf %13, %14 : vector<2x8xf32>
    %16 = vector.extract_strided_slice %9 {offsets = [0, 8], sizes = [2, 8], strides = [1, 1]} : vector<2x32xf32> to vector<2x8xf32>
    %17 = arith.negf %16 : vector<2x8xf32>
    %18 = math.exp %17 : vector<2x8xf32>
    %cst_10 = arith.constant 1.000000e+00 : f32
    %19 = vector.broadcast %cst_10 : f32 to vector<2x8xf32>
    %20 = arith.addf %19, %18 : vector<2x8xf32>
    %21 = arith.divf %19, %20 : vector<2x8xf32>
    %22 = vector.extract_strided_slice %9 {offsets = [0, 16], sizes = [2, 8], strides = [1, 1]} : vector<2x32xf32> to vector<2x8xf32>
    %23 = math.tanh %22 : vector<2x8xf32>
    %24 = vector.extract_strided_slice %9 {offsets = [0, 24], sizes = [2, 8], strides = [1, 1]} : vector<2x32xf32> to vector<2x8xf32>
    %25 = arith.negf %24 : vector<2x8xf32>
    %26 = math.exp %25 : vector<2x8xf32>
    %cst_11 = arith.constant 1.000000e+00 : f32
    %27 = vector.broadcast %cst_11 : f32 to vector<2x8xf32>
    %28 = arith.addf %27, %26 : vector<2x8xf32>
    %29 = arith.divf %27, %28 : vector<2x8xf32>
    %30 = arith.mulf %21, %4 : vector<2x8xf32>
    %31 = arith.mulf %15, %23 : vector<2x8xf32>
    %32 = arith.addf %30, %31 : vector<2x8xf32>
    %33 = math.tanh %32 : vector<2x8xf32>
    %34 = arith.mulf %29, %33 : vector<2x8xf32>
    %35 = tpu.iota {dimensions = array<i32: 1>} : vector<2x8xi32>
    %36 = vector.broadcast %arg0 : i32 to vector<2x8xi32>
    %37 = arith.cmpi eq, %35, %36 : vector<2x8xi32>
    %c0_12 = arith.constant 0 : index
    %c0_13 = arith.constant 0 : index
    %38 = vector.load %arg2[%c0_12, %c0_13] : memref<2x8xf32, #tpu.memory_space<vmem>>, vector<2x8xf32>
    %cst_14 = arith.constant 0.000000e+00 : f32
    %39 = vector.broadcast %cst_14 : f32 to vector<2x8xf32>
    %40 = arith.select %37, %38, %39 : vector<2x8xi1>, vector<2x8xf32>
    %cst_15 = arith.constant dense<0.000000e+00> : vector<2xf32>
    %41 = vector.multi_reduction <add>, %40, %cst_15 [1] : vector<2x8xf32> to vector<2xf32>
    %42 = vector.shape_cast %41 : vector<2xf32> to vector<2x1xf32>
    %cst_16 = arith.constant 0.000000e+00 : f32
    %43 = vector.broadcast %cst_16 : f32 to vector<2x1xf32>
    %44 = arith.cmpf ogt, %42, %43 : vector<2x1xf32>
    %45 = vector.shape_cast %44 : vector<2x1xi1> to vector<2x1xi1>
    %46 = vector.broadcast %45 : vector<2x1xi1> to vector<2x8xi1>
    %47 = arith.select %46, %34, %3 : vector<2x8xi1>, vector<2x8xf32>
    %cst_17 = arith.constant 0.000000e+00 : f32
    %48 = vector.broadcast %cst_17 : f32 to vector<2x1xf32>
    %49 = arith.cmpf ogt, %42, %48 : vector<2x1xf32>
    %50 = vector.shape_cast %49 : vector<2x1xi1> to vector<2x1xi1>
    %51 = vector.broadcast %50 : vector<2x1xi1> to vector<2x8xi1>
    %52 = arith.select %51, %32, %4 : vector<2x8xi1>, vector<2x8xf32>
    %c0_18 = arith.constant 0 : index
    %c0_19 = arith.constant 0 : index
    %53 = vector.load %arg5[%c0_18, %c0_19] : memref<2x8xf32, #tpu.memory_space<vmem>>, vector<2x8xf32>
    tpu.vector_store %arg5[%c0_18, %c0_19], %47 {strides = array<i32>} : memref<2x8xf32, #tpu.memory_space<vmem>>, vector<2x8xf32>,
    %c0_20 = arith.constant 0 : index
    %c0_21 = arith.constant 0 : index
    %54 = vector.load %arg6[%c0_20, %c0_21] : memref<2x8xf32, #tpu.memory_space<vmem>>, vector<2x8xf32>
    tpu.vector_store %arg6[%c0_20, %c0_21], %52 {strides = array<i32>} : memref<2x8xf32, #tpu.memory_space<vmem>>, vector<2x8xf32>,
    %55 = vector.broadcast %42 : vector<2x1xf32> to vector<2x8xf32>
    %56 = arith.mulf %47, %55 : vector<2x8xf32>
    %57 = vector.shape_cast %56 : vector<2x8xf32> to vector<1x2x8xf32>
    %c0_22 = arith.constant 0 : index
    %c0_23 = arith.constant 0 : index
    %c0_24 = arith.constant 0 : index
    %58 = vector.load %arg4[%c0_22, %c0_23, %c0_24] : memref<1x2x8xf32, #tpu.memory_space<vmem>>, vector<1x2x8xf32>
    tpu.vector_store %arg4[%c0_22, %c0_23, %c0_24], %57 {strides = array<i32>} : memref<1x2x8xf32, #tpu.memory_space<vmem>>, vector<1x2x8xf32>,
    return
  }
  func.func @transform_0(%arg0: i32) -> (i32, i32, i32) {
    %c0_i32 = arith.constant 0 : i32
    %c0_i32_0 = arith.constant 0 : i32
    %c0_i32_1 = arith.constant 0 : i32
    return %arg0, %c0_i32, %c0_i32_0 : i32, i32, i32
  }
  func.func @transform_1(%arg0: i32) -> (i32, i32) {
    %c0_i32 = arith.constant 0 : i32
    %c0_i32_0 = arith.constant 0 : i32
    %c0_i32_1 = arith.constant 0 : i32
    return %c0_i32, %c0_i32_0 : i32, i32
  }
  func.func @transform_2(%arg0: i32) -> (i32, i32) {
    %c0_i32 = arith.constant 0 : i32
    %c0_i32_0 = arith.constant 0 : i32
    %c0_i32_1 = arith.constant 0 : i32
    return %c0_i32, %c0_i32_0 : i32, i32
  }
  func.func @transform_3(%arg0: i32) -> (i32, i32, i32) {
    %c0_i32 = arith.constant 0 : i32
    %c0_i32_0 = arith.constant 0 : i32
    %c0_i32_1 = arith.constant 0 : i32
    return %arg0, %c0_i32, %c0_i32_0 : i32, i32, i32
  }
  func.func @transform_4(%arg0: i32) -> (i32, i32) {
    %c0_i32 = arith.constant 0 : i32
    %c0_i32_0 = arith.constant 0 : i32
    %c0_i32_1 = arith.constant 0 : i32
    return %c0_i32, %c0_i32_0 : i32, i32
  }
  func.func @transform_5(%arg0: i32) -> (i32, i32) {
    %c0_i32 = arith.constant 0 : i32
    %c0_i32_0 = arith.constant 0 : i32
    %c0_i32_1 = arith.constant 0 : i32
    return %c0_i32, %c0_i32_0 : i32, i32
  }
}

module attributes {stable_mosaic.version = 11 : i64} {
  func.func @_linear_kernel(%arg0: i32, %arg1: memref<16x16xf32, #tpu.memory_space<vmem>>, %arg2: memref<16x32xf32, #tpu.memory_space<vmem>>, %arg3: memref<1x32xf32, #tpu.memory_space<vmem>>, %arg4: memref<16x32xf32, #tpu.memory_space<vmem>>) attributes {dimension_semantics = [#tpu.dimension_semantics<arbitrary>], iteration_bounds = array<i64: 1>, scalar_prefetch = 0 : i64, scratch_operands = 0 : i64, tpu.core_type = #tpu.core_type<tc>, window_params = [{pipeline_mode = #tpu.pipeline_mode<synchronous>, transform_indices = @transform_0, window_bounds = array<i64: 16, 16>}, {pipeline_mode = #tpu.pipeline_mode<synchronous>, transform_indices = @transform_1, window_bounds = array<i64: 16, 32>}, {pipeline_mode = #tpu.pipeline_mode<synchronous>, transform_indices = @transform_2, window_bounds = array<i64: 1, 32>}, {pipeline_mode = #tpu.pipeline_mode<synchronous>, transform_indices = @transform_3, window_bounds = array<i64: 16, 32>}]} {
    %c0 = arith.constant 0 : index
    %c0_0 = arith.constant 0 : index
    %0 = vector.load %arg1[%c0, %c0_0] : memref<16x16xf32, #tpu.memory_space<vmem>>, vector<16x16xf32>
    %c0_1 = arith.constant 0 : index
    %c0_2 = arith.constant 0 : index
    %1 = vector.load %arg2[%c0_1, %c0_2] : memref<16x32xf32, #tpu.memory_space<vmem>>, vector<16x32xf32>
    %cst = arith.constant dense<0.000000e+00> : vector<16x32xf32>
    %2 = tpu.matmul %0, %1, %cst {dimension_numbers = #tpu.dot_dimension_numbers<[1], [0], [0], [1], [0, 0, 1, 1], [], []>} : vector<16x16xf32>, vector<16x32xf32>, vector<16x32xf32> -> vector<16x32xf32>
    %c0_3 = arith.constant 0 : index
    %c0_4 = arith.constant 0 : index
    %3 = vector.load %arg3[%c0_3, %c0_4] : memref<1x32xf32, #tpu.memory_space<vmem>>, vector<1x32xf32>
    %4 = vector.broadcast %3 : vector<1x32xf32> to vector<16x32xf32>
    %5 = arith.addf %2, %4 : vector<16x32xf32>
    %c0_5 = arith.constant 0 : index
    %c0_6 = arith.constant 0 : index
    %6 = vector.load %arg4[%c0_5, %c0_6] : memref<16x32xf32, #tpu.memory_space<vmem>>, vector<16x32xf32>
    tpu.vector_store %arg4[%c0_5, %c0_6], %5 {strides = array<i32>} : memref<16x32xf32, #tpu.memory_space<vmem>>, vector<16x32xf32>,
    return
  }
  func.func @transform_0(%arg0: i32) -> (i32, i32) {
    %c0_i32 = arith.constant 0 : i32
    %c0_i32_0 = arith.constant 0 : i32
    %c0_i32_1 = arith.constant 0 : i32
    return %c0_i32, %c0_i32_0 : i32, i32
  }
  func.func @transform_1(%arg0: i32) -> (i32, i32) {
    %c0_i32 = arith.constant 0 : i32
    %c0_i32_0 = arith.constant 0 : i32
    %c0_i32_1 = arith.constant 0 : i32
    return %c0_i32, %c0_i32_0 : i32, i32
  }
  func.func @transform_2(%arg0: i32) -> (i32, i32) {
    %c0_i32 = arith.constant 0 : i32
    %c0_i32_0 = arith.constant 0 : i32
    %c0_i32_1 = arith.constant 0 : i32
    return %c0_i32, %c0_i32_0 : i32, i32
  }
  func.func @transform_3(%arg0: i32) -> (i32, i32) {
    %c0_i32 = arith.constant 0 : i32
    %c0_i32_0 = arith.constant 0 : i32
    %c0_i32_1 = arith.constant 0 : i32
    return %c0_i32, %c0_i32_0 : i32, i32
  }
}

module attributes {stable_mosaic.version = 11 : i64} {
  func.func @_lstm_seq_kernel(%arg0: i32, %arg1: memref<1x2x32xf32, #tpu.memory_space<vmem>>, %arg2: memref<2x8xf32, #tpu.memory_space<vmem>>, %arg3: memref<8x32xf32, #tpu.memory_space<vmem>>, %arg4: memref<1x2x8xf32, #tpu.memory_space<vmem>>, %arg5: memref<2x8xf32, #tpu.memory_space<vmem>>, %arg6: memref<2x8xf32, #tpu.memory_space<vmem>>) attributes {dimension_semantics = [#tpu.dimension_semantics<arbitrary>], iteration_bounds = array<i64: 8>, scalar_prefetch = 0 : i64, scratch_operands = 0 : i64, tpu.core_type = #tpu.core_type<tc>, window_params = [{transform_indices = @transform_0, window_bounds = array<i64: 1, 2, 32>}, {pipeline_mode = #tpu.pipeline_mode<synchronous>, transform_indices = @transform_1, window_bounds = array<i64: 2, 8>}, {pipeline_mode = #tpu.pipeline_mode<synchronous>, transform_indices = @transform_2, window_bounds = array<i64: 8, 32>}, {transform_indices = @transform_3, window_bounds = array<i64: 1, 2, 8>}, {pipeline_mode = #tpu.pipeline_mode<synchronous>, transform_indices = @transform_4, window_bounds = array<i64: 2, 8>}, {pipeline_mode = #tpu.pipeline_mode<synchronous>, transform_indices = @transform_5, window_bounds = array<i64: 2, 8>}]} {
    %c0_i32 = arith.constant 0 : i32
    %0 = arith.cmpi eq, %arg0, %c0_i32 : i32
    %1 = arith.extui %0 : i1 to i32
    %c0_i32_0 = arith.constant 0 : i32
    %2 = arith.cmpi ne, %1, %c0_i32_0 : i32
    scf.if %2 {
      %cst_25 = arith.constant 0.000000e+00 : f32
      %60 = vector.broadcast %cst_25 : f32 to vector<2x8xf32>
      %c0_26 = arith.constant 0 : index
      %c0_27 = arith.constant 0 : index
      %61 = vector.load %arg5[%c0_26, %c0_27] : memref<2x8xf32, #tpu.memory_space<vmem>>, vector<2x8xf32>
      tpu.vector_store %arg5[%c0_26, %c0_27], %60 {strides = array<i32>} : memref<2x8xf32, #tpu.memory_space<vmem>>, vector<2x8xf32>,
      %cst_28 = arith.constant 0.000000e+00 : f32
      %62 = vector.broadcast %cst_28 : f32 to vector<2x8xf32>
      %c0_29 = arith.constant 0 : index
      %c0_30 = arith.constant 0 : index
      %63 = vector.load %arg6[%c0_29, %c0_30] : memref<2x8xf32, #tpu.memory_space<vmem>>, vector<2x8xf32>
      tpu.vector_store %arg6[%c0_29, %c0_30], %62 {strides = array<i32>} : memref<2x8xf32, #tpu.memory_space<vmem>>, vector<2x8xf32>,
    } else {
    }
    %c0 = arith.constant 0 : index
    %c0_1 = arith.constant 0 : index
    %3 = vector.load %arg5[%c0, %c0_1] : memref<2x8xf32, #tpu.memory_space<vmem>>, vector<2x8xf32>
    %c0_2 = arith.constant 0 : index
    %c0_3 = arith.constant 0 : index
    %4 = vector.load %arg6[%c0_2, %c0_3] : memref<2x8xf32, #tpu.memory_space<vmem>>, vector<2x8xf32>
    %c0_4 = arith.constant 0 : index
    %c0_5 = arith.constant 0 : index
    %c0_6 = arith.constant 0 : index
    %5 = vector.load %arg1[%c0_4, %c0_5, %c0_6] : memref<1x2x32xf32, #tpu.memory_space<vmem>>, vector<1x2x32xf32>
    %6 = vector.shape_cast %5 : vector<1x2x32xf32> to vector<2x32xf32>
    %c0_7 = arith.constant 0 : index
    %c0_8 = arith.constant 0 : index
    %7 = vector.load %arg3[%c0_7, %c0_8] : memref<8x32xf32, #tpu.memory_space<vmem>>, vector<8x32xf32>
    %cst = arith.constant dense<0.000000e+00> : vector<2x32xf32>
    %8 = tpu.matmul %3, %7, %cst {dimension_numbers = #tpu.dot_dimension_numbers<[1], [0], [0], [1], [0, 0, 1, 1], [], []>} : vector<2x8xf32>, vector<8x32xf32>, vector<2x32xf32> -> vector<2x32xf32>
    %9 = arith.addf %6, %8 : vector<2x32xf32>
    %10 = vector.extract_strided_slice %9 {offsets = [0, 0], sizes = [2, 8], strides = [1, 1]} : vector<2x32xf32> to vector<2x8xf32>
    %11 = arith.negf %10 : vector<2x8xf32>
    %12 = math.exp %11 : vector<2x8xf32>
    %cst_9 = arith.constant 1.000000e+00 : f32
    %13 = vector.broadcast %cst_9 : f32 to vector<2x8xf32>
    %14 = arith.addf %13, %12 : vector<2x8xf32>
    %15 = arith.divf %13, %14 : vector<2x8xf32>
    %16 = vector.extract_strided_slice %9 {offsets = [0, 8], sizes = [2, 8], strides = [1, 1]} : vector<2x32xf32> to vector<2x8xf32>
    %17 = arith.negf %16 : vector<2x8xf32>
    %18 = math.exp %17 : vector<2x8xf32>
    %cst_10 = arith.constant 1.000000e+00 : f32
    %19 = vector.broadcast %cst_10 : f32 to vector<2x8xf32>
    %20 = arith.addf %19, %18 : vector<2x8xf32>
    %21 = arith.divf %19, %20 : vector<2x8xf32>
    %22 = vector.extract_strided_slice %9 {offsets = [0, 16], sizes = [2, 8], strides = [1, 1]} : vector<2x32xf32> to vector<2x8xf32>
    %23 = math.tanh %22 : vector<2x8xf32>
    %24 = vector.extract_strided_slice %9 {offsets = [0, 24], sizes = [2, 8], strides = [1, 1]} : vector<2x32xf32> to vector<2x8xf32>
    %25 = arith.negf %24 : vector<2x8xf32>
    %26 = math.exp %25 : vector<2x8xf32>
    %cst_11 = arith.constant 1.000000e+00 : f32
    %27 = vector.broadcast %cst_11 : f32 to vector<2x8xf32>
    %28 = arith.addf %27, %26 : vector<2x8xf32>
    %29 = arith.divf %27, %28 : vector<2x8xf32>
    %30 = arith.mulf %21, %4 : vector<2x8xf32>
    %31 = arith.mulf %15, %23 : vector<2x8xf32>
    %32 = arith.addf %30, %31 : vector<2x8xf32>
    %33 = math.tanh %32 : vector<2x8xf32>
    %34 = arith.mulf %29, %33 : vector<2x8xf32>
    %c7_i32 = arith.constant 7 : i32
    %35 = arith.subi %c7_i32, %arg0 : i32
    %36 = tpu.iota {dimensions = array<i32: 1>} : vector<2x8xi32>
    %37 = vector.broadcast %35 : i32 to vector<2x8xi32>
    %38 = arith.cmpi eq, %36, %37 : vector<2x8xi32>
    %c0_12 = arith.constant 0 : index
    %c0_13 = arith.constant 0 : index
    %39 = vector.load %arg2[%c0_12, %c0_13] : memref<2x8xf32, #tpu.memory_space<vmem>>, vector<2x8xf32>
    %cst_14 = arith.constant 0.000000e+00 : f32
    %40 = vector.broadcast %cst_14 : f32 to vector<2x8xf32>
    %41 = arith.select %38, %39, %40 : vector<2x8xi1>, vector<2x8xf32>
    %cst_15 = arith.constant dense<0.000000e+00> : vector<2xf32>
    %42 = vector.multi_reduction <add>, %41, %cst_15 [1] : vector<2x8xf32> to vector<2xf32>
    %43 = vector.shape_cast %42 : vector<2xf32> to vector<2x1xf32>
    %cst_16 = arith.constant 0.000000e+00 : f32
    %44 = vector.broadcast %cst_16 : f32 to vector<2x1xf32>
    %45 = arith.cmpf ogt, %43, %44 : vector<2x1xf32>
    %46 = vector.shape_cast %45 : vector<2x1xi1> to vector<2x1xi1>
    %47 = vector.broadcast %46 : vector<2x1xi1> to vector<2x8xi1>
    %48 = arith.select %47, %34, %3 : vector<2x8xi1>, vector<2x8xf32>
    %cst_17 = arith.constant 0.000000e+00 : f32
    %49 = vector.broadcast %cst_17 : f32 to vector<2x1xf32>
    %50 = arith.cmpf ogt, %43, %49 : vector<2x1xf32>
    %51 = vector.shape_cast %50 : vector<2x1xi1> to vector<2x1xi1>
    %52 = vector.broadcast %51 : vector<2x1xi1> to vector<2x8xi1>
    %53 = arith.select %52, %32, %4 : vector<2x8xi1>, vector<2x8xf32>
    %c0_18 = arith.constant 0 : index
    %c0_19 = arith.constant 0 : index
    %54 = vector.load %arg5[%c0_18, %c0_19] : memref<2x8xf32, #tpu.memory_space<vmem>>, vector<2x8xf32>
    tpu.vector_store %arg5[%c0_18, %c0_19], %48 {strides = array<i32>} : memref<2x8xf32, #tpu.memory_space<vmem>>, vector<2x8xf32>,
    %c0_20 = arith.constant 0 : index
    %c0_21 = arith.constant 0 : index
    %55 = vector.load %arg6[%c0_20, %c0_21] : memref<2x8xf32, #tpu.memory_space<vmem>>, vector<2x8xf32>
    tpu.vector_store %arg6[%c0_20, %c0_21], %53 {strides = array<i32>} : memref<2x8xf32, #tpu.memory_space<vmem>>, vector<2x8xf32>,
    %56 = vector.broadcast %43 : vector<2x1xf32> to vector<2x8xf32>
    %57 = arith.mulf %48, %56 : vector<2x8xf32>
    %58 = vector.shape_cast %57 : vector<2x8xf32> to vector<1x2x8xf32>
    %c0_22 = arith.constant 0 : index
    %c0_23 = arith.constant 0 : index
    %c0_24 = arith.constant 0 : index
    %59 = vector.load %arg4[%c0_22, %c0_23, %c0_24] : memref<1x2x8xf32, #tpu.memory_space<vmem>>, vector<1x2x8xf32>
    tpu.vector_store %arg4[%c0_22, %c0_23, %c0_24], %58 {strides = array<i32>} : memref<1x2x8xf32, #tpu.memory_space<vmem>>, vector<1x2x8xf32>,
    return
  }
  func.func @transform_0(%arg0: i32) -> (i32, i32, i32) {
    %c7_i32 = arith.constant 7 : i32
    %0 = arith.subi %c7_i32, %arg0 : i32
    %c0_i32 = arith.constant 0 : i32
    %c0_i32_0 = arith.constant 0 : i32
    %c0_i32_1 = arith.constant 0 : i32
    return %0, %c0_i32, %c0_i32_0 : i32, i32, i32
  }
  func.func @transform_1(%arg0: i32) -> (i32, i32) {
    %c0_i32 = arith.constant 0 : i32
    %c0_i32_0 = arith.constant 0 : i32
    %c0_i32_1 = arith.constant 0 : i32
    return %c0_i32, %c0_i32_0 : i32, i32
  }
  func.func @transform_2(%arg0: i32) -> (i32, i32) {
    %c0_i32 = arith.constant 0 : i32
    %c0_i32_0 = arith.constant 0 : i32
    %c0_i32_1 = arith.constant 0 : i32
    return %c0_i32, %c0_i32_0 : i32, i32
  }
  func.func @transform_3(%arg0: i32) -> (i32, i32, i32) {
    %c7_i32 = arith.constant 7 : i32
    %0 = arith.subi %c7_i32, %arg0 : i32
    %c0_i32 = arith.constant 0 : i32
    %c0_i32_0 = arith.constant 0 : i32
    %c0_i32_1 = arith.constant 0 : i32
    return %0, %c0_i32, %c0_i32_0 : i32, i32, i32
  }
  func.func @transform_4(%arg0: i32) -> (i32, i32) {
    %c0_i32 = arith.constant 0 : i32
    %c0_i32_0 = arith.constant 0 : i32
    %c0_i32_1 = arith.constant 0 : i32
    return %c0_i32, %c0_i32_0 : i32, i32
  }
  func.func @transform_5(%arg0: i32) -> (i32, i32) {
    %c0_i32 = arith.constant 0 : i32
    %c0_i32_0 = arith.constant 0 : i32
    %c0_i32_1 = arith.constant 0 : i32
    return %c0_i32, %c0_i32_0 : i32, i32
  }
}

module attributes {stable_mosaic.version = 11 : i64} {
  func.func @_lstm_seq_kernel(%arg0: i32, %arg1: memref<1x2x32xf32, #tpu.memory_space<vmem>>, %arg2: memref<2x8xf32, #tpu.memory_space<vmem>>, %arg3: memref<8x32xf32, #tpu.memory_space<vmem>>, %arg4: memref<1x2x8xf32, #tpu.memory_space<vmem>>, %arg5: memref<2x8xf32, #tpu.memory_space<vmem>>, %arg6: memref<2x8xf32, #tpu.memory_space<vmem>>) attributes {dimension_semantics = [#tpu.dimension_semantics<arbitrary>], iteration_bounds = array<i64: 8>, scalar_prefetch = 0 : i64, scratch_operands = 0 : i64, tpu.core_type = #tpu.core_type<tc>, window_params = [{transform_indices = @transform_0, window_bounds = array<i64: 1, 2, 32>}, {pipeline_mode = #tpu.pipeline_mode<synchronous>, transform_indices = @transform_1, window_bounds = array<i64: 2, 8>}, {pipeline_mode = #tpu.pipeline_mode<synchronous>, transform_indices = @transform_2, window_bounds = array<i64: 8, 32>}, {transform_indices = @transform_3, window_bounds = array<i64: 1, 2, 8>}, {pipeline_mode = #tpu.pipeline_mode<synchronous>, transform_indices = @transform_4, window_bounds = array<i64: 2, 8>}, {pipeline_mode = #tpu.pipeline_mode<synchronous>, transform_indices = @transform_5, window_bounds = array<i64: 2, 8>}]} {
    %c0_i32 = arith.constant 0 : i32
    %0 = arith.cmpi eq, %arg0, %c0_i32 : i32
    %1 = arith.extui %0 : i1 to i32
    %c0_i32_0 = arith.constant 0 : i32
    %2 = arith.cmpi ne, %1, %c0_i32_0 : i32
    scf.if %2 {
      %cst_25 = arith.constant 0.000000e+00 : f32
      %59 = vector.broadcast %cst_25 : f32 to vector<2x8xf32>
      %c0_26 = arith.constant 0 : index
      %c0_27 = arith.constant 0 : index
      %60 = vector.load %arg5[%c0_26, %c0_27] : memref<2x8xf32, #tpu.memory_space<vmem>>, vector<2x8xf32>
      tpu.vector_store %arg5[%c0_26, %c0_27], %59 {strides = array<i32>} : memref<2x8xf32, #tpu.memory_space<vmem>>, vector<2x8xf32>,
      %cst_28 = arith.constant 0.000000e+00 : f32
      %61 = vector.broadcast %cst_28 : f32 to vector<2x8xf32>
      %c0_29 = arith.constant 0 : index
      %c0_30 = arith.constant 0 : index
      %62 = vector.load %arg6[%c0_29, %c0_30] : memref<2x8xf32, #tpu.memory_space<vmem>>, vector<2x8xf32>
      tpu.vector_store %arg6[%c0_29, %c0_30], %61 {strides = array<i32>} : memref<2x8xf32, #tpu.memory_space<vmem>>, vector<2x8xf32>,
    } else {
    }
    %c0 = arith.constant 0 : index
    %c0_1 = arith.constant 0 : index
    %3 = vector.load %arg5[%c0, %c0_1] : memref<2x8xf32, #tpu.memory_space<vmem>>, vector<2x8xf32>
    %c0_2 = arith.constant 0 : index
    %c0_3 = arith.constant 0 : index
    %4 = vector.load %arg6[%c0_2, %c0_3] : memref<2x8xf32, #tpu.memory_space<vmem>>, vector<2x8xf32>
    %c0_4 = arith.constant 0 : index
    %c0_5 = arith.constant 0 : index
    %c0_6 = arith.constant 0 : index
    %5 = vector.load %arg1[%c0_4, %c0_5, %c0_6] : memref<1x2x32xf32, #tpu.memory_space<vmem>>, vector<1x2x32xf32>
    %6 = vector.shape_cast %5 : vector<1x2x32xf32> to vector<2x32xf32>
    %c0_7 = arith.constant 0 : index
    %c0_8 = arith.constant 0 : index
    %7 = vector.load %arg3[%c0_7, %c0_8] : memref<8x32xf32, #tpu.memory_space<vmem>>, vector<8x32xf32>
    %cst = arith.constant dense<0.000000e+00> : vector<2x32xf32>
    %8 = tpu.matmul %3, %7, %cst {dimension_numbers = #tpu.dot_dimension_numbers<[1], [0], [0], [1], [0, 0, 1, 1], [], []>} : vector<2x8xf32>, vector<8x32xf32>, vector<2x32xf32> -> vector<2x32xf32>
    %9 = arith.addf %6, %8 : vector<2x32xf32>
    %10 = vector.extract_strided_slice %9 {offsets = [0, 0], sizes = [2, 8], strides = [1, 1]} : vector<2x32xf32> to vector<2x8xf32>
    %11 = arith.negf %10 : vector<2x8xf32>
    %12 = math.exp %11 : vector<2x8xf32>
    %cst_9 = arith.constant 1.000000e+00 : f32
    %13 = vector.broadcast %cst_9 : f32 to vector<2x8xf32>
    %14 = arith.addf %13, %12 : vector<2x8xf32>
    %15 = arith.divf %13, %14 : vector<2x8xf32>
    %16 = vector.extract_strided_slice %9 {offsets = [0, 8], sizes = [2, 8], strides = [1, 1]} : vector<2x32xf32> to vector<2x8xf32>
    %17 = arith.negf %16 : vector<2x8xf32>
    %18 = math.exp %17 : vector<2x8xf32>
    %cst_10 = arith.constant 1.000000e+00 : f32
    %19 = vector.broadcast %cst_10 : f32 to vector<2x8xf32>
    %20 = arith.addf %19, %18 : vector<2x8xf32>
    %21 = arith.divf %19, %20 : vector<2x8xf32>
    %22 = vector.extract_strided_slice %9 {offsets = [0, 16], sizes = [2, 8], strides = [1, 1]} : vector<2x32xf32> to vector<2x8xf32>
    %23 = math.tanh %22 : vector<2x8xf32>
    %24 = vector.extract_strided_slice %9 {offsets = [0, 24], sizes = [2, 8], strides = [1, 1]} : vector<2x32xf32> to vector<2x8xf32>
    %25 = arith.negf %24 : vector<2x8xf32>
    %26 = math.exp %25 : vector<2x8xf32>
    %cst_11 = arith.constant 1.000000e+00 : f32
    %27 = vector.broadcast %cst_11 : f32 to vector<2x8xf32>
    %28 = arith.addf %27, %26 : vector<2x8xf32>
    %29 = arith.divf %27, %28 : vector<2x8xf32>
    %30 = arith.mulf %21, %4 : vector<2x8xf32>
    %31 = arith.mulf %15, %23 : vector<2x8xf32>
    %32 = arith.addf %30, %31 : vector<2x8xf32>
    %33 = math.tanh %32 : vector<2x8xf32>
    %34 = arith.mulf %29, %33 : vector<2x8xf32>
    %35 = tpu.iota {dimensions = array<i32: 1>} : vector<2x8xi32>
    %36 = vector.broadcast %arg0 : i32 to vector<2x8xi32>
    %37 = arith.cmpi eq, %35, %36 : vector<2x8xi32>
    %c0_12 = arith.constant 0 : index
    %c0_13 = arith.constant 0 : index
    %38 = vector.load %arg2[%c0_12, %c0_13] : memref<2x8xf32, #tpu.memory_space<vmem>>, vector<2x8xf32>
    %cst_14 = arith.constant 0.000000e+00 : f32
    %39 = vector.broadcast %cst_14 : f32 to vector<2x8xf32>
    %40 = arith.select %37, %38, %39 : vector<2x8xi1>, vector<2x8xf32>
    %cst_15 = arith.constant dense<0.000000e+00> : vector<2xf32>
    %41 = vector.multi_reduction <add>, %40, %cst_15 [1] : vector<2x8xf32> to vector<2xf32>
    %42 = vector.shape_cast %41 : vector<2xf32> to vector<2x1xf32>
    %cst_16 = arith.constant 0.000000e+00 : f32
    %43 = vector.broadcast %cst_16 : f32 to vector<2x1xf32>
    %44 = arith.cmpf ogt, %42, %43 : vector<2x1xf32>
    %45 = vector.shape_cast %44 : vector<2x1xi1> to vector<2x1xi1>
    %46 = vector.broadcast %45 : vector<2x1xi1> to vector<2x8xi1>
    %47 = arith.select %46, %34, %3 : vector<2x8xi1>, vector<2x8xf32>
    %cst_17 = arith.constant 0.000000e+00 : f32
    %48 = vector.broadcast %cst_17 : f32 to vector<2x1xf32>
    %49 = arith.cmpf ogt, %42, %48 : vector<2x1xf32>
    %50 = vector.shape_cast %49 : vector<2x1xi1> to vector<2x1xi1>
    %51 = vector.broadcast %50 : vector<2x1xi1> to vector<2x8xi1>
    %52 = arith.select %51, %32, %4 : vector<2x8xi1>, vector<2x8xf32>
    %c0_18 = arith.constant 0 : index
    %c0_19 = arith.constant 0 : index
    %53 = vector.load %arg5[%c0_18, %c0_19] : memref<2x8xf32, #tpu.memory_space<vmem>>, vector<2x8xf32>
    tpu.vector_store %arg5[%c0_18, %c0_19], %47 {strides = array<i32>} : memref<2x8xf32, #tpu.memory_space<vmem>>, vector<2x8xf32>,
    %c0_20 = arith.constant 0 : index
    %c0_21 = arith.constant 0 : index
    %54 = vector.load %arg6[%c0_20, %c0_21] : memref<2x8xf32, #tpu.memory_space<vmem>>, vector<2x8xf32>
    tpu.vector_store %arg6[%c0_20, %c0_21], %52 {strides = array<i32>} : memref<2x8xf32, #tpu.memory_space<vmem>>, vector<2x8xf32>,
    %55 = vector.broadcast %42 : vector<2x1xf32> to vector<2x8xf32>
    %56 = arith.mulf %47, %55 : vector<2x8xf32>
    %57 = vector.shape_cast %56 : vector<2x8xf32> to vector<1x2x8xf32>
    %c0_22 = arith.constant 0 : index
    %c0_23 = arith.constant 0 : index
    %c0_24 = arith.constant 0 : index
    %58 = vector.load %arg4[%c0_22, %c0_23, %c0_24] : memref<1x2x8xf32, #tpu.memory_space<vmem>>, vector<1x2x8xf32>
    tpu.vector_store %arg4[%c0_22, %c0_23, %c0_24], %57 {strides = array<i32>} : memref<1x2x8xf32, #tpu.memory_space<vmem>>, vector<1x2x8xf32>,
    return
  }
  func.func @transform_0(%arg0: i32) -> (i32, i32, i32) {
    %c0_i32 = arith.constant 0 : i32
    %c0_i32_0 = arith.constant 0 : i32
    %c0_i32_1 = arith.constant 0 : i32
    return %arg0, %c0_i32, %c0_i32_0 : i32, i32, i32
  }
  func.func @transform_1(%arg0: i32) -> (i32, i32) {
    %c0_i32 = arith.constant 0 : i32
    %c0_i32_0 = arith.constant 0 : i32
    %c0_i32_1 = arith.constant 0 : i32
    return %c0_i32, %c0_i32_0 : i32, i32
  }
  func.func @transform_2(%arg0: i32) -> (i32, i32) {
    %c0_i32 = arith.constant 0 : i32
    %c0_i32_0 = arith.constant 0 : i32
    %c0_i32_1 = arith.constant 0 : i32
    return %c0_i32, %c0_i32_0 : i32, i32
  }
  func.func @transform_3(%arg0: i32) -> (i32, i32, i32) {
    %c0_i32 = arith.constant 0 : i32
    %c0_i32_0 = arith.constant 0 : i32
    %c0_i32_1 = arith.constant 0 : i32
    return %arg0, %c0_i32, %c0_i32_0 : i32, i32, i32
  }
  func.func @transform_4(%arg0: i32) -> (i32, i32) {
    %c0_i32 = arith.constant 0 : i32
    %c0_i32_0 = arith.constant 0 : i32
    %c0_i32_1 = arith.constant 0 : i32
    return %c0_i32, %c0_i32_0 : i32, i32
  }
  func.func @transform_5(%arg0: i32) -> (i32, i32) {
    %c0_i32 = arith.constant 0 : i32
    %c0_i32_0 = arith.constant 0 : i32
    %c0_i32_1 = arith.constant 0 : i32
    return %c0_i32, %c0_i32_0 : i32, i32
  }
}

module attributes {stable_mosaic.version = 11 : i64} {
  func.func @_linear_kernel(%arg0: i32, %arg1: memref<12x32xf32, #tpu.memory_space<vmem>>, %arg2: memref<32x16xf32, #tpu.memory_space<vmem>>, %arg3: memref<1x16xf32, #tpu.memory_space<vmem>>, %arg4: memref<12x16xf32, #tpu.memory_space<vmem>>) attributes {dimension_semantics = [#tpu.dimension_semantics<arbitrary>], iteration_bounds = array<i64: 1>, scalar_prefetch = 0 : i64, scratch_operands = 0 : i64, tpu.core_type = #tpu.core_type<tc>, window_params = [{pipeline_mode = #tpu.pipeline_mode<synchronous>, transform_indices = @transform_0, window_bounds = array<i64: 12, 32>}, {pipeline_mode = #tpu.pipeline_mode<synchronous>, transform_indices = @transform_1, window_bounds = array<i64: 32, 16>}, {pipeline_mode = #tpu.pipeline_mode<synchronous>, transform_indices = @transform_2, window_bounds = array<i64: 1, 16>}, {pipeline_mode = #tpu.pipeline_mode<synchronous>, transform_indices = @transform_3, window_bounds = array<i64: 12, 16>}]} {
    %c0 = arith.constant 0 : index
    %c0_0 = arith.constant 0 : index
    %0 = vector.load %arg1[%c0, %c0_0] : memref<12x32xf32, #tpu.memory_space<vmem>>, vector<12x32xf32>
    %c0_1 = arith.constant 0 : index
    %c0_2 = arith.constant 0 : index
    %1 = vector.load %arg2[%c0_1, %c0_2] : memref<32x16xf32, #tpu.memory_space<vmem>>, vector<32x16xf32>
    %cst = arith.constant dense<0.000000e+00> : vector<12x16xf32>
    %2 = tpu.matmul %0, %1, %cst {dimension_numbers = #tpu.dot_dimension_numbers<[1], [0], [0], [1], [0, 0, 1, 1], [], []>} : vector<12x32xf32>, vector<32x16xf32>, vector<12x16xf32> -> vector<12x16xf32>
    %c0_3 = arith.constant 0 : index
    %c0_4 = arith.constant 0 : index
    %3 = vector.load %arg3[%c0_3, %c0_4] : memref<1x16xf32, #tpu.memory_space<vmem>>, vector<1x16xf32>
    %4 = vector.broadcast %3 : vector<1x16xf32> to vector<12x16xf32>
    %5 = arith.addf %2, %4 : vector<12x16xf32>
    %cst_5 = arith.constant 0.000000e+00 : f32
    %6 = vector.broadcast %cst_5 : f32 to vector<12x16xf32>
    %7 = arith.maximumf %5, %6 : vector<12x16xf32>
    %c0_6 = arith.constant 0 : index
    %c0_7 = arith.constant 0 : index
    %8 = vector.load %arg4[%c0_6, %c0_7] : memref<12x16xf32, #tpu.memory_space<vmem>>, vector<12x16xf32>
    tpu.vector_store %arg4[%c0_6, %c0_7], %7 {strides = array<i32>} : memref<12x16xf32, #tpu.memory_space<vmem>>, vector<12x16xf32>,
    return
  }
  func.func @transform_0(%arg0: i32) -> (i32, i32) {
    %c0_i32 = arith.constant 0 : i32
    %c0_i32_0 = arith.constant 0 : i32
    %c0_i32_1 = arith.constant 0 : i32
    return %c0_i32, %c0_i32_0 : i32, i32
  }
  func.func @transform_1(%arg0: i32) -> (i32, i32) {
    %c0_i32 = arith.constant 0 : i32
    %c0_i32_0 = arith.constant 0 : i32
    %c0_i32_1 = arith.constant 0 : i32
    return %c0_i32, %c0_i32_0 : i32, i32
  }
  func.func @transform_2(%arg0: i32) -> (i32, i32) {
    %c0_i32 = arith.constant 0 : i32
    %c0_i32_0 = arith.constant 0 : i32
    %c0_i32_1 = arith.constant 0 : i32
    return %c0_i32, %c0_i32_0 : i32, i32
  }
  func.func @transform_3(%arg0: i32) -> (i32, i32) {
    %c0_i32 = arith.constant 0 : i32
    %c0_i32_0 = arith.constant 0 : i32
    %c0_i32_1 = arith.constant 0 : i32
    return %c0_i32, %c0_i32_0 : i32, i32
  }
}

module attributes {stable_mosaic.version = 11 : i64} {
  func.func @_tail_kernel(%arg0: i32, %arg1: memref<2x6x16xf32, #tpu.memory_space<vmem>>, %arg2: memref<2x6x32xf32, #tpu.memory_space<vmem>>, %arg3: memref<2x16xf32, #tpu.memory_space<vmem>>, %arg4: memref<2x1xi32, #tpu.memory_space<vmem>>, %arg5: memref<16x16xf32, #tpu.memory_space<vmem>>, %arg6: memref<1x16xf32, #tpu.memory_space<vmem>>, %arg7: memref<1x16xf32, #tpu.memory_space<vmem>>, %arg8: memref<1x1xf32, #tpu.memory_space<vmem>>, %arg9: memref<32x16xf32, #tpu.memory_space<vmem>>, %arg10: memref<1x16xf32, #tpu.memory_space<vmem>>, %arg11: memref<16x16xf32, #tpu.memory_space<vmem>>, %arg12: memref<1x16xf32, #tpu.memory_space<vmem>>, %arg13: memref<16x12xf32, #tpu.memory_space<vmem>>, %arg14: memref<1x12xf32, #tpu.memory_space<vmem>>, %arg15: memref<2x12xf32, #tpu.memory_space<vmem>>) attributes {dimension_semantics = [#tpu.dimension_semantics<arbitrary>], iteration_bounds = array<i64: 1>, scalar_prefetch = 0 : i64, scratch_operands = 0 : i64, tpu.core_type = #tpu.core_type<tc>, window_params = [{pipeline_mode = #tpu.pipeline_mode<synchronous>, transform_indices = @transform_0, window_bounds = array<i64: 2, 6, 16>}, {pipeline_mode = #tpu.pipeline_mode<synchronous>, transform_indices = @transform_1, window_bounds = array<i64: 2, 6, 32>}, {pipeline_mode = #tpu.pipeline_mode<synchronous>, transform_indices = @transform_2, window_bounds = array<i64: 2, 16>}, {pipeline_mode = #tpu.pipeline_mode<synchronous>, transform_indices = @transform_3, window_bounds = array<i64: 2, 1>}, {pipeline_mode = #tpu.pipeline_mode<synchronous>, transform_indices = @transform_4, window_bounds = array<i64: 16, 16>}, {pipeline_mode = #tpu.pipeline_mode<synchronous>, transform_indices = @transform_5, window_bounds = array<i64: 1, 16>}, {pipeline_mode = #tpu.pipeline_mode<synchronous>, transform_indices = @transform_6, window_bounds = array<i64: 1, 16>}, {pipeline_mode = #tpu.pipeline_mode<synchronous>, transform_indices = @transform_7, window_bounds = array<i64: 1, 1>}, {pipeline_mode = #tpu.pipeline_mode<synchronous>, transform_indices = @transform_8, window_bounds = array<i64: 32, 16>}, {pipeline_mode = #tpu.pipeline_mode<synchronous>, transform_indices = @transform_9, window_bounds = array<i64: 1, 16>}, {pipeline_mode = #tpu.pipeline_mode<synchronous>, transform_indices = @transform_10, window_bounds = array<i64: 16, 16>}, {pipeline_mode = #tpu.pipeline_mode<synchronous>, transform_indices = @transform_11, window_bounds = array<i64: 1, 16>}, {pipeline_mode = #tpu.pipeline_mode<synchronous>, transform_indices = @transform_12, window_bounds = array<i64: 16, 12>}, {pipeline_mode = #tpu.pipeline_mode<synchronous>, transform_indices = @transform_13, window_bounds = array<i64: 1, 12>}, {pipeline_mode = #tpu.pipeline_mode<synchronous>, transform_indices = @transform_14, window_bounds = array<i64: 2, 12>}]} {
    %c0 = arith.constant 0 : index
    %c0_0 = arith.constant 0 : index
    %c0_1 = arith.constant 0 : index
    %0 = vector.load %arg1[%c0, %c0_0, %c0_1] : memref<2x6x16xf32, #tpu.memory_space<vmem>>, vector<2x6x16xf32>
    %c0_2 = arith.constant 0 : index
    %c0_3 = arith.constant 0 : index
    %c0_4 = arith.constant 0 : index
    %1 = vector.load %arg2[%c0_2, %c0_3, %c0_4] : memref<2x6x32xf32, #tpu.memory_space<vmem>>, vector<2x6x32xf32>
    %c0_5 = arith.constant 0 : index
    %c0_6 = arith.constant 0 : index
    %2 = vector.load %arg3[%c0_5, %c0_6] : memref<2x16xf32, #tpu.memory_space<vmem>>, vector<2x16xf32>
    %c0_7 = arith.constant 0 : index
    %c0_8 = arith.constant 0 : index
    %3 = vector.load %arg5[%c0_7, %c0_8] : memref<16x16xf32, #tpu.memory_space<vmem>>, vector<16x16xf32>
    %cst = arith.constant dense<0.000000e+00> : vector<2x16xf32>
    %4 = tpu.matmul %2, %3, %cst {dimension_numbers = #tpu.dot_dimension_numbers<[1], [0], [0], [1], [0, 0, 1, 1], [], []>} : vector<2x16xf32>, vector<16x16xf32>, vector<2x16xf32> -> vector<2x16xf32>
    %c0_9 = arith.constant 0 : index
    %c0_10 = arith.constant 0 : index
    %5 = vector.load %arg6[%c0_9, %c0_10] : memref<1x16xf32, #tpu.memory_space<vmem>>, vector<1x16xf32>
    %6 = vector.broadcast %5 : vector<1x16xf32> to vector<2x16xf32>
    %7 = arith.addf %4, %6 : vector<2x16xf32>
    %cst_11 = arith.constant 0.000000e+00 : f32
    %8 = vector.broadcast %cst_11 : f32 to vector<2x16xf32>
    %9 = arith.maximumf %7, %8 : vector<2x16xf32>
    %c0_12 = arith.constant 0 : index
    %c0_13 = arith.constant 0 : index
    %10 = vector.load %arg7[%c0_12, %c0_13] : memref<1x16xf32, #tpu.memory_space<vmem>>, vector<1x16xf32>
    %11 = vector.broadcast %10 : vector<1x16xf32> to vector<2x16xf32>
    %12 = arith.mulf %9, %11 : vector<2x16xf32>
    %13 = vector.shape_cast %12 : vector<2x16xf32> to vector<2x1x16xf32>
    %14 = vector.broadcast %13 : vector<2x1x16xf32> to vector<2x6x16xf32>
    %15 = arith.mulf %0, %14 : vector<2x6x16xf32>
    %cst_14 = arith.constant dense<0.000000e+00> : vector<2x6xf32>
    %16 = vector.multi_reduction <add>, %15, %cst_14 [2] : vector<2x6x16xf32> to vector<2x6xf32>
    %c0_15 = arith.constant 0 : index
    %c0_16 = arith.constant 0 : index
    %17 = vector.load %arg8[%c0_15, %c0_16] : memref<1x1xf32, #tpu.memory_space<vmem>>, vector<1x1xf32>
    %18 = vector.broadcast %17 : vector<1x1xf32> to vector<2x6xf32>
    %19 = arith.addf %16, %18 : vector<2x6xf32>
    %c0_17 = arith.constant 0 : index
    %c0_18 = arith.constant 0 : index
    %20 = vector.load %arg4[%c0_17, %c0_18] : memref<2x1xi32, #tpu.memory_space<vmem>>, vector<2x1xi32>
    %21 = tpu.iota {dimensions = array<i32: 1>} : vector<2x6xi32>
    %22 = vector.broadcast %20 : vector<2x1xi32> to vector<2x6xi32>
    %23 = arith.cmpi slt, %21, %22 : vector<2x6xi32>
    %cst_19 = arith.constant -1.000000e+30 : f32
    %24 = vector.broadcast %cst_19 : f32 to vector<2x6xf32>
    %25 = arith.select %23, %19, %24 : vector<2x6xi1>, vector<2x6xf32>
    %cst_20 = arith.constant dense<0xFF800000> : vector<2xf32>
    %26 = vector.multi_reduction <maximumf>, %25, %cst_20 [1] : vector<2x6xf32> to vector<2xf32>
    %27 = vector.shape_cast %26 : vector<2xf32> to vector<2x1xf32>
    %28 = vector.broadcast %27 : vector<2x1xf32> to vector<2x6xf32>
    %29 = arith.subf %25, %28 : vector<2x6xf32>
    %30 = math.exp %29 : vector<2x6xf32>
    %cst_21 = arith.constant dense<0.000000e+00> : vector<2xf32>
    %31 = vector.multi_reduction <add>, %30, %cst_21 [1] : vector<2x6xf32> to vector<2xf32>
    %32 = vector.shape_cast %31 : vector<2xf32> to vector<2x1xf32>
    %33 = vector.broadcast %32 : vector<2x1xf32> to vector<2x6xf32>
    %34 = arith.divf %30, %33 : vector<2x6xf32>
    %35 = vector.shape_cast %34 : vector<2x6xf32> to vector<2x6x1xf32>
    %36 = vector.broadcast %35 : vector<2x6x1xf32> to vector<2x6x32xf32>
    %37 = arith.mulf %36, %1 : vector<2x6x32xf32>
    %cst_22 = arith.constant dense<0.000000e+00> : vector<2x32xf32>
    %38 = vector.multi_reduction <add>, %37, %cst_22 [1] : vector<2x6x32xf32> to vector<2x32xf32>
    %c0_23 = arith.constant 0 : index
    %c0_24 = arith.constant 0 : index
    %39 = vector.load %arg9[%c0_23, %c0_24] : memref<32x16xf32, #tpu.memory_space<vmem>>, vector<32x16xf32>
    %cst_25 = arith.constant dense<0.000000e+00> : vector<2x16xf32>
    %40 = tpu.matmul %38, %39, %cst_25 {dimension_numbers = #tpu.dot_dimension_numbers<[1], [0], [0], [1], [0, 0, 1, 1], [], []>} : vector<2x32xf32>, vector<32x16xf32>, vector<2x16xf32> -> vector<2x16xf32>
    %c0_26 = arith.constant 0 : index
    %c0_27 = arith.constant 0 : index
    %41 = vector.load %arg10[%c0_26, %c0_27] : memref<1x16xf32, #tpu.memory_space<vmem>>, vector<1x16xf32>
    %42 = vector.broadcast %41 : vector<1x16xf32> to vector<2x16xf32>
    %43 = arith.addf %40, %42 : vector<2x16xf32>
    %cst_28 = arith.constant 0.000000e+00 : f32
    %44 = vector.broadcast %cst_28 : f32 to vector<2x16xf32>
    %45 = arith.maximumf %43, %44 : vector<2x16xf32>
    %c0_29 = arith.constant 0 : index
    %c0_30 = arith.constant 0 : index
    %46 = vector.load %arg11[%c0_29, %c0_30] : memref<16x16xf32, #tpu.memory_space<vmem>>, vector<16x16xf32>
    %cst_31 = arith.constant dense<0.000000e+00> : vector<2x16xf32>
    %47 = tpu.matmul %2, %46, %cst_31 {dimension_numbers = #tpu.dot_dimension_numbers<[1], [0], [0], [1], [0, 0, 1, 1], [], []>} : vector<2x16xf32>, vector<16x16xf32>, vector<2x16xf32> -> vector<2x16xf32>
    %c0_32 = arith.constant 0 : index
    %c0_33 = arith.constant 0 : index
    %48 = vector.load %arg12[%c0_32, %c0_33] : memref<1x16xf32, #tpu.memory_space<vmem>>, vector<1x16xf32>
    %49 = vector.broadcast %48 : vector<1x16xf32> to vector<2x16xf32>
    %50 = arith.addf %47, %49 : vector<2x16xf32>
    %cst_34 = arith.constant 0.000000e+00 : f32
    %51 = vector.broadcast %cst_34 : f32 to vector<2x16xf32>
    %52 = arith.maximumf %50, %51 : vector<2x16xf32>
    %53 = arith.mulf %52, %45 : vector<2x16xf32>
    %c0_35 = arith.constant 0 : index
    %c0_36 = arith.constant 0 : index
    %54 = vector.load %arg13[%c0_35, %c0_36] : memref<16x12xf32, #tpu.memory_space<vmem>>, vector<16x12xf32>
    %cst_37 = arith.constant dense<0.000000e+00> : vector<2x12xf32>
    %55 = tpu.matmul %53, %54, %cst_37 {dimension_numbers = #tpu.dot_dimension_numbers<[1], [0], [0], [1], [0, 0, 1, 1], [], []>} : vector<2x16xf32>, vector<16x12xf32>, vector<2x12xf32> -> vector<2x12xf32>
    %c0_38 = arith.constant 0 : index
    %c0_39 = arith.constant 0 : index
    %56 = vector.load %arg14[%c0_38, %c0_39] : memref<1x12xf32, #tpu.memory_space<vmem>>, vector<1x12xf32>
    %57 = vector.broadcast %56 : vector<1x12xf32> to vector<2x12xf32>
    %58 = arith.addf %55, %57 : vector<2x12xf32>
    %c0_40 = arith.constant 0 : index
    %c0_41 = arith.constant 0 : index
    %59 = vector.load %arg15[%c0_40, %c0_41] : memref<2x12xf32, #tpu.memory_space<vmem>>, vector<2x12xf32>
    tpu.vector_store %arg15[%c0_40, %c0_41], %58 {strides = array<i32>} : memref<2x12xf32, #tpu.memory_space<vmem>>, vector<2x12xf32>,
    return
  }
  func.func @transform_0(%arg0: i32) -> (i32, i32, i32) {
    %c0_i32 = arith.constant 0 : i32
    %c0_i32_0 = arith.constant 0 : i32
    %c0_i32_1 = arith.constant 0 : i32
    %c0_i32_2 = arith.constant 0 : i32
    return %c0_i32, %c0_i32_0, %c0_i32_1 : i32, i32, i32
  }
  func.func @transform_1(%arg0: i32) -> (i32, i32, i32) {
    %c0_i32 = arith.constant 0 : i32
    %c0_i32_0 = arith.constant 0 : i32
    %c0_i32_1 = arith.constant 0 : i32
    %c0_i32_2 = arith.constant 0 : i32
    return %c0_i32, %c0_i32_0, %c0_i32_1 : i32, i32, i32
  }
  func.func @transform_2(%arg0: i32) -> (i32, i32) {
    %c0_i32 = arith.constant 0 : i32
    %c0_i32_0 = arith.constant 0 : i32
    %c0_i32_1 = arith.constant 0 : i32
    return %c0_i32, %c0_i32_0 : i32, i32
  }
  func.func @transform_3(%arg0: i32) -> (i32, i32) {
    %c0_i32 = arith.constant 0 : i32
    %c0_i32_0 = arith.constant 0 : i32
    %c0_i32_1 = arith.constant 0 : i32
    return %c0_i32, %c0_i32_0 : i32, i32
  }
  func.func @transform_4(%arg0: i32) -> (i32, i32) {
    %c0_i32 = arith.constant 0 : i32
    %c0_i32_0 = arith.constant 0 : i32
    %c0_i32_1 = arith.constant 0 : i32
    return %c0_i32, %c0_i32_0 : i32, i32
  }
  func.func @transform_5(%arg0: i32) -> (i32, i32) {
    %c0_i32 = arith.constant 0 : i32
    %c0_i32_0 = arith.constant 0 : i32
    %c0_i32_1 = arith.constant 0 : i32
    return %c0_i32, %c0_i32_0 : i32, i32
  }
  func.func @transform_6(%arg0: i32) -> (i32, i32) {
    %c0_i32 = arith.constant 0 : i32
    %c0_i32_0 = arith.constant 0 : i32
    %c0_i32_1 = arith.constant 0 : i32
    return %c0_i32, %c0_i32_0 : i32, i32
  }
  func.func @transform_7(%arg0: i32) -> (i32, i32) {
    %c0_i32 = arith.constant 0 : i32
    %c0_i32_0 = arith.constant 0 : i32
    %c0_i32_1 = arith.constant 0 : i32
    return %c0_i32, %c0_i32_0 : i32, i32
  }
  func.func @transform_8(%arg0: i32) -> (i32, i32) {
    %c0_i32 = arith.constant 0 : i32
    %c0_i32_0 = arith.constant 0 : i32
    %c0_i32_1 = arith.constant 0 : i32
    return %c0_i32, %c0_i32_0 : i32, i32
  }
  func.func @transform_9(%arg0: i32) -> (i32, i32) {
    %c0_i32 = arith.constant 0 : i32
    %c0_i32_0 = arith.constant 0 : i32
    %c0_i32_1 = arith.constant 0 : i32
    return %c0_i32, %c0_i32_0 : i32, i32
  }
  func.func @transform_10(%arg0: i32) -> (i32, i32) {
    %c0_i32 = arith.constant 0 : i32
    %c0_i32_0 = arith.constant 0 : i32
    %c0_i32_1 = arith.constant 0 : i32
    return %c0_i32, %c0_i32_0 : i32, i32
  }
  func.func @transform_11(%arg0: i32) -> (i32, i32) {
    %c0_i32 = arith.constant 0 : i32
    %c0_i32_0 = arith.constant 0 : i32
    %c0_i32_1 = arith.constant 0 : i32
    return %c0_i32, %c0_i32_0 : i32, i32
  }
  func.func @transform_12(%arg0: i32) -> (i32, i32) {
    %c0_i32 = arith.constant 0 : i32
    %c0_i32_0 = arith.constant 0 : i32
    %c0_i32_1 = arith.constant 0 : i32
    return %c0_i32, %c0_i32_0 : i32, i32
  }
  func.func @transform_13(%arg0: i32) -> (i32, i32) {
    %c0_i32 = arith.constant 0 : i32
    %c0_i32_0 = arith.constant 0 : i32
    %c0_i32_1 = arith.constant 0 : i32
    return %c0_i32, %c0_i32_0 : i32, i32
  }
  func.func @transform_14(%arg0: i32) -> (i32, i32) {
    %c0_i32 = arith.constant 0 : i32
    %c0_i32_0 = arith.constant 0 : i32
    %c0_i32_1 = arith.constant 0 : i32
    return %c0_i32, %c0_i32_0 : i32, i32
  }
}

module attributes {stable_mosaic.version = 11 : i64} {
  func.func @_lstm_seq_kernel(%arg0: i32, %arg1: memref<1x2x32xf32, #tpu.memory_space<vmem>>, %arg2: memref<2x8xf32, #tpu.memory_space<vmem>>, %arg3: memref<8x32xf32, #tpu.memory_space<vmem>>, %arg4: memref<1x2x8xf32, #tpu.memory_space<vmem>>, %arg5: memref<2x8xf32, #tpu.memory_space<vmem>>, %arg6: memref<2x8xf32, #tpu.memory_space<vmem>>) attributes {dimension_semantics = [#tpu.dimension_semantics<arbitrary>], iteration_bounds = array<i64: 8>, scalar_prefetch = 0 : i64, scratch_operands = 0 : i64, tpu.core_type = #tpu.core_type<tc>, window_params = [{transform_indices = @transform_0, window_bounds = array<i64: 1, 2, 32>}, {pipeline_mode = #tpu.pipeline_mode<synchronous>, transform_indices = @transform_1, window_bounds = array<i64: 2, 8>}, {pipeline_mode = #tpu.pipeline_mode<synchronous>, transform_indices = @transform_2, window_bounds = array<i64: 8, 32>}, {transform_indices = @transform_3, window_bounds = array<i64: 1, 2, 8>}, {pipeline_mode = #tpu.pipeline_mode<synchronous>, transform_indices = @transform_4, window_bounds = array<i64: 2, 8>}, {pipeline_mode = #tpu.pipeline_mode<synchronous>, transform_indices = @transform_5, window_bounds = array<i64: 2, 8>}]} {
    %c0_i32 = arith.constant 0 : i32
    %0 = arith.cmpi eq, %arg0, %c0_i32 : i32
    %1 = arith.extui %0 : i1 to i32
    %c0_i32_0 = arith.constant 0 : i32
    %2 = arith.cmpi ne, %1, %c0_i32_0 : i32
    scf.if %2 {
      %cst_25 = arith.constant 0.000000e+00 : f32
      %60 = vector.broadcast %cst_25 : f32 to vector<2x8xf32>
      %c0_26 = arith.constant 0 : index
      %c0_27 = arith.constant 0 : index
      %61 = vector.load %arg5[%c0_26, %c0_27] : memref<2x8xf32, #tpu.memory_space<vmem>>, vector<2x8xf32>
      tpu.vector_store %arg5[%c0_26, %c0_27], %60 {strides = array<i32>} : memref<2x8xf32, #tpu.memory_space<vmem>>, vector<2x8xf32>,
      %cst_28 = arith.constant 0.000000e+00 : f32
      %62 = vector.broadcast %cst_28 : f32 to vector<2x8xf32>
      %c0_29 = arith.constant 0 : index
      %c0_30 = arith.constant 0 : index
      %63 = vector.load %arg6[%c0_29, %c0_30] : memref<2x8xf32, #tpu.memory_space<vmem>>, vector<2x8xf32>
      tpu.vector_store %arg6[%c0_29, %c0_30], %62 {strides = array<i32>} : memref<2x8xf32, #tpu.memory_space<vmem>>, vector<2x8xf32>,
    } else {
    }
    %c0 = arith.constant 0 : index
    %c0_1 = arith.constant 0 : index
    %3 = vector.load %arg5[%c0, %c0_1] : memref<2x8xf32, #tpu.memory_space<vmem>>, vector<2x8xf32>
    %c0_2 = arith.constant 0 : index
    %c0_3 = arith.constant 0 : index
    %4 = vector.load %arg6[%c0_2, %c0_3] : memref<2x8xf32, #tpu.memory_space<vmem>>, vector<2x8xf32>
    %c0_4 = arith.constant 0 : index
    %c0_5 = arith.constant 0 : index
    %c0_6 = arith.constant 0 : index
    %5 = vector.load %arg1[%c0_4, %c0_5, %c0_6] : memref<1x2x32xf32, #tpu.memory_space<vmem>>, vector<1x2x32xf32>
    %6 = vector.shape_cast %5 : vector<1x2x32xf32> to vector<2x32xf32>
    %c0_7 = arith.constant 0 : index
    %c0_8 = arith.constant 0 : index
    %7 = vector.load %arg3[%c0_7, %c0_8] : memref<8x32xf32, #tpu.memory_space<vmem>>, vector<8x32xf32>
    %cst = arith.constant dense<0.000000e+00> : vector<2x32xf32>
    %8 = tpu.matmul %3, %7, %cst {dimension_numbers = #tpu.dot_dimension_numbers<[1], [0], [0], [1], [0, 0, 1, 1], [], []>} : vector<2x8xf32>, vector<8x32xf32>, vector<2x32xf32> -> vector<2x32xf32>
    %9 = arith.addf %6, %8 : vector<2x32xf32>
    %10 = vector.extract_strided_slice %9 {offsets = [0, 0], sizes = [2, 8], strides = [1, 1]} : vector<2x32xf32> to vector<2x8xf32>
    %11 = arith.negf %10 : vector<2x8xf32>
    %12 = math.exp %11 : vector<2x8xf32>
    %cst_9 = arith.constant 1.000000e+00 : f32
    %13 = vector.broadcast %cst_9 : f32 to vector<2x8xf32>
    %14 = arith.addf %13, %12 : vector<2x8xf32>
    %15 = arith.divf %13, %14 : vector<2x8xf32>
    %16 = vector.extract_strided_slice %9 {offsets = [0, 8], sizes = [2, 8], strides = [1, 1]} : vector<2x32xf32> to vector<2x8xf32>
    %17 = arith.negf %16 : vector<2x8xf32>
    %18 = math.exp %17 : vector<2x8xf32>
    %cst_10 = arith.constant 1.000000e+00 : f32
    %19 = vector.broadcast %cst_10 : f32 to vector<2x8xf32>
    %20 = arith.addf %19, %18 : vector<2x8xf32>
    %21 = arith.divf %19, %20 : vector<2x8xf32>
    %22 = vector.extract_strided_slice %9 {offsets = [0, 16], sizes = [2, 8], strides = [1, 1]} : vector<2x32xf32> to vector<2x8xf32>
    %23 = math.tanh %22 : vector<2x8xf32>
    %24 = vector.extract_strided_slice %9 {offsets = [0, 24], sizes = [2, 8], strides = [1, 1]} : vector<2x32xf32> to vector<2x8xf32>
    %25 = arith.negf %24 : vector<2x8xf32>
    %26 = math.exp %25 : vector<2x8xf32>
    %cst_11 = arith.constant 1.000000e+00 : f32
    %27 = vector.broadcast %cst_11 : f32 to vector<2x8xf32>
    %28 = arith.addf %27, %26 : vector<2x8xf32>
    %29 = arith.divf %27, %28 : vector<2x8xf32>
    %30 = arith.mulf %21, %4 : vector<2x8xf32>
    %31 = arith.mulf %15, %23 : vector<2x8xf32>
    %32 = arith.addf %30, %31 : vector<2x8xf32>
    %33 = math.tanh %32 : vector<2x8xf32>
    %34 = arith.mulf %29, %33 : vector<2x8xf32>
    %c7_i32 = arith.constant 7 : i32
    %35 = arith.subi %c7_i32, %arg0 : i32
    %36 = tpu.iota {dimensions = array<i32: 1>} : vector<2x8xi32>
    %37 = vector.broadcast %35 : i32 to vector<2x8xi32>
    %38 = arith.cmpi eq, %36, %37 : vector<2x8xi32>
    %c0_12 = arith.constant 0 : index
    %c0_13 = arith.constant 0 : index
    %39 = vector.load %arg2[%c0_12, %c0_13] : memref<2x8xf32, #tpu.memory_space<vmem>>, vector<2x8xf32>
    %cst_14 = arith.constant 0.000000e+00 : f32
    %40 = vector.broadcast %cst_14 : f32 to vector<2x8xf32>
    %41 = arith.select %38, %39, %40 : vector<2x8xi1>, vector<2x8xf32>
    %cst_15 = arith.constant dense<0.000000e+00> : vector<2xf32>
    %42 = vector.multi_reduction <add>, %41, %cst_15 [1] : vector<2x8xf32> to vector<2xf32>
    %43 = vector.shape_cast %42 : vector<2xf32> to vector<2x1xf32>
    %cst_16 = arith.constant 0.000000e+00 : f32
    %44 = vector.broadcast %cst_16 : f32 to vector<2x1xf32>
    %45 = arith.cmpf ogt, %43, %44 : vector<2x1xf32>
    %46 = vector.shape_cast %45 : vector<2x1xi1> to vector<2x1xi1>
    %47 = vector.broadcast %46 : vector<2x1xi1> to vector<2x8xi1>
    %48 = arith.select %47, %34, %3 : vector<2x8xi1>, vector<2x8xf32>
    %cst_17 = arith.constant 0.000000e+00 : f32
    %49 = vector.broadcast %cst_17 : f32 to vector<2x1xf32>
    %50 = arith.cmpf ogt, %43, %49 : vector<2x1xf32>
    %51 = vector.shape_cast %50 : vector<2x1xi1> to vector<2x1xi1>
    %52 = vector.broadcast %51 : vector<2x1xi1> to vector<2x8xi1>
    %53 = arith.select %52, %32, %4 : vector<2x8xi1>, vector<2x8xf32>
    %c0_18 = arith.constant 0 : index
    %c0_19 = arith.constant 0 : index
    %54 = vector.load %arg5[%c0_18, %c0_19] : memref<2x8xf32, #tpu.memory_space<vmem>>, vector<2x8xf32>
    tpu.vector_store %arg5[%c0_18, %c0_19], %48 {strides = array<i32>} : memref<2x8xf32, #tpu.memory_space<vmem>>, vector<2x8xf32>,
    %c0_20 = arith.constant 0 : index
    %c0_21 = arith.constant 0 : index
    %55 = vector.load %arg6[%c0_20, %c0_21] : memref<2x8xf32, #tpu.memory_space<vmem>>, vector<2x8xf32>
    tpu.vector_store %arg6[%c0_20, %c0_21], %53 {strides = array<i32>} : memref<2x8xf32, #tpu.memory_space<vmem>>, vector<2x8xf32>,
    %56 = vector.broadcast %43 : vector<2x1xf32> to vector<2x8xf32>
    %57 = arith.mulf %48, %56 : vector<2x8xf32>
    %58 = vector.shape_cast %57 : vector<2x8xf32> to vector<1x2x8xf32>
    %c0_22 = arith.constant 0 : index
    %c0_23 = arith.constant 0 : index
    %c0_24 = arith.constant 0 : index
    %59 = vector.load %arg4[%c0_22, %c0_23, %c0_24] : memref<1x2x8xf32, #tpu.memory_space<vmem>>, vector<1x2x8xf32>
    tpu.vector_store %arg4[%c0_22, %c0_23, %c0_24], %58 {strides = array<i32>} : memref<1x2x8xf32, #tpu.memory_space<vmem>>, vector<1x2x8xf32>,
    return
  }
  func.func @transform_0(%arg0: i32) -> (i32, i32, i32) {
    %c7_i32 = arith.constant 7 : i32
    %0 = arith.subi %c7_i32, %arg0 : i32
    %c0_i32 = arith.constant 0 : i32
    %c0_i32_0 = arith.constant 0 : i32
    %c0_i32_1 = arith.constant 0 : i32
    return %0, %c0_i32, %c0_i32_0 : i32, i32, i32
  }
  func.func @transform_1(%arg0: i32) -> (i32, i32) {
    %c0_i32 = arith.constant 0 : i32
    %c0_i32_0 = arith.constant 0 : i32
    %c0_i32_1 = arith.constant 0 : i32
    return %c0_i32, %c0_i32_0 : i32, i32
  }
  func.func @transform_2(%arg0: i32) -> (i32, i32) {
    %c0_i32 = arith.constant 0 : i32
    %c0_i32_0 = arith.constant 0 : i32
    %c0_i32_1 = arith.constant 0 : i32
    return %c0_i32, %c0_i32_0 : i32, i32
  }
  func.func @transform_3(%arg0: i32) -> (i32, i32, i32) {
    %c7_i32 = arith.constant 7 : i32
    %0 = arith.subi %c7_i32, %arg0 : i32
    %c0_i32 = arith.constant 0 : i32
    %c0_i32_0 = arith.constant 0 : i32
    %c0_i32_1 = arith.constant 0 : i32
    return %0, %c0_i32, %c0_i32_0 : i32, i32, i32
  }
  func.func @transform_4(%arg0: i32) -> (i32, i32) {
    %c0_i32 = arith.constant 0 : i32
    %c0_i32_0 = arith.constant 0 : i32
    %c0_i32_1 = arith.constant 0 : i32
    return %c0_i32, %c0_i32_0 : i32, i32
  }
  func.func @transform_5(%arg0: i32) -> (i32, i32) {
    %c0_i32 = arith.constant 0 : i32
    %c0_i32_0 = arith.constant 0 : i32
    %c0_i32_1 = arith.constant 0 : i32
    return %c0_i32, %c0_i32_0 : i32, i32
  }
}

</mosaic_0001>

<llo_original>
// kernel: model_forward.13
$region0: #{model_forward.13}
  #allocation0 [shape = 'u32[]', space=smem, size = 0x4, offset = 0x4, fixed_abs, tag = 'smem constant byte address 0x4 - core index']
  #allocation1 [shape = 'u32[144,128]{1,0:T(1,128)}', space=vmem, size = 0x12000, scoped, tag = 'internal scratch']
  %s0 = inlined_call_operand.vmem [shape: f32[8,2,32], index: 0, kind: input, shape index: {}]
  %s1 = inlined_call_operand.vmem [shape: f32[2,8], index: 1, kind: input, shape index: {}]
  %s2 = inlined_call_operand.vmem [shape: f32[8,32], index: 2, kind: input, shape index: {}]
  %s3 = inlined_call_operand.vmem [shape: f32[8,2,8], index: 3, kind: output, shape index: {0}]
  %s4 = inlined_call_operand.hbm [shape: f32[2,8], index: 4, kind: output, shape index: {1}]
  %s5 = inlined_call_operand.hbm [shape: f32[2,8], index: 5, kind: output, shape index: {2}]
  %6 = xla_tuple %s3, %s4, %s5
  %s7 = sld [smem:[#allocation0]]
  $region65: #{model_forward.13} parent=0
    _
  %s9 = ssub.s32 1, %s7
  %s10 = scalar_select 0, %s9, %s7
  $region1: #{model_forward.13} parent=0
    #allocation2 [shape = 'u8[1024]{0}', space=vmem, size = 0x400, scoped, tag = 'output window, operand 1, single buffered']
    #allocation3 [shape = 's32[2]{0}', space=sflag, size = 0x8, scoped, tag = 'scoped memory for model_forward.13']
    #allocation4 [shape = 'u8[1024]{0}', space=vmem, size = 0x400, scoped, tag = 'output window, operand 2, single buffered']
    #allocation5 [shape = 's32[1]{0}', space=sflag, size = 0x4, scoped, tag = 'scoped memory for model_forward.13']
    %11 = vsyncpa [#allocation3], 0
    %12 = vsyncpa [#allocation5], 0
    loop: start=0, step=1, limit=10
    $region2: #{model_forward.13} parent=1 // loop_pre_header
      _
    $region3: #{model_forward.13} parent=1 // loop_header
      %s14 = sphi 0, %s18
      %p15 = scmp.ge.s32.totalorder %s14, 10
      %s26 = sphi 0, %s28
      %s29 = sphi 0, %s26
      %s30 = sphi 0, %s29
      %s46 = sphi 0, %s30
      %s50 = sphi 0, %s50
      %s52 = sphi 0, %s50
      %s53 = sphi 0, %s52
      %s67 = sphi 0, %s53
      %s71 = sphi 0, %s71
      %s73 = sphi 0, %s71
      %s74 = sphi 0, %s73
      %s88 = sphi 0, %s74
      %s96 = sphi 0, %s98
      %s99 = sphi 0, %s96
      %s100 = sphi 0, %s99
      %s116 = sphi 0, %s100
      %s120 = sphi 0, %s120
      %s122 = sphi 0, %s120
      %s123 = sphi 0, %s122
      %s137 = sphi 0, %s123
      %s141 = sphi 0, %s141
      %s143 = sphi 0, %s141
      %s144 = sphi 0, %s143
      %s158 = sphi 0, %s144
    $region4: #{model_forward.13} parent=1 // loop_header_branch
      %17 = sbr.rel (%p15) target = $region8
    $region5: #{model_forward.13} parent=1 // loop_body
      %s19 = ssub.s32 %s14, 1
      %s20 = ssub.s32 %s14, 2
      %s21 = sadd.s32 %s14, 1
      %s22 = ssub.s32 7, %s14
      %s23 = ssub.s32 7, %s21
      %s24 = ssub.s32 %s22, %s23
      %p25 = scmp.eq.s32.totalorder %s24, 0
      %s27 = sadd.s32 %s26, 1
      %s28 = scalar_select %p25, %s26, %s27
      %p31 = pneg %p25
      %p32 = scmp.eq.s32.totalorder %s14, 7
      %p33 = por %p31, %p32
      %p34 = scmp.ne.s32.totalorder %s26, %s29
      %p35 = scmp.eq.s32.totalorder %s14, 0
      %p36 = por %p34, %p35
      %p37 = scmp.ne.s32.totalorder %s26, %s29
      %p38 = scmp.eq.s32.totalorder %s19, 7
      %p39 = por %p37, %p38
      %p40 = scmp.ne.s32.totalorder %s29, %s30
      %p41 = scmp.eq.s32.totalorder %s19, 0
      %p42 = por %p40, %p41
      %p43 = scmp.ne.s32.totalorder %s29, %s30
      %p44 = scmp.eq.s32.totalorder %s20, 7
      %p45 = por %p43, %p44
      %p47 = scmp.ne.s32.totalorder %s30, %s46
      %p48 = scmp.eq.s32.totalorder %s20, 0
      %p49 = por %p47, %p48
      %s51 = sadd.s32 %s50, 1
      %p54 = scmp.eq.s32.totalorder %s14, 7
      %p55 = scmp.ne.s32.totalorder %s50, %s52
      %p56 = scmp.eq.s32.totalorder %s14, 0
      %p57 = por %p55, %p56
      %p58 = scmp.ne.s32.totalorder %s50, %s52
      %p59 = scmp.eq.s32.totalorder %s19, 7
      %p60 = por %p58, %p59
      %p61 = scmp.ne.s32.totalorder %s52, %s53
      %p62 = scmp.eq.s32.totalorder %s19, 0
      %p63 = por %p61, %p62
      %p64 = scmp.ne.s32.totalorder %s52, %s53
      %p65 = scmp.eq.s32.totalorder %s20, 7
      %p66 = por %p64, %p65
      %p68 = scmp.ne.s32.totalorder %s53, %s67
      %p69 = scmp.eq.s32.totalorder %s20, 0
      %p70 = por %p68, %p69
      %s72 = sadd.s32 %s71, 1
      %p75 = scmp.eq.s32.totalorder %s14, 7
      %p76 = scmp.ne.s32.totalorder %s71, %s73
      %p77 = scmp.eq.s32.totalorder %s14, 0
      %p78 = por %p76, %p77
      %p79 = scmp.ne.s32.totalorder %s71, %s73
      %p80 = scmp.eq.s32.totalorder %s19, 7
      %p81 = por %p79, %p80
      %p82 = scmp.ne.s32.totalorder %s73, %s74
      %p83 = scmp.eq.s32.totalorder %s19, 0
      %p84 = por %p82, %p83
      %p85 = scmp.ne.s32.totalorder %s73, %s74
      %p86 = scmp.eq.s32.totalorder %s20, 7
      %p87 = por %p85, %p86
      %p89 = scmp.ne.s32.totalorder %s74, %s88
      %p90 = scmp.eq.s32.totalorder %s20, 0
      %p91 = por %p89, %p90
      %s92 = ssub.s32 7, %s14
      %s93 = ssub.s32 7, %s21
      %s94 = ssub.s32 %s92, %s93
      %p95 = scmp.eq.s32.totalorder %s94, 0
      %s97 = sadd.s32 %s96, 1
      %s98 = scalar_select %p95, %s96, %s97
      %p101 = pneg %p95
      %p102 = scmp.eq.s32.totalorder %s14, 7
      %p103 = por %p101, %p102
      %p104 = scmp.ne.s32.totalorder %s96, %s99
      %p105 = scmp.eq.s32.totalorder %s14, 0
      %p106 = por %p104, %p105
      %p107 = scmp.ne.s32.totalorder %s96, %s99
      %p108 = scmp.eq.s32.totalorder %s19, 7
      %p109 = por %p107, %p108
      %p110 = scmp.ne.s32.totalorder %s99, %s100
      %p111 = scmp.eq.s32.totalorder %s19, 0
      %p112 = por %p110, %p111
      %p113 = scmp.ne.s32.totalorder %s99, %s100
      %p114 = scmp.eq.s32.totalorder %s20, 7
      %p115 = por %p113, %p114
      %p117 = scmp.ne.s32.totalorder %s100, %s116
      %p118 = scmp.eq.s32.totalorder %s20, 0
      %p119 = por %p117, %p118
      %s121 = sadd.s32 %s120, 1
      %p124 = scmp.eq.s32.totalorder %s14, 7
      %p125 = scmp.ne.s32.totalorder %s120, %s122
      %p126 = scmp.eq.s32.totalorder %s14, 0
      %p127 = por %p125, %p126
      %p128 = scmp.ne.s32.totalorder %s120, %s122
      %p129 = scmp.eq.s32.totalorder %s19, 7
      %p130 = por %p128, %p129
      %p131 = scmp.ne.s32.totalorder %s122, %s123
      %p132 = scmp.eq.s32.totalorder %s19, 0
      %p133 = por %p131, %p132
      %p134 = scmp.ne.s32.totalorder %s122, %s123
      %p135 = scmp.eq.s32.totalorder %s20, 7
      %p136 = por %p134, %p135
      %p138 = scmp.ne.s32.totalorder %s123, %s137
      %p139 = scmp.eq.s32.totalorder %s20, 0
      %p140 = por %p138, %p139
      %s142 = sadd.s32 %s141, 1
      %p145 = scmp.eq.s32.totalorder %s14, 7
      %p146 = scmp.ne.s32.totalorder %s141, %s143
      %p147 = scmp.eq.s32.totalorder %s14, 0
      %p148 = por %p146, %p147
      %p149 = scmp.ne.s32.totalorder %s141, %s143
      %p150 = scmp.eq.s32.totalorder %s19, 7
      %p151 = por %p149, %p150
      %p152 = scmp.ne.s32.totalorder %s143, %s144
      %p153 = scmp.eq.s32.totalorder %s19, 0
      %p154 = por %p152, %p153
      %p155 = scmp.ne.s32.totalorder %s143, %s144
      %p156 = scmp.eq.s32.totalorder %s20, 7
      %p157 = por %p155, %p156
      %p159 = scmp.ne.s32.totalorder %s144, %s158
      %p160 = scmp.eq.s32.totalorder %s20, 0
      %p161 = por %p159, %p160
      %p162 = scmp.le.s32.totalorder 1, %s14
      %p163 = scmp.lt.s32.totalorder %s14, 9
      %p164 = pnand %p162, %p163
      %p165 = pneg %p164
      // Predicated region
      $region9: #{model_forward.13} parent=5 // pred_check
        _
      $region10: #{model_forward.13} parent=5 // pred_check_branch
        %167 = sbr.rel (%p164) target = $region12
      $region11: #{model_forward.13} parent=5 // pred_region
        %s168 = ssub.s32 %s14, 1
        // Predicated region
        $region13: #{model_forward.13} parent=11 // pred_check
          %p169 = pneg %p63
        $region14: #{model_forward.13} parent=11 // pred_check_branch
          %171 = sbr.rel (%p169) target = $region16
        $region15: #{model_forward.13} parent=11 // pred_region
          _
        $region16: #{model_forward.13} parent=11 // pred_fallthru
          _
        // Predicated region
        $region17: #{model_forward.13} parent=11 // pred_check
          %p172 = pneg %p84
        $region18: #{model_forward.13} parent=11 // pred_check_branch
          %174 = sbr.rel (%p172) target = $region20
        $region19: #{model_forward.13} parent=11 // pred_region
          _
        $region20: #{model_forward.13} parent=11 // pred_fallthru
          _
      $region12: #{model_forward.13} parent=5 // pred_fallthru
        _
      %p175 = scmp.lt.s32.totalorder %s14, 8
      // Predicated region
      $region21: #{model_forward.13} parent=5 // pred_check
        %p176 = pneg %p175
      $region22: #{model_forward.13} parent=5 // pred_check_branch
        %178 = sbr.rel (%p176) target = $region24
      $region23: #{model_forward.13} parent=5 // pred_region
        // Predicated region
        $region25: #{model_forward.13} parent=23 // pred_check
          %p179 = pneg %p36
        $region26: #{model_forward.13} parent=23 // pred_check_branch
          %181 = sbr.rel (%p179) target = $region28
        $region27: #{model_forward.13} parent=23 // pred_region
          %s182 = ssub.s32 7, %s14
          %p183 = scmp.lt.s32.totalorder %s182, 7
          %s184 = scalar_select %p183, %s182, 7
          %s185 = smul.addr %s184, 2
          %s186 = scalar_lea.vmem %s0, %s185
          %s187 = ssub.s32 7, %s14
        $region28: #{model_forward.13} parent=23 // pred_fallthru
          _
      $region24: #{model_forward.13} parent=5 // pred_fallthru
        _
      %p188 = scmp.le.s32.totalorder 1, %s14
      %p189 = scmp.lt.s32.totalorder %s14, 9
      %p190 = pnand %p188, %p189
      %p191 = pneg %p190
      // Predicated region
      $region29: #{model_forward.13} parent=5 // pred_check
        _
      $region30: #{model_forward.13} parent=5 // pred_check_branch
        %193 = sbr.rel (%p190) target = $region32
      $region31: #{model_forward.13} parent=5 // pred_region
        %s194 = ssub.s32 %s14, 1
        %s195 = ssub.s32 7, %s19
        %p196 = scmp.lt.s32.totalorder %s195, 7
        %s197 = scalar_select %p196, %s195, 7
        %s198 = smul.addr %s197, 2
        %s199 = scalar_lea.vmem %s0, %s198
        %p200 = pneg %p42
        %p201 = pneg %p39
        %p202 = pneg %p63
        %p203 = pneg %p60
        %p204 = pneg %p84
        %p205 = pneg %p81
        %p206 = pneg %p112
        %p207 = pneg %p109
        %s208 = ssub.s32 7, %s19
        %p209 = scmp.lt.s32.totalorder %s208, 7
        %s210 = scalar_select %p209, %s208, 7
        %s211 = smul.addr %s210, 2
        %s212 = scalar_lea.vmem %s3, %s211
        %p213 = pneg %p133
        %p214 = pneg %p130
        %p215 = pneg %p154
        %p216 = pneg %p151
        %s217 = ssub.s32 7, %s19
        %p218 = scmp.lt.s32.totalorder %s217, 7
        %s219 = scalar_select %p218, %s217, 7
        %s220 = smul.addr %s219, 2
        %s221 = scalar_lea.vmem %s0, %s220
        %s222 = ssub.s32 7, %s19
        %s223 = ssub.s32 7, %s19
        %p224 = scmp.lt.s32.totalorder %s223, 7
        %s225 = scalar_select %p224, %s223, 7
        %s226 = smul.addr %s225, 2
        %s227 = scalar_lea.vmem %s3, %s226
        %s228 = ssub.s32 7, %s19
        %p229 = scmp.eq.s32.totalorder %s19, 0
        // Predicated region
        $region33: #{model_forward.13} parent=31 // pred_check
          %p230 = pneg %p229
        $region34: #{model_forward.13} parent=31 // pred_check_branch
          %232 = sbr.rel (%p230) target = $region36
        $region35: #{model_forward.13} parent=31 // pred_region
          %vm233 = vcmask 58368
          %234 = vst.msk [vmem:[#allocation2] sm:$0x3] %vm233, 0.0
          %235 = vst.msk [vmem:[#allocation4] sm:$0x3] %vm233, 0.0
        $region36: #{model_forward.13} parent=31 // pred_fallthru
          _
        %v236 = vld [vmem:[#allocation2] sm:$0x3]
        %v237 = vld [vmem:[#allocation4] sm:$0x3]
        %v238 = vld [vmem:[%s221] sm:$0x3]
        %v239 = vld [vmem:[%s2] sm:$0xff]
        %vm240 = vcmask 64512
        %v242 = vsel %vm240, %v236, 0
        %244 = vmatprep.subr.mxu0 0.0
        %245 = vmatpush1.msra.mxu0 %v239
        %246 = vmatprep.subr.mxu0 0.0
        %247 = vmatpush1.msra.mxu0 0.0
        %248 = vmatprep.subr.mxu0 0.0
        %249 = vmatpush1.msra.mxu0 0.0
        %250 = vmatprep.subr.mxu0 0.0
        %251 = vmatpush1.msra.mxu0 0.0
        %252 = vmatprep.subr.mxu0 0.0
        %253 = vmatpush1.msra.mxu0 0.0
        %254 = vmatprep.subr.mxu0 0.0
        %255 = vmatpush1.msra.mxu0 0.0
        %256 = vmatprep.subr.mxu0 0.0
        %257 = vmatpush1.msra.mxu0 0.0
        %258 = vmatprep.subr.mxu0 0.0
        %259 = vmatpush1.msra.mxu0 0.0
        %260 = vmatprep.subr.mxu0 0.0
        %261 = vmatpush1.msra.mxu0 0.0
        %262 = vmatprep.subr.mxu0 0.0
        %263 = vmatpush1.msra.mxu0 0.0
        %264 = vmatprep.subr.mxu0 0.0
        %265 = vmatpush1.msra.mxu0 0.0
        %266 = vmatprep.subr.mxu0 0.0
        %267 = vmatpush1.msra.mxu0 0.0
        %268 = vmatprep.subr.mxu0 0.0
        %269 = vmatpush1.msra.mxu0 0.0
        %270 = vmatprep.subr.mxu0 0.0
        %271 = vmatpush1.msra.mxu0 0.0
        %272 = vmatprep.subr.mxu0 0.0
        %273 = vmatpush1.msra.mxu0 0.0
        %274 = vmatprep.subr.mxu0 0.0
        %275 = vmatpush1.msra.mxu0 0.0
        %276 = vmatprep.subr.mxu0 0.0
        %277 = vmatpush1.msra.mxu0 0.0
        %278 = vmatprep.subr.mxu0 0.0
        %279 = vmatpush1.msra.mxu0 0.0
        %280 = vmatprep.subr.mxu0 0.0
        %281 = vmatpush1.msra.mxu0 0.0
        %282 = vmatprep.subr.mxu0 0.0
        %283 = vmatpush1.msra.mxu0 0.0
        %284 = vmatprep.subr.mxu0 0.0
        %285 = vmatpush1.msra.mxu0 0.0
        %286 = vmatprep.subr.mxu0 0.0
        %287 = vmatpush1.msra.mxu0 0.0
        %288 = vmatprep.subr.mxu0 0.0
        %289 = vmatpush1.msra.mxu0 0.0
        %290 = vmatprep.subr.mxu0 0.0
        %291 = vmatpush1.msra.mxu0 0.0
        %292 = vmatprep.subr.mxu0 0.0
        %293 = vmatpush1.msra.mxu0 0.0
        %294 = vmatprep.subr.mxu0 0.0
        %295 = vmatpush1.msra.mxu0 0.0
        %296 = vmatprep.subr.mxu0 0.0
        %297 = vmatpush1.msra.mxu0 0.0
        %298 = vmatprep.subr.mxu0 0.0
        %299 = vmatpush1.msra.mxu0 0.0
        %300 = vmatprep.subr.mxu0 0.0
        %301 = vmatpush1.msra.mxu0 0.0
        %302 = vmatprep.subr.mxu0 0.0
        %303 = vmatpush1.msra.mxu0 0.0
        %304 = vmatprep.subr.mxu0 0.0
        %305 = vmatpush1.msra.mxu0 0.0
        %306 = vmatprep.subr.mxu0 0.0
        %307 = vmatpush1.msra.mxu0 0.0
        %308 = vmatprep.mubr.f32.mxu0 0.0
        %309 = vmatmul.mubr.f32.gmra.mrb[0].mxu0 %v242
        %v310 = vpop.f32.mrb[0].mxu0
        %v311 = vadd.f32 0.0, %v310
        %v312 = vpop.f32.mrb[0].mxu0
        %313 = vdwg.mxu0
        %v314 = vadd.f32 %v238, %v311
        %v315 = vxor.u32 %v314, 2147483648
        %v316 = vmul.f32 %v315, 1.442695
        %v317 = vpow.pop %v316
        %v318 = vadd.f32 %v317, 1.0
        %v319 = vrcp.pop %v318
        %v320 = vmul.f32 1.0, %v319
        %v321 = vtanh.pop %v314
        %323 = vrot.lane.b32.xlu0 %v237, 8
        %v324 = vpop.permute.xlu0 %323
        %v326 = vmul.f32 %v320, %v324
        %328 = vrot.lane.b32.xlu0 %v321, 112
        %v329 = vpop.permute.xlu0 %328
        %v331 = vmul.f32 %v320, %v329
        %333 = vrot.lane.b32.xlu0 %v331, 8
        %v334 = vpop.permute.xlu0 %333
        %v336 = vadd.f32 %v326, %v334
        %v337 = vtanh.pop %v336
        %339 = vrot.lane.b32.xlu0 %v337, 16
        %v340 = vpop.permute.xlu0 %339
        %v342 = vmul.f32 %v320, %v340
        %s343 = ssub.s32 7, %s19
        %v344 = vlaneseq
        %v345 = vand.u32 %v344, 127
        %v346 = vstv %s343
        %vm347 = vcmp.eq.s32.totalorder %v345, %v346
        %v348 = vld [vmem:[%s1] sm:$0x3]
        %v349 = vsel %vm347, %v348, 0.0
        %vm350 = vcmask 58368
        %v351 = vsel %vm350, %v349, 0.0
        %352 = vadd.xlane.f32.xlu0 %v351
        %v353 = vpop.xlane.xlu0 %352
        %vm354 = vcmp.gt.f32.partialorder %v353, 0.0
        %v355 = vsel %vm354, 1, 0
        %vm356 = vcmp.eq.s32.totalorder %v355, 1
        %357 = vrot.lane.b32.xlu0 %v236, 24
        %v358 = vpop.permute.xlu0 %357
        %v360 = vsel %vm356, %v342, %v358
        %v361 = vsel %vm356, %v336, %v324
        %363 = vrot.lane.b32.xlu0 %v360, 104
        %v364 = vpop.permute.xlu0 %363
        %366 = vst.msk [vmem:[#allocation2] sm:$0x3] %vm350, %v364
        %368 = vrot.lane.b32.xlu0 %v361, 120
        %v369 = vpop.permute.xlu0 %368
        %371 = vst.msk [vmem:[#allocation4] sm:$0x3] %vm350, %v369
        %v372 = vmul.f32 %v360, %v353
        %374 = vrot.lane.b32.xlu0 %v372, 104
        %v375 = vpop.permute.xlu0 %374
        %377 = vst.msk [vmem:[%s227] sm:$0x3] %vm350, %v375
        %s378 = ssub.s32 7, %s19
        %p379 = scmp.lt.s32.totalorder %s378, 7
        %s380 = scalar_select %p379, %s378, 7
        %s381 = smul.addr %s380, 2
        %s382 = scalar_lea.vmem %s3, %s381
        // Predicated region
        $region37: #{model_forward.13} parent=31 // pred_check
          %p383 = pneg %p109
        $region38: #{model_forward.13} parent=31 // pred_check_branch
          %385 = sbr.rel (%p383) target = $region40
        $region39: #{model_forward.13} parent=31 // pred_region
          %s386 = ssub.s32 7, %s19
        $region40: #{model_forward.13} parent=31 // pred_fallthru
          _
        // Predicated region
        $region41: #{model_forward.13} parent=31 // pred_check
          %p387 = pneg %p130
        $region42: #{model_forward.13} parent=31 // pred_check_branch
          %389 = sbr.rel (%p387) target = $region44
        $region43: #{model_forward.13} parent=31 // pred_region
          %s391 = ssub.s32 32, 32
          %392 = vsyncadd [#allocation3], %s391
          %s394 = sshll.u32 [#allocation2], 4
          %s395 = int_to_ptr.vmem [resolvable:$true] %s394
          %397 = dma.vmem_to_hbm [thread:$0]  %s395, 32, %s4, [#allocation3]
        $region44: #{model_forward.13} parent=31 // pred_fallthru
          _
        // Predicated region
        $region45: #{model_forward.13} parent=31 // pred_check
          %p398 = pneg %p151
        $region46: #{model_forward.13} parent=31 // pred_check_branch
          %400 = sbr.rel (%p398) target = $region48
        $region47: #{model_forward.13} parent=31 // pred_region
          %s402 = ssub.s32 32, 32
          %403 = vsyncadd [#allocation5], %s402
          %s405 = sshll.u32 [#allocation4], 4
          %s406 = int_to_ptr.vmem [resolvable:$true] %s405
          %408 = dma.vmem_to_hbm [thread:$0]  %s406, 32, %s5, [#allocation5]
        $region48: #{model_forward.13} parent=31 // pred_fallthru
          _
        // Predicated region
        $region49: #{model_forward.13} parent=31 // pred_check
          %p409 = pneg %p130
        $region50: #{model_forward.13} parent=31 // pred_check_branch
          %411 = sbr.rel (%p409) target = $region52
        $region51: #{model_forward.13} parent=31 // pred_region
          %412 = dma.done [#allocation3], 32
        $region52: #{model_forward.13} parent=31 // pred_fallthru
          _
        // Predicated region
        $region53: #{model_forward.13} parent=31 // pred_check
          %p413 = pneg %p151
        $region54: #{model_forward.13} parent=31 // pred_check_branch
          %415 = sbr.rel (%p413) target = $region56
        $region55: #{model_forward.13} parent=31 // pred_region
          %416 = dma.done [#allocation5], 32
        $region56: #{model_forward.13} parent=31 // pred_fallthru
          _
      $region32: #{model_forward.13} parent=5 // pred_fallthru
        _
      %p417 = scmp.le.s32.totalorder 2, %s14
      // Predicated region
      $region57: #{model_forward.13} parent=5 // pred_check
        %p418 = pneg %p417
      $region58: #{model_forward.13} parent=5 // pred_check_branch
        %420 = sbr.rel (%p418) target = $region60
      $region59: #{model_forward.13} parent=5 // pred_region
        %s421 = ssub.s32 %s14, 2
        // Predicated region
        $region61: #{model_forward.13} parent=59 // pred_check
          %p422 = pneg %p115
        $region62: #{model_forward.13} parent=59 // pred_check_branch
          %424 = sbr.rel (%p422) target = $region64
        $region63: #{model_forward.13} parent=59 // pred_region
          %s425 = ssub.s32 7, %s20
          %p426 = scmp.lt.s32.totalorder %s425, 7
          %s427 = scalar_select %p426, %s425, 7
          %s428 = smul.addr %s427, 2
          %s429 = scalar_lea.vmem %s3, %s428
        $region64: #{model_forward.13} parent=59 // pred_fallthru
          _
      $region60: #{model_forward.13} parent=5 // pred_fallthru
        _
    $region6: #{model_forward.13} parent=1 // loop_footer
      %s18 = sadd.s32 1, %s14
    $region7: #{model_forward.13} parent=1 // loop_footer_branch
      %13 = sbr.rel target = $region3
    $region8: #{model_forward.13} parent=1 // loop_exit
      _
    %430 = vsyncpa [#allocation3], 1
    %s431 = scalar_lea.sflag [#allocation3], 1
    %432 = vsyncpa %s431, 1
    %433 = vsyncpa [#allocation5], 1

// kernel: model_forward.12
$region0: #{model_forward.12}
  #allocation0 [shape = 'u32[]', space=smem, size = 0x4, offset = 0x4, fixed_abs, tag = 'smem constant byte address 0x4 - core index']
  #allocation1 [shape = 'u32[144,128]{1,0:T(1,128)}', space=vmem, size = 0x12000, scoped, tag = 'internal scratch']
  %s0 = inlined_call_operand.vmem [shape: f32[8,2,32], index: 0, kind: input, shape index: {}]
  %s1 = inlined_call_operand.vmem [shape: f32[2,8], index: 1, kind: input, shape index: {}]
  %s2 = inlined_call_operand.vmem [shape: f32[8,32], index: 2, kind: input, shape index: {}]
  %s3 = inlined_call_operand.vmem [shape: f32[8,2,8], index: 3, kind: output, shape index: {0}]
  %s4 = inlined_call_operand.hbm [shape: f32[2,8], index: 4, kind: output, shape index: {1}]
  %s5 = inlined_call_operand.hbm [shape: f32[2,8], index: 5, kind: output, shape index: {2}]
  %6 = xla_tuple %s3, %s4, %s5
  %s7 = sld [smem:[#allocation0]]
  $region65: #{model_forward.12} parent=0
    _
  %s9 = ssub.s32 1, %s7
  %s10 = scalar_select 0, %s9, %s7
  $region1: #{model_forward.12} parent=0
    #allocation2 [shape = 'u8[1024]{0}', space=vmem, size = 0x400, scoped, tag = 'output window, operand 1, single buffered']
    #allocation3 [shape = 's32[2]{0}', space=sflag, size = 0x8, scoped, tag = 'scoped memory for model_forward.12']
    #allocation4 [shape = 'u8[1024]{0}', space=vmem, size = 0x400, scoped, tag = 'output window, operand 2, single buffered']
    #allocation5 [shape = 's32[1]{0}', space=sflag, size = 0x4, scoped, tag = 'scoped memory for model_forward.12']
    %11 = vsyncpa [#allocation3], 0
    %12 = vsyncpa [#allocation5], 0
    loop: start=0, step=1, limit=10
    $region2: #{model_forward.12} parent=1 // loop_pre_header
      _
    $region3: #{model_forward.12} parent=1 // loop_header
      %s14 = sphi 0, %s18
      %p15 = scmp.ge.s32.totalorder %s14, 10
      %s24 = sphi 0, %s26
      %s27 = sphi 0, %s24
      %s28 = sphi 0, %s27
      %s44 = sphi 0, %s28
      %s48 = sphi 0, %s48
      %s50 = sphi 0, %s48
      %s51 = sphi 0, %s50
      %s65 = sphi 0, %s51
      %s69 = sphi 0, %s69
      %s71 = sphi 0, %s69
      %s72 = sphi 0, %s71
      %s86 = sphi 0, %s72
      %s92 = sphi 0, %s94
      %s95 = sphi 0, %s92
      %s96 = sphi 0, %s95
      %s112 = sphi 0, %s96
      %s116 = sphi 0, %s116
      %s118 = sphi 0, %s116
      %s119 = sphi 0, %s118
      %s133 = sphi 0, %s119
      %s137 = sphi 0, %s137
      %s139 = sphi 0, %s137
      %s140 = sphi 0, %s139
      %s154 = sphi 0, %s140
    $region4: #{model_forward.12} parent=1 // loop_header_branch
      %17 = sbr.rel (%p15) target = $region8
    $region5: #{model_forward.12} parent=1 // loop_body
      %s19 = ssub.s32 %s14, 1
      %s20 = ssub.s32 %s14, 2
      %s21 = sadd.s32 %s14, 1
      %s22 = ssub.s32 %s14, %s21
      %p23 = scmp.eq.s32.totalorder %s22, 0
      %s25 = sadd.s32 %s24, 1
      %s26 = scalar_select %p23, %s24, %s25
      %p29 = pneg %p23
      %p30 = scmp.eq.s32.totalorder %s14, 7
      %p31 = por %p29, %p30
      %p32 = scmp.ne.s32.totalorder %s24, %s27
      %p33 = scmp.eq.s32.totalorder %s14, 0
      %p34 = por %p32, %p33
      %p35 = scmp.ne.s32.totalorder %s24, %s27
      %p36 = scmp.eq.s32.totalorder %s19, 7
      %p37 = por %p35, %p36
      %p38 = scmp.ne.s32.totalorder %s27, %s28
      %p39 = scmp.eq.s32.totalorder %s19, 0
      %p40 = por %p38, %p39
      %p41 = scmp.ne.s32.totalorder %s27, %s28
      %p42 = scmp.eq.s32.totalorder %s20, 7
      %p43 = por %p41, %p42
      %p45 = scmp.ne.s32.totalorder %s28, %s44
      %p46 = scmp.eq.s32.totalorder %s20, 0
      %p47 = por %p45, %p46
      %s49 = sadd.s32 %s48, 1
      %p52 = scmp.eq.s32.totalorder %s14, 7
      %p53 = scmp.ne.s32.totalorder %s48, %s50
      %p54 = scmp.eq.s32.totalorder %s14, 0
      %p55 = por %p53, %p54
      %p56 = scmp.ne.s32.totalorder %s48, %s50
      %p57 = scmp.eq.s32.totalorder %s19, 7
      %p58 = por %p56, %p57
      %p59 = scmp.ne.s32.totalorder %s50, %s51
      %p60 = scmp.eq.s32.totalorder %s19, 0
      %p61 = por %p59, %p60
      %p62 = scmp.ne.s32.totalorder %s50, %s51
      %p63 = scmp.eq.s32.totalorder %s20, 7
      %p64 = por %p62, %p63
      %p66 = scmp.ne.s32.totalorder %s51, %s65
      %p67 = scmp.eq.s32.totalorder %s20, 0
      %p68 = por %p66, %p67
      %s70 = sadd.s32 %s69, 1
      %p73 = scmp.eq.s32.totalorder %s14, 7
      %p74 = scmp.ne.s32.totalorder %s69, %s71
      %p75 = scmp.eq.s32.totalorder %s14, 0
      %p76 = por %p74, %p75
      %p77 = scmp.ne.s32.totalorder %s69, %s71
      %p78 = scmp.eq.s32.totalorder %s19, 7
      %p79 = por %p77, %p78
      %p80 = scmp.ne.s32.totalorder %s71, %s72
      %p81 = scmp.eq.s32.totalorder %s19, 0
      %p82 = por %p80, %p81
      %p83 = scmp.ne.s32.totalorder %s71, %s72
      %p84 = scmp.eq.s32.totalorder %s20, 7
      %p85 = por %p83, %p84
      %p87 = scmp.ne.s32.totalorder %s72, %s86
      %p88 = scmp.eq.s32.totalorder %s20, 0
      %p89 = por %p87, %p88
      %s90 = ssub.s32 %s14, %s21
      %p91 = scmp.eq.s32.totalorder %s90, 0
      %s93 = sadd.s32 %s92, 1
      %s94 = scalar_select %p91, %s92, %s93
      %p97 = pneg %p91
      %p98 = scmp.eq.s32.totalorder %s14, 7
      %p99 = por %p97, %p98
      %p100 = scmp.ne.s32.totalorder %s92, %s95
      %p101 = scmp.eq.s32.totalorder %s14, 0
      %p102 = por %p100, %p101
      %p103 = scmp.ne.s32.totalorder %s92, %s95
      %p104 = scmp.eq.s32.totalorder %s19, 7
      %p105 = por %p103, %p104
      %p106 = scmp.ne.s32.totalorder %s95, %s96
      %p107 = scmp.eq.s32.totalorder %s19, 0
      %p108 = por %p106, %p107
      %p109 = scmp.ne.s32.totalorder %s95, %s96
      %p110 = scmp.eq.s32.totalorder %s20, 7
      %p111 = por %p109, %p110
      %p113 = scmp.ne.s32.totalorder %s96, %s112
      %p114 = scmp.eq.s32.totalorder %s20, 0
      %p115 = por %p113, %p114
      %s117 = sadd.s32 %s116, 1
      %p120 = scmp.eq.s32.totalorder %s14, 7
      %p121 = scmp.ne.s32.totalorder %s116, %s118
      %p122 = scmp.eq.s32.totalorder %s14, 0
      %p123 = por %p121, %p122
      %p124 = scmp.ne.s32.totalorder %s116, %s118
      %p125 = scmp.eq.s32.totalorder %s19, 7
      %p126 = por %p124, %p125
      %p127 = scmp.ne.s32.totalorder %s118, %s119
      %p128 = scmp.eq.s32.totalorder %s19, 0
      %p129 = por %p127, %p128
      %p130 = scmp.ne.s32.totalorder %s118, %s119
      %p131 = scmp.eq.s32.totalorder %s20, 7
      %p132 = por %p130, %p131
      %p134 = scmp.ne.s32.totalorder %s119, %s133
      %p135 = scmp.eq.s32.totalorder %s20, 0
      %p136 = por %p134, %p135
      %s138 = sadd.s32 %s137, 1
      %p141 = scmp.eq.s32.totalorder %s14, 7
      %p142 = scmp.ne.s32.totalorder %s137, %s139
      %p143 = scmp.eq.s32.totalorder %s14, 0
      %p144 = por %p142, %p143
      %p145 = scmp.ne.s32.totalorder %s137, %s139
      %p146 = scmp.eq.s32.totalorder %s19, 7
      %p147 = por %p145, %p146
      %p148 = scmp.ne.s32.totalorder %s139, %s140
      %p149 = scmp.eq.s32.totalorder %s19, 0
      %p150 = por %p148, %p149
      %p151 = scmp.ne.s32.totalorder %s139, %s140
      %p152 = scmp.eq.s32.totalorder %s20, 7
      %p153 = por %p151, %p152
      %p155 = scmp.ne.s32.totalorder %s140, %s154
      %p156 = scmp.eq.s32.totalorder %s20, 0
      %p157 = por %p155, %p156
      %p158 = scmp.le.s32.totalorder 1, %s14
      %p159 = scmp.lt.s32.totalorder %s14, 9
      %p160 = pnand %p158, %p159
      %p161 = pneg %p160
      // Predicated region
      $region9: #{model_forward.12} parent=5 // pred_check
        _
      $region10: #{model_forward.12} parent=5 // pred_check_branch
        %163 = sbr.rel (%p160) target = $region12
      $region11: #{model_forward.12} parent=5 // pred_region
        %s164 = ssub.s32 %s14, 1
        // Predicated region
        $region13: #{model_forward.12} parent=11 // pred_check
          %p165 = pneg %p61
        $region14: #{model_forward.12} parent=11 // pred_check_branch
          %167 = sbr.rel (%p165) target = $region16
        $region15: #{model_forward.12} parent=11 // pred_region
          _
        $region16: #{model_forward.12} parent=11 // pred_fallthru
          _
        // Predicated region
        $region17: #{model_forward.12} parent=11 // pred_check
          %p168 = pneg %p82
        $region18: #{model_forward.12} parent=11 // pred_check_branch
          %170 = sbr.rel (%p168) target = $region20
        $region19: #{model_forward.12} parent=11 // pred_region
          _
        $region20: #{model_forward.12} parent=11 // pred_fallthru
          _
      $region12: #{model_forward.12} parent=5 // pred_fallthru
        _
      %p171 = scmp.lt.s32.totalorder %s14, 8
      // Predicated region
      $region21: #{model_forward.12} parent=5 // pred_check
        %p172 = pneg %p171
      $region22: #{model_forward.12} parent=5 // pred_check_branch
        %174 = sbr.rel (%p172) target = $region24
      $region23: #{model_forward.12} parent=5 // pred_region
        // Predicated region
        $region25: #{model_forward.12} parent=23 // pred_check
          %p175 = pneg %p34
        $region26: #{model_forward.12} parent=23 // pred_check_branch
          %177 = sbr.rel (%p175) target = $region28
        $region27: #{model_forward.12} parent=23 // pred_region
          %p178 = scmp.lt.s32.totalorder %s14, 7
          %s179 = scalar_select %p178, %s14, 7
          %s180 = smul.addr %s179, 2
          %s181 = scalar_lea.vmem %s0, %s180
        $region28: #{model_forward.12} parent=23 // pred_fallthru
          _
      $region24: #{model_forward.12} parent=5 // pred_fallthru
        _
      %p182 = scmp.le.s32.totalorder 1, %s14
      %p183 = scmp.lt.s32.totalorder %s14, 9
      %p184 = pnand %p182, %p183
      %p185 = pneg %p184
      // Predicated region
      $region29: #{model_forward.12} parent=5 // pred_check
        _
      $region30: #{model_forward.12} parent=5 // pred_check_branch
        %187 = sbr.rel (%p184) target = $region32
      $region31: #{model_forward.12} parent=5 // pred_region
        %s188 = ssub.s32 %s14, 1
        %p189 = scmp.lt.s32.totalorder %s19, 7
        %s190 = scalar_select %p189, %s19, 7
        %s191 = smul.addr %s190, 2
        %s192 = scalar_lea.vmem %s0, %s191
        %p193 = pneg %p40
        %p194 = pneg %p37
        %p195 = pneg %p61
        %p196 = pneg %p58
        %p197 = pneg %p82
        %p198 = pneg %p79
        %p199 = pneg %p108
        %p200 = pneg %p105
        %p201 = scmp.lt.s32.totalorder %s19, 7
        %s202 = scalar_select %p201, %s19, 7
        %s203 = smul.addr %s202, 2
        %s204 = scalar_lea.vmem %s3, %s203
        %p205 = pneg %p129
        %p206 = pneg %p126
        %p207 = pneg %p150
        %p208 = pneg %p147
        %p209 = scmp.lt.s32.totalorder %s19, 7
        %s210 = scalar_select %p209, %s19, 7
        %s211 = smul.addr %s210, 2
        %s212 = scalar_lea.vmem %s0, %s211
        %p213 = scmp.lt.s32.totalorder %s19, 7
        %s214 = scalar_select %p213, %s19, 7
        %s215 = smul.addr %s214, 2
        %s216 = scalar_lea.vmem %s3, %s215
        %p217 = scmp.eq.s32.totalorder %s19, 0
        // Predicated region
        $region33: #{model_forward.12} parent=31 // pred_check
          %p218 = pneg %p217
        $region34: #{model_forward.12} parent=31 // pred_check_branch
          %220 = sbr.rel (%p218) target = $region36
        $region35: #{model_forward.12} parent=31 // pred_region
          %vm221 = vcmask 58368
          %222 = vst.msk [vmem:[#allocation2] sm:$0x3] %vm221, 0.0
          %223 = vst.msk [vmem:[#allocation4] sm:$0x3] %vm221, 0.0
        $region36: #{model_forward.12} parent=31 // pred_fallthru
          _
        %v224 = vld [vmem:[#allocation2] sm:$0x3]
        %v225 = vld [vmem:[#allocation4] sm:$0x3]
        %v226 = vld [vmem:[%s212] sm:$0x3]
        %v227 = vld [vmem:[%s2] sm:$0xff]
        %vm228 = vcmask 64512
        %v230 = vsel %vm228, %v224, 0
        %232 = vmatprep.subr.mxu0 0.0
        %233 = vmatpush1.msra.mxu0 %v227
        %234 = vmatprep.subr.mxu0 0.0
        %235 = vmatpush1.msra.mxu0 0.0
        %236 = vmatprep.subr.mxu0 0.0
        %237 = vmatpush1.msra.mxu0 0.0
        %238 = vmatprep.subr.mxu0 0.0
        %239 = vmatpush1.msra.mxu0 0.0
        %240 = vmatprep.subr.mxu0 0.0
        %241 = vmatpush1.msra.mxu0 0.0
        %242 = vmatprep.subr.mxu0 0.0
        %243 = vmatpush1.msra.mxu0 0.0
        %244 = vmatprep.subr.mxu0 0.0
        %245 = vmatpush1.msra.mxu0 0.0
        %246 = vmatprep.subr.mxu0 0.0
        %247 = vmatpush1.msra.mxu0 0.0
        %248 = vmatprep.subr.mxu0 0.0
        %249 = vmatpush1.msra.mxu0 0.0
        %250 = vmatprep.subr.mxu0 0.0
        %251 = vmatpush1.msra.mxu0 0.0
        %252 = vmatprep.subr.mxu0 0.0
        %253 = vmatpush1.msra.mxu0 0.0
        %254 = vmatprep.subr.mxu0 0.0
        %255 = vmatpush1.msra.mxu0 0.0
        %256 = vmatprep.subr.mxu0 0.0
        %257 = vmatpush1.msra.mxu0 0.0
        %258 = vmatprep.subr.mxu0 0.0
        %259 = vmatpush1.msra.mxu0 0.0
        %260 = vmatprep.subr.mxu0 0.0
        %261 = vmatpush1.msra.mxu0 0.0
        %262 = vmatprep.subr.mxu0 0.0
        %263 = vmatpush1.msra.mxu0 0.0
        %264 = vmatprep.subr.mxu0 0.0
        %265 = vmatpush1.msra.mxu0 0.0
        %266 = vmatprep.subr.mxu0 0.0
        %267 = vmatpush1.msra.mxu0 0.0
        %268 = vmatprep.subr.mxu0 0.0
        %269 = vmatpush1.msra.mxu0 0.0
        %270 = vmatprep.subr.mxu0 0.0
        %271 = vmatpush1.msra.mxu0 0.0
        %272 = vmatprep.subr.mxu0 0.0
        %273 = vmatpush1.msra.mxu0 0.0
        %274 = vmatprep.subr.mxu0 0.0
        %275 = vmatpush1.msra.mxu0 0.0
        %276 = vmatprep.subr.mxu0 0.0
        %277 = vmatpush1.msra.mxu0 0.0
        %278 = vmatprep.subr.mxu0 0.0
        %279 = vmatpush1.msra.mxu0 0.0
        %280 = vmatprep.subr.mxu0 0.0
        %281 = vmatpush1.msra.mxu0 0.0
        %282 = vmatprep.subr.mxu0 0.0
        %283 = vmatpush1.msra.mxu0 0.0
        %284 = vmatprep.subr.mxu0 0.0
        %285 = vmatpush1.msra.mxu0 0.0
        %286 = vmatprep.subr.mxu0 0.0
        %287 = vmatpush1.msra.mxu0 0.0
        %288 = vmatprep.subr.mxu0 0.0
        %289 = vmatpush1.msra.mxu0 0.0
        %290 = vmatprep.subr.mxu0 0.0
        %291 = vmatpush1.msra.mxu0 0.0
        %292 = vmatprep.subr.mxu0 0.0
        %293 = vmatpush1.msra.mxu0 0.0
        %294 = vmatprep.subr.mxu0 0.0
        %295 = vmatpush1.msra.mxu0 0.0
        %296 = vmatprep.mubr.f32.mxu0 0.0
        %297 = vmatmul.mubr.f32.gmra.mrb[0].mxu0 %v230
        %v298 = vpop.f32.mrb[0].mxu0
        %v299 = vadd.f32 0.0, %v298
        %v300 = vpop.f32.mrb[0].mxu0
        %301 = vdwg.mxu0
        %v302 = vadd.f32 %v226, %v299
        %v303 = vxor.u32 %v302, 2147483648
        %v304 = vmul.f32 %v303, 1.442695
        %v305 = vpow.pop %v304
        %v306 = vadd.f32 %v305, 1.0
        %v307 = vrcp.pop %v306
        %v308 = vmul.f32 1.0, %v307
        %v309 = vtanh.pop %v302
        %311 = vrot.lane.b32.xlu0 %v225, 8
        %v312 = vpop.permute.xlu0 %311
        %v314 = vmul.f32 %v308, %v312
        %316 = vrot.lane.b32.xlu0 %v309, 112
        %v317 = vpop.permute.xlu0 %316
        %v319 = vmul.f32 %v308, %v317
        %321 = vrot.lane.b32.xlu0 %v319, 8
        %v322 = vpop.permute.xlu0 %321
        %v324 = vadd.f32 %v314, %v322
        %v325 = vtanh.pop %v324
        %327 = vrot.lane.b32.xlu0 %v325, 16
        %v328 = vpop.permute.xlu0 %327
        %v330 = vmul.f32 %v308, %v328
        %v331 = vlaneseq
        %v332 = vand.u32 %v331, 127
        %v333 = vstv %s19
        %vm334 = vcmp.eq.s32.totalorder %v332, %v333
        %v335 = vld [vmem:[%s1] sm:$0x3]
        %v336 = vsel %vm334, %v335, 0.0
        %vm337 = vcmask 58368
        %v338 = vsel %vm337, %v336, 0.0
        %339 = vadd.xlane.f32.xlu0 %v338
        %v340 = vpop.xlane.xlu0 %339
        %vm341 = vcmp.gt.f32.partialorder %v340, 0.0
        %v342 = vsel %vm341, 1, 0
        %vm343 = vcmp.eq.s32.totalorder %v342, 1
        %344 = vrot.lane.b32.xlu0 %v224, 24
        %v345 = vpop.permute.xlu0 %344
        %v347 = vsel %vm343, %v330, %v345
        %v348 = vsel %vm343, %v324, %v312
        %350 = vrot.lane.b32.xlu0 %v347, 104
        %v351 = vpop.permute.xlu0 %350
        %353 = vst.msk [vmem:[#allocation2] sm:$0x3] %vm337, %v351
        %355 = vrot.lane.b32.xlu0 %v348, 120
        %v356 = vpop.permute.xlu0 %355
        %358 = vst.msk [vmem:[#allocation4] sm:$0x3] %vm337, %v356
        %v359 = vmul.f32 %v347, %v340
        %361 = vrot.lane.b32.xlu0 %v359, 104
        %v362 = vpop.permute.xlu0 %361
        %364 = vst.msk [vmem:[%s216] sm:$0x3] %vm337, %v362
        %p365 = scmp.lt.s32.totalorder %s19, 7
        %s366 = scalar_select %p365, %s19, 7
        %s367 = smul.addr %s366, 2
        %s368 = scalar_lea.vmem %s3, %s367
        // Predicated region
        $region37: #{model_forward.12} parent=31 // pred_check
          %p369 = pneg %p105
        $region38: #{model_forward.12} parent=31 // pred_check_branch
          %371 = sbr.rel (%p369) target = $region40
        $region39: #{model_forward.12} parent=31 // pred_region
          _
        $region40: #{model_forward.12} parent=31 // pred_fallthru
          _
        // Predicated region
        $region41: #{model_forward.12} parent=31 // pred_check
          %p372 = pneg %p126
        $region42: #{model_forward.12} parent=31 // pred_check_branch
          %374 = sbr.rel (%p372) target = $region44
        $region43: #{model_forward.12} parent=31 // pred_region
          %s376 = ssub.s32 32, 32
          %377 = vsyncadd [#allocation3], %s376
          %s379 = sshll.u32 [#allocation2], 4
          %s380 = int_to_ptr.vmem [resolvable:$true] %s379
          %382 = dma.vmem_to_hbm [thread:$0]  %s380, 32, %s4, [#allocation3]
        $region44: #{model_forward.12} parent=31 // pred_fallthru
          _
        // Predicated region
        $region45: #{model_forward.12} parent=31 // pred_check
          %p383 = pneg %p147
        $region46: #{model_forward.12} parent=31 // pred_check_branch
          %385 = sbr.rel (%p383) target = $region48
        $region47: #{model_forward.12} parent=31 // pred_region
          %s387 = ssub.s32 32, 32
          %388 = vsyncadd [#allocation5], %s387
          %s390 = sshll.u32 [#allocation4], 4
          %s391 = int_to_ptr.vmem [resolvable:$true] %s390
          %393 = dma.vmem_to_hbm [thread:$0]  %s391, 32, %s5, [#allocation5]
        $region48: #{model_forward.12} parent=31 // pred_fallthru
          _
        // Predicated region
        $region49: #{model_forward.12} parent=31 // pred_check
          %p394 = pneg %p126
        $region50: #{model_forward.12} parent=31 // pred_check_branch
          %396 = sbr.rel (%p394) target = $region52
        $region51: #{model_forward.12} parent=31 // pred_region
          %397 = dma.done [#allocation3], 32
        $region52: #{model_forward.12} parent=31 // pred_fallthru
          _
        // Predicated region
        $region53: #{model_forward.12} parent=31 // pred_check
          %p398 = pneg %p147
        $region54: #{model_forward.12} parent=31 // pred_check_branch
          %400 = sbr.rel (%p398) target = $region56
        $region55: #{model_forward.12} parent=31 // pred_region
          %401 = dma.done [#allocation5], 32
        $region56: #{model_forward.12} parent=31 // pred_fallthru
          _
      $region32: #{model_forward.12} parent=5 // pred_fallthru
        _
      %p402 = scmp.le.s32.totalorder 2, %s14
      // Predicated region
      $region57: #{model_forward.12} parent=5 // pred_check
        %p403 = pneg %p402
      $region58: #{model_forward.12} parent=5 // pred_check_branch
        %405 = sbr.rel (%p403) target = $region60
      $region59: #{model_forward.12} parent=5 // pred_region
        %s406 = ssub.s32 %s14, 2
        // Predicated region
        $region61: #{model_forward.12} parent=59 // pred_check
          %p407 = pneg %p111
        $region62: #{model_forward.12} parent=59 // pred_check_branch
          %409 = sbr.rel (%p407) target = $region64
        $region63: #{model_forward.12} parent=59 // pred_region
          %p410 = scmp.lt.s32.totalorder %s20, 7
          %s411 = scalar_select %p410, %s20, 7
          %s412 = smul.addr %s411, 2
          %s413 = scalar_lea.vmem %s3, %s412
        $region64: #{model_forward.12} parent=59 // pred_fallthru
          _
      $region60: #{model_forward.12} parent=5 // pred_fallthru
        _
    $region6: #{model_forward.12} parent=1 // loop_footer
      %s18 = sadd.s32 1, %s14
    $region7: #{model_forward.12} parent=1 // loop_footer_branch
      %13 = sbr.rel target = $region3
    $region8: #{model_forward.12} parent=1 // loop_exit
      _
    %414 = vsyncpa [#allocation3], 1
    %s415 = scalar_lea.sflag [#allocation3], 1
    %416 = vsyncpa %s415, 1
    %417 = vsyncpa [#allocation5], 1

// kernel: model_forward.10
$region0: #{model_forward.10}
  #allocation0 [shape = 'u32[]', space=smem, size = 0x4, offset = 0x4, fixed_abs, tag = 'smem constant byte address 0x4 - core index']
  #allocation1 [shape = 'u32[144,128]{1,0:T(1,128)}', space=vmem, size = 0x12000, scoped, tag = 'internal scratch']
  %s0 = inlined_call_operand.vmem [shape: f32[16,16], index: 0, kind: input, shape index: {}]
  %s1 = inlined_call_operand.vmem [shape: f32[16,32], index: 1, kind: input, shape index: {}]
  %s2 = inlined_call_operand.vmem [shape: f32[1,32], index: 2, kind: input, shape index: {}]
  %s3 = inlined_call_operand.vmem [shape: f32[16,32], index: 3, kind: output, shape index: {}]
  %s4 = sld [smem:[#allocation0]]
  $region22: #{model_forward.10} parent=0
    _
  %s6 = ssub.s32 1, %s4
  %s7 = scalar_select 0, %s6, %s4
  // Predicated region
  $region2: #{model_forward.10} parent=0 // pred_check
    _
  $region3: #{model_forward.10} parent=0 // pred_check_branch
    %9 = sbr.rel (0) target = $region5
  $region4: #{model_forward.10} parent=0 // pred_region
    _
  $region5: #{model_forward.10} parent=0 // pred_fallthru
    _
  // Predicated region
  $region6: #{model_forward.10} parent=0 // pred_check
    _
  $region7: #{model_forward.10} parent=0 // pred_check_branch
    %11 = sbr.rel (0) target = $region9
  $region8: #{model_forward.10} parent=0 // pred_region
    _
  $region9: #{model_forward.10} parent=0 // pred_fallthru
    _
  // Predicated region
  $region10: #{model_forward.10} parent=0 // pred_check
    _
  $region11: #{model_forward.10} parent=0 // pred_check_branch
    %13 = sbr.rel (0) target = $region13
  $region12: #{model_forward.10} parent=0 // pred_region
    _
  $region13: #{model_forward.10} parent=0 // pred_fallthru
    _
  %v14 = vld [vmem:[%s0] sm:$0xff]
  %v15 = vld [vmem:[%s0 + $0x8] sm:$0xff]
  %v16 = vld [vmem:[%s1] sm:$0xff]
  %v17 = vld [vmem:[%s1 + $0x8] sm:$0xff]
  %v18 = vld [vmem:[%s2] sm:$0x1]
  %v20 = vlaneseq
  %v21 = vshrl.u32 %v20, 7
  %v22 = vsub.s32 0, %v21
  %v23 = vrot.slane %v18, %v22
  %vm25 = vcmask 130048
  %v27 = vsel %vm25, %v14, 0
  %v30 = vsel %vm25, %v15, 0
  %32 = vmatprep.subr.mxu0 0.0
  %33 = vmatpush1.msra.mxu0 %v16
  %34 = vmatprep.subr.mxu0 0.0
  %35 = vmatpush1.msra.mxu0 %v17
  %36 = vmatprep.subr.mxu0 0.0
  %37 = vmatpush1.msra.mxu0 0.0
  %38 = vmatprep.subr.mxu0 0.0
  %39 = vmatpush1.msra.mxu0 0.0
  %40 = vmatprep.subr.mxu0 0.0
  %41 = vmatpush1.msra.mxu0 0.0
  %42 = vmatprep.subr.mxu0 0.0
  %43 = vmatpush1.msra.mxu0 0.0
  %44 = vmatprep.subr.mxu0 0.0
  %45 = vmatpush1.msra.mxu0 0.0
  %46 = vmatprep.subr.mxu0 0.0
  %47 = vmatpush1.msra.mxu0 0.0
  %48 = vmatprep.subr.mxu0 0.0
  %49 = vmatpush1.msra.mxu0 0.0
  %50 = vmatprep.subr.mxu0 0.0
  %51 = vmatpush1.msra.mxu0 0.0
  %52 = vmatprep.subr.mxu0 0.0
  %53 = vmatpush1.msra.mxu0 0.0
  %54 = vmatprep.subr.mxu0 0.0
  %55 = vmatpush1.msra.mxu0 0.0
  %56 = vmatprep.subr.mxu0 0.0
  %57 = vmatpush1.msra.mxu0 0.0
  %58 = vmatprep.subr.mxu0 0.0
  %59 = vmatpush1.msra.mxu0 0.0
  %60 = vmatprep.subr.mxu0 0.0
  %61 = vmatpush1.msra.mxu0 0.0
  %62 = vmatprep.subr.mxu0 0.0
  %63 = vmatpush1.msra.mxu0 0.0
  %64 = vmatprep.subr.mxu0 0.0
  %65 = vmatpush1.msra.mxu0 0.0
  %66 = vmatprep.subr.mxu0 0.0
  %67 = vmatpush1.msra.mxu0 0.0
  %68 = vmatprep.subr.mxu0 0.0
  %69 = vmatpush1.msra.mxu0 0.0
  %70 = vmatprep.subr.mxu0 0.0
  %71 = vmatpush1.msra.mxu0 0.0
  %72 = vmatprep.subr.mxu0 0.0
  %73 = vmatpush1.msra.mxu0 0.0
  %74 = vmatprep.subr.mxu0 0.0
  %75 = vmatpush1.msra.mxu0 0.0
  %76 = vmatprep.subr.mxu0 0.0
  %77 = vmatpush1.msra.mxu0 0.0
  %78 = vmatprep.subr.mxu0 0.0
  %79 = vmatpush1.msra.mxu0 0.0
  %80 = vmatprep.subr.mxu0 0.0
  %81 = vmatpush1.msra.mxu0 0.0
  %82 = vmatprep.subr.mxu0 0.0
  %83 = vmatpush1.msra.mxu0 0.0
  %84 = vmatprep.subr.mxu0 0.0
  %85 = vmatpush1.msra.mxu0 0.0
  %86 = vmatprep.subr.mxu0 0.0
  %87 = vmatpush1.msra.mxu0 0.0
  %88 = vmatprep.subr.mxu0 0.0
  %89 = vmatpush1.msra.mxu0 0.0
  %90 = vmatprep.subr.mxu0 0.0
  %91 = vmatpush1.msra.mxu0 0.0
  %92 = vmatprep.subr.mxu0 0.0
  %93 = vmatpush1.msra.mxu0 0.0
  %94 = vmatprep.subr.mxu0 0.0
  %95 = vmatpush1.msra.mxu0 0.0
  %96 = vmatprep.mubr.f32.mxu0 0.0
  %97 = vmatmul.mubr.f32.gmra.mrb[0].mxu0 %v27
  %v98 = vpop.f32.mrb[0].mxu0
  %v99 = vadd.f32 %v23, %v98
  %v100 = vpop.f32.mrb[0].mxu0
  %101 = vmatprep.mubr.f32.mxu0 0.0
  %102 = vmatmul.mubr.f32.gmra.mrb[0].mxu0 %v30
  %v103 = vpop.f32.mrb[0].mxu0
  %v104 = vadd.f32 %v23, %v103
  %v105 = vpop.f32.mrb[0].mxu0
  %106 = vdwg.mxu0
  %vm107 = vcmask 261120
  %108 = vst.msk [vmem:[%s3] sm:$0xff] %vm107, %v99
  %109 = vst.msk [vmem:[%s3 + $0x8] sm:$0xff] %vm107, %v104
  // Predicated region
  $region14: #{model_forward.10} parent=0 // pred_check
    _
  $region15: #{model_forward.10} parent=0 // pred_check_branch
    %111 = sbr.rel (0) target = $region17
  $region16: #{model_forward.10} parent=0 // pred_region
    _
  $region17: #{model_forward.10} parent=0 // pred_fallthru
    _
  // Predicated region
  $region18: #{model_forward.10} parent=0 // pred_check
    _
  $region19: #{model_forward.10} parent=0 // pred_check_branch
    %113 = sbr.rel (0) target = $region21
  $region20: #{model_forward.10} parent=0 // pred_region
    _
  $region21: #{model_forward.10} parent=0 // pred_fallthru
    _

// kernel: model_forward.16
$region0: #{model_forward.16}
  #allocation0 [shape = 'u32[]', space=smem, size = 0x4, offset = 0x4, fixed_abs, tag = 'smem constant byte address 0x4 - core index']
  #allocation1 [shape = 'u32[144,128]{1,0:T(1,128)}', space=vmem, size = 0x12000, scoped, tag = 'internal scratch']
  %s0 = inlined_call_operand.vmem [shape: f32[8,2,32], index: 0, kind: input, shape index: {}]
  %s1 = inlined_call_operand.vmem [shape: f32[2,8], index: 1, kind: input, shape index: {}]
  %s2 = inlined_call_operand.vmem [shape: f32[8,32], index: 2, kind: input, shape index: {}]
  %s3 = inlined_call_operand.hbm [shape: f32[8,2,8], index: 3, kind: output, shape index: {0}]
  %s4 = inlined_call_operand.hbm [shape: f32[2,8], index: 4, kind: output, shape index: {1}]
  %s5 = inlined_call_operand.vmem [shape: f32[2,8], index: 5, kind: output, shape index: {2}]
  %6 = xla_tuple %s3, %s4, %s5
  %s7 = sld [smem:[#allocation0]]
  $region65: #{model_forward.16} parent=0
    _
  %s9 = ssub.s32 1, %s7
  %s10 = scalar_select 0, %s9, %s7
  $region1: #{model_forward.16} parent=0
    #allocation2 [shape = 'u8[2048]{0}', space=vmem, size = 0x800, scoped, tag = 'output window, operand 0']
    #allocation3 [shape = 's32[2]{0}', space=sflag, size = 0x8, scoped, tag = 'scoped memory for model_forward.16']
    #allocation4 [shape = 'u8[1024]{0}', space=vmem, size = 0x400, scoped, tag = 'output window, operand 1, single buffered']
    #allocation5 [shape = 's32[1]{0}', space=sflag, size = 0x4, scoped, tag = 'scoped memory for model_forward.16']
    %11 = vsyncpa [#allocation3], 0
    %s12 = scalar_lea.sflag [#allocation3], 1
    %13 = vsyncpa %s12, 0
    %14 = vsyncpa [#allocation5], 0
    loop: start=0, step=1, limit=10
    $region2: #{model_forward.16} parent=1 // loop_pre_header
      _
    $region3: #{model_forward.16} parent=1 // loop_header
      %s16 = sphi 0, %s20
      %p17 = scmp.ge.s32.totalorder %s16, 10
      %s26 = sphi 0, %s28
      %s29 = sphi 0, %s26
      %s30 = sphi 0, %s29
      %s46 = sphi 0, %s30
      %s50 = sphi 0, %s50
      %s52 = sphi 0, %s50
      %s53 = sphi 0, %s52
      %s67 = sphi 0, %s53
      %s71 = sphi 0, %s71
      %s73 = sphi 0, %s71
      %s74 = sphi 0, %s73
      %s88 = sphi 0, %s74
      %s94 = sphi 0, %s96
      %s97 = sphi 0, %s94
      %s98 = sphi 0, %s97
      %s114 = sphi 0, %s98
      %s118 = sphi 0, %s118
      %s120 = sphi 0, %s118
      %s121 = sphi 0, %s120
      %s135 = sphi 0, %s121
      %s139 = sphi 0, %s139
      %s141 = sphi 0, %s139
      %s142 = sphi 0, %s141
      %s156 = sphi 0, %s142
    $region4: #{model_forward.16} parent=1 // loop_header_branch
      %19 = sbr.rel (%p17) target = $region8
    $region5: #{model_forward.16} parent=1 // loop_body
      %s21 = ssub.s32 %s16, 1
      %s22 = ssub.s32 %s16, 2
      %s23 = sadd.s32 %s16, 1
      %s24 = ssub.s32 %s16, %s23
      %p25 = scmp.eq.s32.totalorder %s24, 0
      %s27 = sadd.s32 %s26, 1
      %s28 = scalar_select %p25, %s26, %s27
      %p31 = pneg %p25
      %p32 = scmp.eq.s32.totalorder %s16, 7
      %p33 = por %p31, %p32
      %p34 = scmp.ne.s32.totalorder %s26, %s29
      %p35 = scmp.eq.s32.totalorder %s16, 0
      %p36 = por %p34, %p35
      %p37 = scmp.ne.s32.totalorder %s26, %s29
      %p38 = scmp.eq.s32.totalorder %s21, 7
      %p39 = por %p37, %p38
      %p40 = scmp.ne.s32.totalorder %s29, %s30
      %p41 = scmp.eq.s32.totalorder %s21, 0
      %p42 = por %p40, %p41
      %p43 = scmp.ne.s32.totalorder %s29, %s30
      %p44 = scmp.eq.s32.totalorder %s22, 7
      %p45 = por %p43, %p44
      %p47 = scmp.ne.s32.totalorder %s30, %s46
      %p48 = scmp.eq.s32.totalorder %s22, 0
      %p49 = por %p47, %p48
      %s51 = sadd.s32 %s50, 1
      %p54 = scmp.eq.s32.totalorder %s16, 7
      %p55 = scmp.ne.s32.totalorder %s50, %s52
      %p56 = scmp.eq.s32.totalorder %s16, 0
      %p57 = por %p55, %p56
      %p58 = scmp.ne.s32.totalorder %s50, %s52
      %p59 = scmp.eq.s32.totalorder %s21, 7
      %p60 = por %p58, %p59
      %p61 = scmp.ne.s32.totalorder %s52, %s53
      %p62 = scmp.eq.s32.totalorder %s21, 0
      %p63 = por %p61, %p62
      %p64 = scmp.ne.s32.totalorder %s52, %s53
      %p65 = scmp.eq.s32.totalorder %s22, 7
      %p66 = por %p64, %p65
      %p68 = scmp.ne.s32.totalorder %s53, %s67
      %p69 = scmp.eq.s32.totalorder %s22, 0
      %p70 = por %p68, %p69
      %s72 = sadd.s32 %s71, 1
      %p75 = scmp.eq.s32.totalorder %s16, 7
      %p76 = scmp.ne.s32.totalorder %s71, %s73
      %p77 = scmp.eq.s32.totalorder %s16, 0
      %p78 = por %p76, %p77
      %p79 = scmp.ne.s32.totalorder %s71, %s73
      %p80 = scmp.eq.s32.totalorder %s21, 7
      %p81 = por %p79, %p80
      %p82 = scmp.ne.s32.totalorder %s73, %s74
      %p83 = scmp.eq.s32.totalorder %s21, 0
      %p84 = por %p82, %p83
      %p85 = scmp.ne.s32.totalorder %s73, %s74
      %p86 = scmp.eq.s32.totalorder %s22, 7
      %p87 = por %p85, %p86
      %p89 = scmp.ne.s32.totalorder %s74, %s88
      %p90 = scmp.eq.s32.totalorder %s22, 0
      %p91 = por %p89, %p90
      %s92 = ssub.s32 %s16, %s23
      %p93 = scmp.eq.s32.totalorder %s92, 0
      %s95 = sadd.s32 %s94, 1
      %s96 = scalar_select %p93, %s94, %s95
      %p99 = pneg %p93
      %p100 = scmp.eq.s32.totalorder %s16, 7
      %p101 = por %p99, %p100
      %p102 = scmp.ne.s32.totalorder %s94, %s97
      %p103 = scmp.eq.s32.totalorder %s16, 0
      %p104 = por %p102, %p103
      %p105 = scmp.ne.s32.totalorder %s94, %s97
      %p106 = scmp.eq.s32.totalorder %s21, 7
      %p107 = por %p105, %p106
      %p108 = scmp.ne.s32.totalorder %s97, %s98
      %p109 = scmp.eq.s32.totalorder %s21, 0
      %p110 = por %p108, %p109
      %p111 = scmp.ne.s32.totalorder %s97, %s98
      %p112 = scmp.eq.s32.totalorder %s22, 7
      %p113 = por %p111, %p112
      %p115 = scmp.ne.s32.totalorder %s98, %s114
      %p116 = scmp.eq.s32.totalorder %s22, 0
      %p117 = por %p115, %p116
      %s119 = sadd.s32 %s118, 1
      %p122 = scmp.eq.s32.totalorder %s16, 7
      %p123 = scmp.ne.s32.totalorder %s118, %s120
      %p124 = scmp.eq.s32.totalorder %s16, 0
      %p125 = por %p123, %p124
      %p126 = scmp.ne.s32.totalorder %s118, %s120
      %p127 = scmp.eq.s32.totalorder %s21, 7
      %p128 = por %p126, %p127
      %p129 = scmp.ne.s32.totalorder %s120, %s121
      %p130 = scmp.eq.s32.totalorder %s21, 0
      %p131 = por %p129, %p130
      %p132 = scmp.ne.s32.totalorder %s120, %s121
      %p133 = scmp.eq.s32.totalorder %s22, 7
      %p134 = por %p132, %p133
      %p136 = scmp.ne.s32.totalorder %s121, %s135
      %p137 = scmp.eq.s32.totalorder %s22, 0
      %p138 = por %p136, %p137
      %s140 = sadd.s32 %s139, 1
      %p143 = scmp.eq.s32.totalorder %s16, 7
      %p144 = scmp.ne.s32.totalorder %s139, %s141
      %p145 = scmp.eq.s32.totalorder %s16, 0
      %p146 = por %p144, %p145
      %p147 = scmp.ne.s32.totalorder %s139, %s141
      %p148 = scmp.eq.s32.totalorder %s21, 7
      %p149 = por %p147, %p148
      %p150 = scmp.ne.s32.totalorder %s141, %s142
      %p151 = scmp.eq.s32.totalorder %s21, 0
      %p152 = por %p150, %p151
      %p153 = scmp.ne.s32.totalorder %s141, %s142
      %p154 = scmp.eq.s32.totalorder %s22, 7
      %p155 = por %p153, %p154
      %p157 = scmp.ne.s32.totalorder %s142, %s156
      %p158 = scmp.eq.s32.totalorder %s22, 0
      %p159 = por %p157, %p158
      %p160 = scmp.le.s32.totalorder 1, %s16
      %p161 = scmp.lt.s32.totalorder %s16, 9
      %p162 = pnand %p160, %p161
      %p163 = pneg %p162
      // Predicated region
      $region9: #{model_forward.16} parent=5 // pred_check
        _
      $region10: #{model_forward.16} parent=5 // pred_check_branch
        %165 = sbr.rel (%p162) target = $region12
      $region11: #{model_forward.16} parent=5 // pred_region
        %s166 = ssub.s32 %s16, 1
        // Predicated region
        $region13: #{model_forward.16} parent=11 // pred_check
          %p167 = pneg %p63
        $region14: #{model_forward.16} parent=11 // pred_check_branch
          %169 = sbr.rel (%p167) target = $region16
        $region15: #{model_forward.16} parent=11 // pred_region
          _
        $region16: #{model_forward.16} parent=11 // pred_fallthru
          _
        // Predicated region
        $region17: #{model_forward.16} parent=11 // pred_check
          %p170 = pneg %p84
        $region18: #{model_forward.16} parent=11 // pred_check_branch
          %172 = sbr.rel (%p170) target = $region20
        $region19: #{model_forward.16} parent=11 // pred_region
          _
        $region20: #{model_forward.16} parent=11 // pred_fallthru
          _
      $region12: #{model_forward.16} parent=5 // pred_fallthru
        _
      %p173 = scmp.lt.s32.totalorder %s16, 8
      // Predicated region
      $region21: #{model_forward.16} parent=5 // pred_check
        %p174 = pneg %p173
      $region22: #{model_forward.16} parent=5 // pred_check_branch
        %176 = sbr.rel (%p174) target = $region24
      $region23: #{model_forward.16} parent=5 // pred_region
        // Predicated region
        $region25: #{model_forward.16} parent=23 // pred_check
          %p177 = pneg %p36
        $region26: #{model_forward.16} parent=23 // pred_check_branch
          %179 = sbr.rel (%p177) target = $region28
        $region27: #{model_forward.16} parent=23 // pred_region
          %p180 = scmp.lt.s32.totalorder %s16, 7
          %s181 = scalar_select %p180, %s16, 7
          %s182 = smul.addr %s181, 2
          %s183 = scalar_lea.vmem %s0, %s182
        $region28: #{model_forward.16} parent=23 // pred_fallthru
          _
      $region24: #{model_forward.16} parent=5 // pred_fallthru
        _
      %p184 = scmp.le.s32.totalorder 1, %s16
      %p185 = scmp.lt.s32.totalorder %s16, 9
      %p186 = pnand %p184, %p185
      %p187 = pneg %p186
      // Predicated region
      $region29: #{model_forward.16} parent=5 // pred_check
        _
      $region30: #{model_forward.16} parent=5 // pred_check_branch
        %189 = sbr.rel (%p186) target = $region32
      $region31: #{model_forward.16} parent=5 // pred_region
        %s190 = ssub.s32 %s16, 1
        %p191 = scmp.lt.s32.totalorder %s21, 7
        %s192 = scalar_select %p191, %s21, 7
        %s193 = smul.addr %s192, 2
        %s194 = scalar_lea.vmem %s0, %s193
        %p195 = pneg %p42
        %p196 = pneg %p39
        %p197 = pneg %p63
        %p198 = pneg %p60
        %p199 = pneg %p84
        %p200 = pneg %p81
        %p201 = pneg %p110
        %p202 = pneg %p107
        %s203 = sand.u32 %s97, 1
        %s204 = scalar_lea.sflag [#allocation3], %s203
        %s205 = sand.u32 %s97, 1
        %s206 = smul.addr %s205, 2
        %s207 = scalar_lea.vmem [#allocation2], %s206
        %p208 = pneg %p131
        %p209 = pneg %p128
        %p210 = pneg %p152
        %p211 = pneg %p149
        %p212 = scmp.lt.s32.totalorder %s21, 7
        %s213 = scalar_select %p212, %s21, 7
        %s214 = smul.addr %s213, 2
        %s215 = scalar_lea.vmem %s0, %s214
        %p216 = scmp.eq.s32.totalorder %s21, 0
        // Predicated region
        $region33: #{model_forward.16} parent=31 // pred_check
          %p217 = pneg %p216
        $region34: #{model_forward.16} parent=31 // pred_check_branch
          %219 = sbr.rel (%p217) target = $region36
        $region35: #{model_forward.16} parent=31 // pred_region
          %vm220 = vcmask 58368
          %221 = vst.msk [vmem:[#allocation4] sm:$0x3] %vm220, 0.0
          %222 = vst.msk [vmem:[%s5] sm:$0x3] %vm220, 0.0
        $region36: #{model_forward.16} parent=31 // pred_fallthru
          _
        %v223 = vld [vmem:[#allocation4] sm:$0x3]
        %v224 = vld [vmem:[%s5] sm:$0x3]
        %v225 = vld [vmem:[%s215] sm:$0x3]
        %v226 = vld [vmem:[%s2] sm:$0xff]
        %vm227 = vcmask 64512
        %v229 = vsel %vm227, %v223, 0
        %231 = vmatprep.subr.mxu0 0.0
        %232 = vmatpush1.msra.mxu0 %v226
        %233 = vmatprep.subr.mxu0 0.0
        %234 = vmatpush1.msra.mxu0 0.0
        %235 = vmatprep.subr.mxu0 0.0
        %236 = vmatpush1.msra.mxu0 0.0
        %237 = vmatprep.subr.mxu0 0.0
        %238 = vmatpush1.msra.mxu0 0.0
        %239 = vmatprep.subr.mxu0 0.0
        %240 = vmatpush1.msra.mxu0 0.0
        %241 = vmatprep.subr.mxu0 0.0
        %242 = vmatpush1.msra.mxu0 0.0
        %243 = vmatprep.subr.mxu0 0.0
        %244 = vmatpush1.msra.mxu0 0.0
        %245 = vmatprep.subr.mxu0 0.0
        %246 = vmatpush1.msra.mxu0 0.0
        %247 = vmatprep.subr.mxu0 0.0
        %248 = vmatpush1.msra.mxu0 0.0
        %249 = vmatprep.subr.mxu0 0.0
        %250 = vmatpush1.msra.mxu0 0.0
        %251 = vmatprep.subr.mxu0 0.0
        %252 = vmatpush1.msra.mxu0 0.0
        %253 = vmatprep.subr.mxu0 0.0
        %254 = vmatpush1.msra.mxu0 0.0
        %255 = vmatprep.subr.mxu0 0.0
        %256 = vmatpush1.msra.mxu0 0.0
        %257 = vmatprep.subr.mxu0 0.0
        %258 = vmatpush1.msra.mxu0 0.0
        %259 = vmatprep.subr.mxu0 0.0
        %260 = vmatpush1.msra.mxu0 0.0
        %261 = vmatprep.subr.mxu0 0.0
        %262 = vmatpush1.msra.mxu0 0.0
        %263 = vmatprep.subr.mxu0 0.0
        %264 = vmatpush1.msra.mxu0 0.0
        %265 = vmatprep.subr.mxu0 0.0
        %266 = vmatpush1.msra.mxu0 0.0
        %267 = vmatprep.subr.mxu0 0.0
        %268 = vmatpush1.msra.mxu0 0.0
        %269 = vmatprep.subr.mxu0 0.0
        %270 = vmatpush1.msra.mxu0 0.0
        %271 = vmatprep.subr.mxu0 0.0
        %272 = vmatpush1.msra.mxu0 0.0
        %273 = vmatprep.subr.mxu0 0.0
        %274 = vmatpush1.msra.mxu0 0.0
        %275 = vmatprep.subr.mxu0 0.0
        %276 = vmatpush1.msra.mxu0 0.0
        %277 = vmatprep.subr.mxu0 0.0
        %278 = vmatpush1.msra.mxu0 0.0
        %279 = vmatprep.subr.mxu0 0.0
        %280 = vmatpush1.msra.mxu0 0.0
        %281 = vmatprep.subr.mxu0 0.0
        %282 = vmatpush1.msra.mxu0 0.0
        %283 = vmatprep.subr.mxu0 0.0
        %284 = vmatpush1.msra.mxu0 0.0
        %285 = vmatprep.subr.mxu0 0.0
        %286 = vmatpush1.msra.mxu0 0.0
        %287 = vmatprep.subr.mxu0 0.0
        %288 = vmatpush1.msra.mxu0 0.0
        %289 = vmatprep.subr.mxu0 0.0
        %290 = vmatpush1.msra.mxu0 0.0
        %291 = vmatprep.subr.mxu0 0.0
        %292 = vmatpush1.msra.mxu0 0.0
        %293 = vmatprep.subr.mxu0 0.0
        %294 = vmatpush1.msra.mxu0 0.0
        %295 = vmatprep.mubr.f32.mxu0 0.0
        %296 = vmatmul.mubr.f32.gmra.mrb[0].mxu0 %v229
        %v297 = vpop.f32.mrb[0].mxu0
        %v298 = vadd.f32 0.0, %v297
        %v299 = vpop.f32.mrb[0].mxu0
        %300 = vdwg.mxu0
        %v301 = vadd.f32 %v225, %v298
        %v302 = vxor.u32 %v301, 2147483648
        %v303 = vmul.f32 %v302, 1.442695
        %v304 = vpow.pop %v303
        %v305 = vadd.f32 %v304, 1.0
        %v306 = vrcp.pop %v305
        %v307 = vmul.f32 1.0, %v306
        %v308 = vtanh.pop %v301
        %310 = vrot.lane.b32.xlu0 %v224, 8
        %v311 = vpop.permute.xlu0 %310
        %v313 = vmul.f32 %v307, %v311
        %315 = vrot.lane.b32.xlu0 %v308, 112
        %v316 = vpop.permute.xlu0 %315
        %v318 = vmul.f32 %v307, %v316
        %320 = vrot.lane.b32.xlu0 %v318, 8
        %v321 = vpop.permute.xlu0 %320
        %v323 = vadd.f32 %v313, %v321
        %v324 = vtanh.pop %v323
        %326 = vrot.lane.b32.xlu0 %v324, 16
        %v327 = vpop.permute.xlu0 %326
        %v329 = vmul.f32 %v307, %v327
        %v330 = vlaneseq
        %v331 = vand.u32 %v330, 127
        %v332 = vstv %s21
        %vm333 = vcmp.eq.s32.totalorder %v331, %v332
        %v334 = vld [vmem:[%s1] sm:$0x3]
        %v335 = vsel %vm333, %v334, 0.0
        %vm336 = vcmask 58368
        %v337 = vsel %vm336, %v335, 0.0
        %338 = vadd.xlane.f32.xlu0 %v337
        %v339 = vpop.xlane.xlu0 %338
        %vm340 = vcmp.gt.f32.partialorder %v339, 0.0
        %v341 = vsel %vm340, 1, 0
        %vm342 = vcmp.eq.s32.totalorder %v341, 1
        %343 = vrot.lane.b32.xlu0 %v223, 24
        %v344 = vpop.permute.xlu0 %343
        %v346 = vsel %vm342, %v329, %v344
        %v347 = vsel %vm342, %v323, %v311
        %349 = vrot.lane.b32.xlu0 %v346, 104
        %v350 = vpop.permute.xlu0 %349
        %352 = vst.msk [vmem:[#allocation4] sm:$0x3] %vm336, %v350
        %354 = vrot.lane.b32.xlu0 %v347, 120
        %v355 = vpop.permute.xlu0 %354
        %357 = vst.msk [vmem:[%s5] sm:$0x3] %vm336, %v355
        %v358 = vmul.f32 %v346, %v339
        %360 = vrot.lane.b32.xlu0 %v358, 104
        %v361 = vpop.permute.xlu0 %360
        %363 = vst.msk [vmem:[%s207] sm:$0x3] %vm336, %v361
        %s364 = sand.u32 %s97, 1
        %s365 = scalar_lea.sflag [#allocation3], %s364
        %s366 = sand.u32 %s97, 1
        %s367 = smul.addr %s366, 2
        %s368 = scalar_lea.vmem [#allocation2], %s367
        // Predicated region
        $region37: #{model_forward.16} parent=31 // pred_check
          %p369 = pneg %p107
        $region38: #{model_forward.16} parent=31 // pred_check_branch
          %371 = sbr.rel (%p369) target = $region40
        $region39: #{model_forward.16} parent=31 // pred_region
          %s373 = ssub.s32 32, 32
          %374 = vsyncadd %s365, %s373
          %s375 = smul.addr %s21, 32
          %s376 = scalar_lea.hbm %s3, %s375
          %s378 = sshll.u32 %s368, 4
          %s379 = int_to_ptr.vmem [resolvable:$true] %s378
          %381 = dma.vmem_to_hbm [thread:$0]  %s379, 32, %s376, %s365
        $region40: #{model_forward.16} parent=31 // pred_fallthru
          _
        // Predicated region
        $region41: #{model_forward.16} parent=31 // pred_check
          %p382 = pneg %p128
        $region42: #{model_forward.16} parent=31 // pred_check_branch
          %384 = sbr.rel (%p382) target = $region44
        $region43: #{model_forward.16} parent=31 // pred_region
          %s386 = ssub.s32 32, 32
          %387 = vsyncadd [#allocation5], %s386
          %s389 = sshll.u32 [#allocation4], 4
          %s390 = int_to_ptr.vmem [resolvable:$true] %s389
          %392 = dma.vmem_to_hbm [thread:$0]  %s390, 32, %s4, [#allocation5]
        $region44: #{model_forward.16} parent=31 // pred_fallthru
          _
        // Predicated region
        $region45: #{model_forward.16} parent=31 // pred_check
          %p393 = pneg %p149
        $region46: #{model_forward.16} parent=31 // pred_check_branch
          %395 = sbr.rel (%p393) target = $region48
        $region47: #{model_forward.16} parent=31 // pred_region
          _
        $region48: #{model_forward.16} parent=31 // pred_fallthru
          _
        // Predicated region
        $region49: #{model_forward.16} parent=31 // pred_check
          %p396 = pneg %p128
        $region50: #{model_forward.16} parent=31 // pred_check_branch
          %398 = sbr.rel (%p396) target = $region52
        $region51: #{model_forward.16} parent=31 // pred_region
          %399 = dma.done [#allocation5], 32
        $region52: #{model_forward.16} parent=31 // pred_fallthru
          _
        // Predicated region
        $region53: #{model_forward.16} parent=31 // pred_check
          %p400 = pneg %p149
        $region54: #{model_forward.16} parent=31 // pred_check_branch
          %402 = sbr.rel (%p400) target = $region56
        $region55: #{model_forward.16} parent=31 // pred_region
          _
        $region56: #{model_forward.16} parent=31 // pred_fallthru
          _
      $region32: #{model_forward.16} parent=5 // pred_fallthru
        _
      %p403 = scmp.le.s32.totalorder 2, %s16
      // Predicated region
      $region57: #{model_forward.16} parent=5 // pred_check
        %p404 = pneg %p403
      $region58: #{model_forward.16} parent=5 // pred_check_branch
        %406 = sbr.rel (%p404) target = $region60
      $region59: #{model_forward.16} parent=5 // pred_region
        %s407 = ssub.s32 %s16, 2
        // Predicated region
        $region61: #{model_forward.16} parent=59 // pred_check
          %p408 = pneg %p113
        $region62: #{model_forward.16} parent=59 // pred_check_branch
          %410 = sbr.rel (%p408) target = $region64
        $region63: #{model_forward.16} parent=59 // pred_region
          %s411 = sand.u32 %s98, 1
          %s412 = scalar_lea.sflag [#allocation3], %s411
          %s413 = sand.u32 %s98, 1
          %s414 = smul.addr %s413, 2
          %s415 = scalar_lea.vmem [#allocation2], %s414
          %416 = dma.done %s412, 32
        $region64: #{model_forward.16} parent=59 // pred_fallthru
          _
      $region60: #{model_forward.16} parent=5 // pred_fallthru
        _
    $region6: #{model_forward.16} parent=1 // loop_footer
      %s20 = sadd.s32 1, %s16
    $region7: #{model_forward.16} parent=1 // loop_footer_branch
      %15 = sbr.rel target = $region3
    $region8: #{model_forward.16} parent=1 // loop_exit
      _
    %417 = vsyncpa [#allocation3], 1
    %s418 = scalar_lea.sflag [#allocation3], 1
    %419 = vsyncpa %s418, 1
    %420 = vsyncpa [#allocation5], 1

// kernel: model_forward.18
$region0: #{model_forward.18}
  #allocation0 [shape = 'u32[]', space=smem, size = 0x4, offset = 0x4, fixed_abs, tag = 'smem constant byte address 0x4 - core index']
  #allocation1 [shape = 'u32[144,128]{1,0:T(1,128)}', space=vmem, size = 0x12000, scoped, tag = 'internal scratch']
  %s0 = inlined_call_operand.vmem [shape: f32[12,32], index: 0, kind: input, shape index: {}]
  %s1 = inlined_call_operand.vmem [shape: f32[32,16], index: 1, kind: input, shape index: {}]
  %s2 = inlined_call_operand.vmem [shape: f32[1,16], index: 2, kind: input, shape index: {}]
  %s3 = inlined_call_operand.vmem [shape: f32[12,16], index: 3, kind: output, shape index: {}]
  %s4 = sld [smem:[#allocation0]]
  $region22: #{model_forward.18} parent=0
    _
  %s6 = ssub.s32 1, %s4
  %s7 = scalar_select 0, %s6, %s4
  // Predicated region
  $region2: #{model_forward.18} parent=0 // pred_check
    _
  $region3: #{model_forward.18} parent=0 // pred_check_branch
    %9 = sbr.rel (0) target = $region5
  $region4: #{model_forward.18} parent=0 // pred_region
    _
  $region5: #{model_forward.18} parent=0 // pred_fallthru
    _
  // Predicated region
  $region6: #{model_forward.18} parent=0 // pred_check
    _
  $region7: #{model_forward.18} parent=0 // pred_check_branch
    %11 = sbr.rel (0) target = $region9
  $region8: #{model_forward.18} parent=0 // pred_region
    _
  $region9: #{model_forward.18} parent=0 // pred_fallthru
    _
  // Predicated region
  $region10: #{model_forward.18} parent=0 // pred_check
    _
  $region11: #{model_forward.18} parent=0 // pred_check_branch
    %13 = sbr.rel (0) target = $region13
  $region12: #{model_forward.18} parent=0 // pred_region
    _
  $region13: #{model_forward.18} parent=0 // pred_fallthru
    _
  %v14 = vld [vmem:[%s0] sm:$0xff]
  %v15 = vld [vmem:[%s0 + $0x8] sm:$0xf]
  %v16 = vld [vmem:[%s1] sm:$0xff]
  %v17 = vld [vmem:[%s1 + $0x8] sm:$0xff]
  %v18 = vld [vmem:[%s1 + $0x10] sm:$0xff]
  %v19 = vld [vmem:[%s1 + $0x18] sm:$0xff]
  %v20 = vld [vmem:[%s2] sm:$0x1]
  %v22 = vlaneseq
  %v23 = vshrl.u32 %v22, 7
  %v24 = vsub.s32 0, %v23
  %v25 = vrot.slane %v20, %v24
  %vm27 = vcmask 261120
  %v29 = vsel %vm27, %v14, 0
  %v32 = vsel %vm27, %v15, 0
  %34 = vmatprep.subr.mxu0 0.0
  %35 = vmatpush1.msra.mxu0 %v16
  %36 = vmatprep.subr.mxu0 0.0
  %37 = vmatpush1.msra.mxu0 %v17
  %38 = vmatprep.subr.mxu0 0.0
  %39 = vmatpush1.msra.mxu0 %v18
  %40 = vmatprep.subr.mxu0 0.0
  %41 = vmatpush1.msra.mxu0 %v19
  %42 = vmatprep.subr.mxu0 0.0
  %43 = vmatpush1.msra.mxu0 0.0
  %44 = vmatprep.subr.mxu0 0.0
  %45 = vmatpush1.msra.mxu0 0.0
  %46 = vmatprep.subr.mxu0 0.0
  %47 = vmatpush1.msra.mxu0 0.0
  %48 = vmatprep.subr.mxu0 0.0
  %49 = vmatpush1.msra.mxu0 0.0
  %50 = vmatprep.subr.mxu0 0.0
  %51 = vmatpush1.msra.mxu0 0.0
  %52 = vmatprep.subr.mxu0 0.0
  %53 = vmatpush1.msra.mxu0 0.0
  %54 = vmatprep.subr.mxu0 0.0
  %55 = vmatpush1.msra.mxu0 0.0
  %56 = vmatprep.subr.mxu0 0.0
  %57 = vmatpush1.msra.mxu0 0.0
  %58 = vmatprep.subr.mxu0 0.0
  %59 = vmatpush1.msra.mxu0 0.0
  %60 = vmatprep.subr.mxu0 0.0
  %61 = vmatpush1.msra.mxu0 0.0
  %62 = vmatprep.subr.mxu0 0.0
  %63 = vmatpush1.msra.mxu0 0.0
  %64 = vmatprep.subr.mxu0 0.0
  %65 = vmatpush1.msra.mxu0 0.0
  %66 = vmatprep.subr.mxu0 0.0
  %67 = vmatpush1.msra.mxu0 0.0
  %68 = vmatprep.subr.mxu0 0.0
  %69 = vmatpush1.msra.mxu0 0.0
  %70 = vmatprep.subr.mxu0 0.0
  %71 = vmatpush1.msra.mxu0 0.0
  %72 = vmatprep.subr.mxu0 0.0
  %73 = vmatpush1.msra.mxu0 0.0
  %74 = vmatprep.subr.mxu0 0.0
  %75 = vmatpush1.msra.mxu0 0.0
  %76 = vmatprep.subr.mxu0 0.0
  %77 = vmatpush1.msra.mxu0 0.0
  %78 = vmatprep.subr.mxu0 0.0
  %79 = vmatpush1.msra.mxu0 0.0
  %80 = vmatprep.subr.mxu0 0.0
  %81 = vmatpush1.msra.mxu0 0.0
  %82 = vmatprep.subr.mxu0 0.0
  %83 = vmatpush1.msra.mxu0 0.0
  %84 = vmatprep.subr.mxu0 0.0
  %85 = vmatpush1.msra.mxu0 0.0
  %86 = vmatprep.subr.mxu0 0.0
  %87 = vmatpush1.msra.mxu0 0.0
  %88 = vmatprep.subr.mxu0 0.0
  %89 = vmatpush1.msra.mxu0 0.0
  %90 = vmatprep.subr.mxu0 0.0
  %91 = vmatpush1.msra.mxu0 0.0
  %92 = vmatprep.subr.mxu0 0.0
  %93 = vmatpush1.msra.mxu0 0.0
  %94 = vmatprep.subr.mxu0 0.0
  %95 = vmatpush1.msra.mxu0 0.0
  %96 = vmatprep.subr.mxu0 0.0
  %97 = vmatpush1.msra.mxu0 0.0
  %98 = vmatprep.mubr.f32.mxu0 0.0
  %99 = vmatmul.mubr.f32.gmra.mrb[0].mxu0 %v29
  %v100 = vpop.f32.mrb[0].mxu0
  %v101 = vadd.f32 %v25, %v100
  %v102 = vpop.f32.mrb[0].mxu0
  %103 = vmatprep.mubr.f32.mxu0 0.0
  %104 = vmatmul.mubr.f32.gmra.mrb[0].mxu0 %v32
  %v105 = vpop.f32.mrb[0].mxu0
  %v106 = vadd.f32 %v25, %v105
  %v107 = vpop.f32.mrb[0].mxu0
  %108 = vdwg.mxu0
  %v109 = vmax.f32 %v101, 0.0
  %v110 = vmax.f32 %v106, 0.0
  %vm111 = vcmask 130048
  %112 = vst.msk [vmem:[%s3] sm:$0xff] %vm111, %v109
  %vm113 = vcmask 125952
  %114 = vst.msk [vmem:[%s3 + $0x8] sm:$0xf] %vm113, %v110
  // Predicated region
  $region14: #{model_forward.18} parent=0 // pred_check
    _
  $region15: #{model_forward.18} parent=0 // pred_check_branch
    %116 = sbr.rel (0) target = $region17
  $region16: #{model_forward.18} parent=0 // pred_region
    _
  $region17: #{model_forward.18} parent=0 // pred_fallthru
    _
  // Predicated region
  $region18: #{model_forward.18} parent=0 // pred_check
    _
  $region19: #{model_forward.18} parent=0 // pred_check_branch
    %118 = sbr.rel (0) target = $region21
  $region20: #{model_forward.18} parent=0 // pred_region
    _
  $region21: #{model_forward.18} parent=0 // pred_fallthru
    _

// kernel: model_forward.19
$region0: #{model_forward.19}
  #allocation0 [shape = 'u32[]', space=smem, size = 0x4, offset = 0x4, fixed_abs, tag = 'smem constant byte address 0x4 - core index']
  #allocation1 [shape = 'u32[144,128]{1,0:T(1,128)}', space=vmem, size = 0x12000, scoped, tag = 'internal scratch']
  #allocation2 [shape = 'f32[1,1]{1,0:T(1,128)S(1)}', space=vmem, size = 0x200, scoped, tag = 'scoped memory for model_forward.19']
  %s0 = inlined_call_operand.vmem [shape: f32[2,6,16], index: 0, kind: input, shape index: {}]
  %s1 = inlined_call_operand.vmem [shape: f32[2,6,32], index: 1, kind: input, shape index: {}]
  %s2 = inlined_call_operand.vmem [shape: f32[2,16], index: 2, kind: input, shape index: {}]
  %s3 = inlined_call_operand.vmem [shape: s32[2,1], index: 3, kind: input, shape index: {}]
  %s4 = inlined_call_operand.vmem [shape: f32[16,16], index: 4, kind: input, shape index: {}]
  %s5 = inlined_call_operand.vmem [shape: f32[1,16], index: 5, kind: input, shape index: {}]
  %s6 = inlined_call_operand.vmem [shape: f32[1,16], index: 6, kind: input, shape index: {}]
  %s7 = inlined_call_operand.<no memory space> [shape: f32[1,1], index: 7, kind: input, shape index: {}]
  %s8 = inlined_call_operand.vmem [shape: f32[32,16], index: 8, kind: input, shape index: {}]
  %s9 = inlined_call_operand.vmem [shape: f32[1,16], index: 9, kind: input, shape index: {}]
  %s10 = inlined_call_operand.vmem [shape: f32[16,16], index: 10, kind: input, shape index: {}]
  %s11 = inlined_call_operand.vmem [shape: f32[1,16], index: 11, kind: input, shape index: {}]
  %s12 = inlined_call_operand.vmem [shape: f32[16,12], index: 12, kind: input, shape index: {}]
  %s13 = inlined_call_operand.vmem [shape: f32[1,12], index: 13, kind: input, shape index: {}]
  %s14 = inlined_call_operand.hbm [shape: f32[2,12], index: 14, kind: output, shape index: {}]
  %s15 = sld [smem:[#allocation0]]
  $region66: #{model_forward.19} parent=0
    _
  %s17 = ssub.s32 1, %s15
  %s18 = scalar_select 0, %s17, %s15
  %v19 = vstv %s7
  %20 = vst [vmem:[#allocation2] sm:$0x1] %v19
  $region1: #{model_forward.19} parent=0
    #allocation3 [shape = 'u8[1024]{0}', space=vmem, size = 0x400, scoped, tag = 'output window, operand 0, single buffered']
    #allocation4 [shape = 's32[1]{0}', space=sflag, size = 0x4, scoped, tag = 'scoped memory for model_forward.19']
    %21 = vsyncpa [#allocation4], 0
    // Predicated region
    $region2: #{model_forward.19} parent=1 // pred_check
      _
    $region3: #{model_forward.19} parent=1 // pred_check_branch
      %23 = sbr.rel (0) target = $region5
    $region4: #{model_forward.19} parent=1 // pred_region
      _
    $region5: #{model_forward.19} parent=1 // pred_fallthru
      _
    // Predicated region
    $region6: #{model_forward.19} parent=1 // pred_check
      _
    $region7: #{model_forward.19} parent=1 // pred_check_branch
      %25 = sbr.rel (0) target = $region9
    $region8: #{model_forward.19} parent=1 // pred_region
      _
    $region9: #{model_forward.19} parent=1 // pred_fallthru
      _
    // Predicated region
    $region10: #{model_forward.19} parent=1 // pred_check
      _
    $region11: #{model_forward.19} parent=1 // pred_check_branch
      %27 = sbr.rel (0) target = $region13
    $region12: #{model_forward.19} parent=1 // pred_region
      _
    $region13: #{model_forward.19} parent=1 // pred_fallthru
      _
    // Predicated region
    $region14: #{model_forward.19} parent=1 // pred_check
      _
    $region15: #{model_forward.19} parent=1 // pred_check_branch
      %29 = sbr.rel (0) target = $region17
    $region16: #{model_forward.19} parent=1 // pred_region
      _
    $region17: #{model_forward.19} parent=1 // pred_fallthru
      _
    // Predicated region
    $region18: #{model_forward.19} parent=1 // pred_check
      _
    $region19: #{model_forward.19} parent=1 // pred_check_branch
      %31 = sbr.rel (0) target = $region21
    $region20: #{model_forward.19} parent=1 // pred_region
      _
    $region21: #{model_forward.19} parent=1 // pred_fallthru
      _
    // Predicated region
    $region22: #{model_forward.19} parent=1 // pred_check
      _
    $region23: #{model_forward.19} parent=1 // pred_check_branch
      %33 = sbr.rel (0) target = $region25
    $region24: #{model_forward.19} parent=1 // pred_region
      _
    $region25: #{model_forward.19} parent=1 // pred_fallthru
      _
    // Predicated region
    $region26: #{model_forward.19} parent=1 // pred_check
      _
    $region27: #{model_forward.19} parent=1 // pred_check_branch
      %35 = sbr.rel (0) target = $region29
    $region28: #{model_forward.19} parent=1 // pred_region
      _
    $region29: #{model_forward.19} parent=1 // pred_fallthru
      _
    // Predicated region
    $region30: #{model_forward.19} parent=1 // pred_check
      _
    $region31: #{model_forward.19} parent=1 // pred_check_branch
      %37 = sbr.rel (0) target = $region33
    $region32: #{model_forward.19} parent=1 // pred_region
      _
    $region33: #{model_forward.19} parent=1 // pred_fallthru
      _
    // Predicated region
    $region34: #{model_forward.19} parent=1 // pred_check
      _
    $region35: #{model_forward.19} parent=1 // pred_check_branch
      %39 = sbr.rel (0) target = $region37
    $region36: #{model_forward.19} parent=1 // pred_region
      _
    $region37: #{model_forward.19} parent=1 // pred_fallthru
      _
    // Predicated region
    $region38: #{model_forward.19} parent=1 // pred_check
      _
    $region39: #{model_forward.19} parent=1 // pred_check_branch
      %41 = sbr.rel (0) target = $region41
    $region40: #{model_forward.19} parent=1 // pred_region
      _
    $region41: #{model_forward.19} parent=1 // pred_fallthru
      _
    // Predicated region
    $region42: #{model_forward.19} parent=1 // pred_check
      _
    $region43: #{model_forward.19} parent=1 // pred_check_branch
      %43 = sbr.rel (0) target = $region45
    $region44: #{model_forward.19} parent=1 // pred_region
      _
    $region45: #{model_forward.19} parent=1 // pred_fallthru
      _
    // Predicated region
    $region46: #{model_forward.19} parent=1 // pred_check
      _
    $region47: #{model_forward.19} parent=1 // pred_check_branch
      %45 = sbr.rel (0) target = $region49
    $region48: #{model_forward.19} parent=1 // pred_region
      _
    $region49: #{model_forward.19} parent=1 // pred_fallthru
      _
    // Predicated region
    $region50: #{model_forward.19} parent=1 // pred_check
      _
    $region51: #{model_forward.19} parent=1 // pred_check_branch
      %47 = sbr.rel (0) target = $region53
    $region52: #{model_forward.19} parent=1 // pred_region
      _
    $region53: #{model_forward.19} parent=1 // pred_fallthru
      _
    // Predicated region
    $region54: #{model_forward.19} parent=1 // pred_check
      _
    $region55: #{model_forward.19} parent=1 // pred_check_branch
      %49 = sbr.rel (0) target = $region57
    $region56: #{model_forward.19} parent=1 // pred_region
      _
    $region57: #{model_forward.19} parent=1 // pred_fallthru
      _
    %v50 = vld [vmem:[%s0] sm:$0x3f]
    %v51 = vld [vmem:[%s0 + $0x8] sm:$0x3f]
    %v52 = vld [vmem:[%s1] sm:$0x3f]
    %v53 = vld [vmem:[%s1 + $0x8] sm:$0x3f]
    %v54 = vld [vmem:[%s2] sm:$0x3]
    %v55 = vld [vmem:[%s4] sm:$0xff]
    %v56 = vld [vmem:[%s4 + $0x8] sm:$0xff]
    %v57 = vld [vmem:[%s5] sm:$0x1]
    %v59 = vlaneseq
    %v60 = vshrl.u32 %v59, 7
    %v61 = vsub.s32 0, %v60
    %v62 = vrot.slane %v57, %v61
    %vm64 = vcmask 130048
    %v66 = vsel %vm64, %v54, 0
    %68 = vmatprep.subr.mxu0 0.0
    %69 = vmatpush1.msra.mxu0 %v55
    %70 = vmatprep.subr.mxu0 0.0
    %71 = vmatpush1.msra.mxu0 %v56
    %72 = vmatprep.subr.mxu0 0.0
    %73 = vmatpush1.msra.mxu0 0.0
    %74 = vmatprep.subr.mxu0 0.0
    %75 = vmatpush1.msra.mxu0 0.0
    %76 = vmatprep.subr.mxu0 0.0
    %77 = vmatpush1.msra.mxu0 0.0
    %78 = vmatprep.subr.mxu0 0.0
    %79 = vmatpush1.msra.mxu0 0.0
    %80 = vmatprep.subr.mxu0 0.0
    %81 = vmatpush1.msra.mxu0 0.0
    %82 = vmatprep.subr.mxu0 0.0
    %83 = vmatpush1.msra.mxu0 0.0
    %84 = vmatprep.subr.mxu0 0.0
    %85 = vmatpush1.msra.mxu0 0.0
    %86 = vmatprep.subr.mxu0 0.0
    %87 = vmatpush1.msra.mxu0 0.0
    %88 = vmatprep.subr.mxu0 0.0
    %89 = vmatpush1.msra.mxu0 0.0
    %90 = vmatprep.subr.mxu0 0.0
    %91 = vmatpush1.msra.mxu0 0.0
    %92 = vmatprep.subr.mxu0 0.0
    %93 = vmatpush1.msra.mxu0 0.0
    %94 = vmatprep.subr.mxu0 0.0
    %95 = vmatpush1.msra.mxu0 0.0
    %96 = vmatprep.subr.mxu0 0.0
    %97 = vmatpush1.msra.mxu0 0.0
    %98 = vmatprep.subr.mxu0 0.0
    %99 = vmatpush1.msra.mxu0 0.0
    %100 = vmatprep.subr.mxu0 0.0
    %101 = vmatpush1.msra.mxu0 0.0
    %102 = vmatprep.subr.mxu0 0.0
    %103 = vmatpush1.msra.mxu0 0.0
    %104 = vmatprep.subr.mxu0 0.0
    %105 = vmatpush1.msra.mxu0 0.0
    %106 = vmatprep.subr.mxu0 0.0
    %107 = vmatpush1.msra.mxu0 0.0
    %108 = vmatprep.subr.mxu0 0.0
    %109 = vmatpush1.msra.mxu0 0.0
    %110 = vmatprep.subr.mxu0 0.0
    %111 = vmatpush1.msra.mxu0 0.0
    %112 = vmatprep.subr.mxu0 0.0
    %113 = vmatpush1.msra.mxu0 0.0
    %114 = vmatprep.subr.mxu0 0.0
    %115 = vmatpush1.msra.mxu0 0.0
    %116 = vmatprep.subr.mxu0 0.0
    %117 = vmatpush1.msra.mxu0 0.0
    %118 = vmatprep.subr.mxu0 0.0
    %119 = vmatpush1.msra.mxu0 0.0
    %120 = vmatprep.subr.mxu0 0.0
    %121 = vmatpush1.msra.mxu0 0.0
    %122 = vmatprep.subr.mxu0 0.0
    %123 = vmatpush1.msra.mxu0 0.0
    %124 = vmatprep.subr.mxu0 0.0
    %125 = vmatpush1.msra.mxu0 0.0
    %126 = vmatprep.subr.mxu0 0.0
    %127 = vmatpush1.msra.mxu0 0.0
    %128 = vmatprep.subr.mxu0 0.0
    %129 = vmatpush1.msra.mxu0 0.0
    %130 = vmatprep.subr.mxu0 0.0
    %131 = vmatpush1.msra.mxu0 0.0
    %132 = vmatprep.mubr.f32.mxu0 0.0
    %133 = vmatmul.mubr.f32.gmra.mrb[0].mxu0 %v66
    %v134 = vpop.f32.mrb[0].mxu0
    %v135 = vadd.f32 %v62, %v134
    %v136 = vpop.f32.mrb[0].mxu0
    %137 = vdwg.mxu0
    %v138 = vmax.f32 %v135, 0.0
    %v139 = vld [vmem:[%s6] sm:$0x1]
    %v141 = vlaneseq
    %v142 = vshrl.u32 %v141, 7
    %v143 = vsub.s32 0, %v142
    %v144 = vrot.slane %v139, %v143
    %v146 = vmul.f32 %v138, %v144
    %v149 = vunpack.c.l.s4 1966171168
    %v150 = vunpack.c.0.s8 %v149
    %v151 = vlaneseq
    %v152 = vshrl.u32 %v151, 7
    %v153 = vsub.s32 %v150, %v152
    %v154 = vrot.slane %v146, %v153
    %v155 = vcombine.high %v154, %v154
    %v157 = vunpack.c.l.s4 1966171168
    %v158 = vunpack.c.0.s8 %v157
    %v159 = vlaneseq
    %v160 = vshrl.u32 %v159, 7
    %v161 = vsub.s32 %v158, %v160
    %v162 = vrot.slane %v154, %v161
    %v164 = vunpack.c.l.s4 1966171168
    %v165 = vunpack.c.0.s8 %v164
    %v166 = vlaneseq
    %v167 = vshrl.u32 %v166, 7
    %v168 = vsub.s32 %v165, %v167
    %v169 = vrot.slane %v155, %v168
    %v170 = vlaneseq
    %v171 = vshrl.u32 %v170, 7
    %v172 = vsub.s32 0, %v171
    %v173 = vrot.slane %v162, %v172
    %v174 = vlaneseq
    %v175 = vshrl.u32 %v174, 7
    %v176 = vsub.s32 0, %v175
    %v177 = vrot.slane %v169, %v176
    %v180 = vmul.f32 %v50, %v173
    %v181 = vmul.f32 %v51, %v177
    %vm182 = vcmask 128000
    %v183 = vsel %vm182, %v180, 0.0
    %184 = vadd.xlane.f32.xlu0 %v183
    %v185 = vpop.xlane.xlu0 %184
    %v186 = vsel %vm182, %v181, 0.0
    %187 = vadd.xlane.f32.xlu0 %v186
    %v188 = vpop.xlane.xlu0 %187
    %v189 = vld [vmem:[#allocation2] sm:$0x1]
    %v191 = vlaneseq
    %v192 = vshrl.u32 %v191, 7
    %v193 = vsub.s32 0, %v192
    %v194 = vrot.slane %v189, %v193
    %195 = vset.pattern.permute.xlu0 0
    %196 = vperm.xlu0 %195, %v194
    %v197 = vpop.permute.xlu0 %196
    %v199 = vadd.f32 %v185, %v197
    %v200 = vadd.f32 %v188, %v197
    %v201 = vld [vmem:[%s3] sm:$0x3]
    %v202 = vlaneseq
    %v203 = vand.u32 %v202, 127
    %204 = vset.pattern.permute.xlu0 0
    %205 = vperm.xlu0 %204, %v201
    %v206 = vpop.permute.xlu0 %205
    %vm207 = vcmp.lt.s32.totalorder %v203, %v206
    %v210 = vlaneseq
    %v211 = vshrl.u32 %v210, 7
    %v212 = vsub.s32 %v203, %v211
    %v213 = vrot.slane %v199, %v212
    %v214 = vlaneseq
    %v215 = vshrl.u32 %v214, 7
    %v216 = vsub.s32 %v203, %v215
    %v217 = vrot.slane %v200, %v216
    %vm218 = vcmask 1041409
    %v219 = vsel %vm218, %v217, %v213
    %v221 = vsel %vm207, %v219, -1e+30
    %vm222 = vcmask 41984
    %v223 = vsel %vm222, %v221, -inf
    %224 = vmax.xlane.f32.xlu0 %v223
    %v225 = vpop.xlane.xlu0 %224
    %v226 = vsub.f32 %v221, %v225
    %v227 = vmul.f32 %v226, 1.442695
    %v228 = vpow.pop %v227
    %v229 = vsel %vm222, %v228, 0.0
    %230 = vadd.xlane.f32.xlu0 %v229
    %v231 = vpop.xlane.xlu0 %230
    %v232 = vrcp.pop %v231
    %v233 = vmul.f32 %v228, %v232
    %v234 = vlaneseq
    %v235 = vshrl.u32 %v234, 7
    %v236 = vsub.s32 0, %v235
    %v237 = vrot.slane %v233, %v236
    %239 = vbcast.lane.b32.xlu0 %v237, 256
    %v240 = vpop.permute.xlu0 %239
    %v241 = vlaneseq
    %v242 = vshrl.u32 %v241, 7
    %v243 = vsub.s32 1, %v242
    %v244 = vrot.slane %v233, %v243
    %246 = vbcast.lane.b32.xlu0 %v244, 256
    %v247 = vpop.permute.xlu0 %246
    %v248 = vmul.f32 %v240, %v52
    %v249 = vmul.f32 %v247, %v53
    %vm250 = vcmask 259072
    %v251 = vsel %vm250, %v248, 0.0
    %v252 = vrot.slane %v251, 4
    %v253 = vadd.f32 %v251, %v252
    %v254 = vrot.slane %v253, 2
    %v255 = vadd.f32 %v253, %v254
    %v256 = vrot.slane %v255, 1
    %v257 = vadd.f32 %v255, %v256
    %v258 = vsel %vm250, %v249, 0.0
    %v259 = vrot.slane %v258, 4
    %v260 = vadd.f32 %v258, %v259
    %v261 = vrot.slane %v260, 2
    %v262 = vadd.f32 %v260, %v261
    %v263 = vrot.slane %v262, 1
    %v264 = vadd.f32 %v262, %v263
    %v265 = vld [vmem:[%s8] sm:$0xff]
    %v266 = vld [vmem:[%s8 + $0x8] sm:$0xff]
    %v267 = vld [vmem:[%s8 + $0x10] sm:$0xff]
    %v268 = vld [vmem:[%s8 + $0x18] sm:$0xff]
    %v269 = vld [vmem:[%s9] sm:$0x1]
    %v271 = vlaneseq
    %v272 = vshrl.u32 %v271, 7
    %v273 = vsub.s32 0, %v272
    %v274 = vrot.slane %v269, %v273
    %v278 = vsel %vm218, %v264, %v257
    %vm279 = vcmask 261120
    %v280 = vsel %vm279, %v278, 0
    %282 = vmatprep.subr.mxu0 0.0
    %283 = vmatpush1.msra.mxu0 %v265
    %284 = vmatprep.subr.mxu0 0.0
    %285 = vmatpush1.msra.mxu0 %v266
    %286 = vmatprep.subr.mxu0 0.0
    %287 = vmatpush1.msra.mxu0 %v267
    %288 = vmatprep.subr.mxu0 0.0
    %289 = vmatpush1.msra.mxu0 %v268
    %290 = vmatprep.subr.mxu0 0.0
    %291 = vmatpush1.msra.mxu0 0.0
    %292 = vmatprep.subr.mxu0 0.0
    %293 = vmatpush1.msra.mxu0 0.0
    %294 = vmatprep.subr.mxu0 0.0
    %295 = vmatpush1.msra.mxu0 0.0
    %296 = vmatprep.subr.mxu0 0.0
    %297 = vmatpush1.msra.mxu0 0.0
    %298 = vmatprep.subr.mxu0 0.0
    %299 = vmatpush1.msra.mxu0 0.0
    %300 = vmatprep.subr.mxu0 0.0
    %301 = vmatpush1.msra.mxu0 0.0
    %302 = vmatprep.subr.mxu0 0.0
    %303 = vmatpush1.msra.mxu0 0.0
    %304 = vmatprep.subr.mxu0 0.0
    %305 = vmatpush1.msra.mxu0 0.0
    %306 = vmatprep.subr.mxu0 0.0
    %307 = vmatpush1.msra.mxu0 0.0
    %308 = vmatprep.subr.mxu0 0.0
    %309 = vmatpush1.msra.mxu0 0.0
    %310 = vmatprep.subr.mxu0 0.0
    %311 = vmatpush1.msra.mxu0 0.0
    %312 = vmatprep.subr.mxu0 0.0
    %313 = vmatpush1.msra.mxu0 0.0
    %314 = vmatprep.subr.mxu0 0.0
    %315 = vmatpush1.msra.mxu0 0.0
    %316 = vmatprep.subr.mxu0 0.0
    %317 = vmatpush1.msra.mxu0 0.0
    %318 = vmatprep.subr.mxu0 0.0
    %319 = vmatpush1.msra.mxu0 0.0
    %320 = vmatprep.subr.mxu0 0.0
    %321 = vmatpush1.msra.mxu0 0.0
    %322 = vmatprep.subr.mxu0 0.0
    %323 = vmatpush1.msra.mxu0 0.0
    %324 = vmatprep.subr.mxu0 0.0
    %325 = vmatpush1.msra.mxu0 0.0
    %326 = vmatprep.subr.mxu0 0.0
    %327 = vmatpush1.msra.mxu0 0.0
    %328 = vmatprep.subr.mxu0 0.0
    %329 = vmatpush1.msra.mxu0 0.0
    %330 = vmatprep.subr.mxu0 0.0
    %331 = vmatpush1.msra.mxu0 0.0
    %332 = vmatprep.subr.mxu0 0.0
    %333 = vmatpush1.msra.mxu0 0.0
    %334 = vmatprep.subr.mxu0 0.0
    %335 = vmatpush1.msra.mxu0 0.0
    %336 = vmatprep.subr.mxu0 0.0
    %337 = vmatpush1.msra.mxu0 0.0
    %338 = vmatprep.subr.mxu0 0.0
    %339 = vmatpush1.msra.mxu0 0.0
    %340 = vmatprep.subr.mxu0 0.0
    %341 = vmatpush1.msra.mxu0 0.0
    %342 = vmatprep.subr.mxu0 0.0
    %343 = vmatpush1.msra.mxu0 0.0
    %344 = vmatprep.subr.mxu0 0.0
    %345 = vmatpush1.msra.mxu0 0.0
    %346 = vmatprep.mubr.f32.mxu0 0.0
    %347 = vmatmul.mubr.f32.gmra.mrb[0].mxu0 %v280
    %v348 = vpop.f32.mrb[0].mxu0
    %v349 = vadd.f32 %v274, %v348
    %v350 = vpop.f32.mrb[0].mxu0
    %351 = vdwg.mxu0
    %v352 = vmax.f32 %v349, 0.0
    %v353 = vld [vmem:[%s10] sm:$0xff]
    %v354 = vld [vmem:[%s10 + $0x8] sm:$0xff]
    %v355 = vld [vmem:[%s11] sm:$0x1]
    %v357 = vlaneseq
    %v358 = vshrl.u32 %v357, 7
    %v359 = vsub.s32 0, %v358
    %v360 = vrot.slane %v355, %v359
    %362 = vmatprep.subr.mxu0 0.0
    %363 = vmatpush1.msra.mxu0 %v353
    %364 = vmatprep.subr.mxu0 0.0
    %365 = vmatpush1.msra.mxu0 %v354
    %366 = vmatprep.subr.mxu0 0.0
    %367 = vmatpush1.msra.mxu0 0.0
    %368 = vmatprep.subr.mxu0 0.0
    %369 = vmatpush1.msra.mxu0 0.0
    %370 = vmatprep.subr.mxu0 0.0
    %371 = vmatpush1.msra.mxu0 0.0
    %372 = vmatprep.subr.mxu0 0.0
    %373 = vmatpush1.msra.mxu0 0.0
    %374 = vmatprep.subr.mxu0 0.0
    %375 = vmatpush1.msra.mxu0 0.0
    %376 = vmatprep.subr.mxu0 0.0
    %377 = vmatpush1.msra.mxu0 0.0
    %378 = vmatprep.subr.mxu0 0.0
    %379 = vmatpush1.msra.mxu0 0.0
    %380 = vmatprep.subr.mxu0 0.0
    %381 = vmatpush1.msra.mxu0 0.0
    %382 = vmatprep.subr.mxu0 0.0
    %383 = vmatpush1.msra.mxu0 0.0
    %384 = vmatprep.subr.mxu0 0.0
    %385 = vmatpush1.msra.mxu0 0.0
    %386 = vmatprep.subr.mxu0 0.0
    %387 = vmatpush1.msra.mxu0 0.0
    %388 = vmatprep.subr.mxu0 0.0
    %389 = vmatpush1.msra.mxu0 0.0
    %390 = vmatprep.subr.mxu0 0.0
    %391 = vmatpush1.msra.mxu0 0.0
    %392 = vmatprep.subr.mxu0 0.0
    %393 = vmatpush1.msra.mxu0 0.0
    %394 = vmatprep.subr.mxu0 0.0
    %395 = vmatpush1.msra.mxu0 0.0
    %396 = vmatprep.subr.mxu0 0.0
    %397 = vmatpush1.msra.mxu0 0.0
    %398 = vmatprep.subr.mxu0 0.0
    %399 = vmatpush1.msra.mxu0 0.0
    %400 = vmatprep.subr.mxu0 0.0
    %401 = vmatpush1.msra.mxu0 0.0
    %402 = vmatprep.subr.mxu0 0.0
    %403 = vmatpush1.msra.mxu0 0.0
    %404 = vmatprep.subr.mxu0 0.0
    %405 = vmatpush1.msra.mxu0 0.0
    %406 = vmatprep.subr.mxu0 0.0
    %407 = vmatpush1.msra.mxu0 0.0
    %408 = vmatprep.subr.mxu0 0.0
    %409 = vmatpush1.msra.mxu0 0.0
    %410 = vmatprep.subr.mxu0 0.0
    %411 = vmatpush1.msra.mxu0 0.0
    %412 = vmatprep.subr.mxu0 0.0
    %413 = vmatpush1.msra.mxu0 0.0
    %414 = vmatprep.subr.mxu0 0.0
    %415 = vmatpush1.msra.mxu0 0.0
    %416 = vmatprep.subr.mxu0 0.0
    %417 = vmatpush1.msra.mxu0 0.0
    %418 = vmatprep.subr.mxu0 0.0
    %419 = vmatpush1.msra.mxu0 0.0
    %420 = vmatprep.subr.mxu0 0.0
    %421 = vmatpush1.msra.mxu0 0.0
    %422 = vmatprep.subr.mxu0 0.0
    %423 = vmatpush1.msra.mxu0 0.0
    %424 = vmatprep.subr.mxu0 0.0
    %425 = vmatpush1.msra.mxu0 0.0
    %426 = vmatprep.mubr.f32.mxu0 0.0
    %427 = vmatmul.mubr.f32.gmra.mrb[0].mxu0 %v66
    %v428 = vpop.f32.mrb[0].mxu0
    %v429 = vadd.f32 %v360, %v428
    %v430 = vpop.f32.mrb[0].mxu0
    %431 = vdwg.mxu0
    %v432 = vmax.f32 %v429, 0.0
    %v433 = vmul.f32 %v432, %v352
    %v434 = vld [vmem:[%s12] sm:$0xff]
    %v435 = vld [vmem:[%s12 + $0x8] sm:$0xff]
    %v436 = vld [vmem:[%s13] sm:$0x1]
    %v438 = vlaneseq
    %v439 = vshrl.u32 %v438, 7
    %v440 = vsub.s32 0, %v439
    %v441 = vrot.slane %v436, %v440
    %v444 = vsel %vm64, %v433, 0
    %446 = vmatprep.subr.mxu0 0.0
    %447 = vmatpush1.msra.mxu0 %v434
    %448 = vmatprep.subr.mxu0 0.0
    %449 = vmatpush1.msra.mxu0 %v435
    %450 = vmatprep.subr.mxu0 0.0
    %451 = vmatpush1.msra.mxu0 0.0
    %452 = vmatprep.subr.mxu0 0.0
    %453 = vmatpush1.msra.mxu0 0.0
    %454 = vmatprep.subr.mxu0 0.0
    %455 = vmatpush1.msra.mxu0 0.0
    %456 = vmatprep.subr.mxu0 0.0
    %457 = vmatpush1.msra.mxu0 0.0
    %458 = vmatprep.subr.mxu0 0.0
    %459 = vmatpush1.msra.mxu0 0.0
    %460 = vmatprep.subr.mxu0 0.0
    %461 = vmatpush1.msra.mxu0 0.0
    %462 = vmatprep.subr.mxu0 0.0
    %463 = vmatpush1.msra.mxu0 0.0
    %464 = vmatprep.subr.mxu0 0.0
    %465 = vmatpush1.msra.mxu0 0.0
    %466 = vmatprep.subr.mxu0 0.0
    %467 = vmatpush1.msra.mxu0 0.0
    %468 = vmatprep.subr.mxu0 0.0
    %469 = vmatpush1.msra.mxu0 0.0
    %470 = vmatprep.subr.mxu0 0.0
    %471 = vmatpush1.msra.mxu0 0.0
    %472 = vmatprep.subr.mxu0 0.0
    %473 = vmatpush1.msra.mxu0 0.0
    %474 = vmatprep.subr.mxu0 0.0
    %475 = vmatpush1.msra.mxu0 0.0
    %476 = vmatprep.subr.mxu0 0.0
    %477 = vmatpush1.msra.mxu0 0.0
    %478 = vmatprep.subr.mxu0 0.0
    %479 = vmatpush1.msra.mxu0 0.0
    %480 = vmatprep.subr.mxu0 0.0
    %481 = vmatpush1.msra.mxu0 0.0
    %482 = vmatprep.subr.mxu0 0.0
    %483 = vmatpush1.msra.mxu0 0.0
    %484 = vmatprep.subr.mxu0 0.0
    %485 = vmatpush1.msra.mxu0 0.0
    %486 = vmatprep.subr.mxu0 0.0
    %487 = vmatpush1.msra.mxu0 0.0
    %488 = vmatprep.subr.mxu0 0.0
    %489 = vmatpush1.msra.mxu0 0.0
    %490 = vmatprep.subr.mxu0 0.0
    %491 = vmatpush1.msra.mxu0 0.0
    %492 = vmatprep.subr.mxu0 0.0
    %493 = vmatpush1.msra.mxu0 0.0
    %494 = vmatprep.subr.mxu0 0.0
    %495 = vmatpush1.msra.mxu0 0.0
    %496 = vmatprep.subr.mxu0 0.0
    %497 = vmatpush1.msra.mxu0 0.0
    %498 = vmatprep.subr.mxu0 0.0
    %499 = vmatpush1.msra.mxu0 0.0
    %500 = vmatprep.subr.mxu0 0.0
    %501 = vmatpush1.msra.mxu0 0.0
    %502 = vmatprep.subr.mxu0 0.0
    %503 = vmatpush1.msra.mxu0 0.0
    %504 = vmatprep.subr.mxu0 0.0
    %505 = vmatpush1.msra.mxu0 0.0
    %506 = vmatprep.subr.mxu0 0.0
    %507 = vmatpush1.msra.mxu0 0.0
    %508 = vmatprep.subr.mxu0 0.0
    %509 = vmatpush1.msra.mxu0 0.0
    %510 = vmatprep.mubr.f32.mxu0 0.0
    %511 = vmatmul.mubr.f32.gmra.mrb[0].mxu0 %v444
    %v512 = vpop.f32.mrb[0].mxu0
    %v513 = vadd.f32 %v441, %v512
    %v514 = vpop.f32.mrb[0].mxu0
    %515 = vdwg.mxu0
    %vm516 = vcmask 91136
    %517 = vst.msk [vmem:[#allocation3] sm:$0x3] %vm516, %v513
    // Predicated region
    $region58: #{model_forward.19} parent=1 // pred_check
      _
    $region59: #{model_forward.19} parent=1 // pred_check_branch
      %519 = sbr.rel (0) target = $region61
    $region60: #{model_forward.19} parent=1 // pred_region
      %s521 = ssub.s32 32, 32
      %522 = vsyncadd [#allocation4], %s521
      %s524 = sshll.u32 [#allocation3], 4
      %s525 = int_to_ptr.vmem [resolvable:$true] %s524
      %527 = dma.vmem_to_hbm [thread:$0]  %s525, 32, %s14, [#allocation4]
    $region61: #{model_forward.19} parent=1 // pred_fallthru
      _
    // Predicated region
    $region62: #{model_forward.19} parent=1 // pred_check
      _
    $region63: #{model_forward.19} parent=1 // pred_check_branch
      %529 = sbr.rel (0) target = $region65
    $region64: #{model_forward.19} parent=1 // pred_region
      %530 = dma.done [#allocation4], 32
    $region65: #{model_forward.19} parent=1 // pred_fallthru
      _
    %531 = vsyncpa [#allocation4], 1

// kernel: model_forward.17
$region0: #{model_forward.17}
  #allocation0 [shape = 'u32[]', space=smem, size = 0x4, offset = 0x4, fixed_abs, tag = 'smem constant byte address 0x4 - core index']
  #allocation1 [shape = 'u32[144,128]{1,0:T(1,128)}', space=vmem, size = 0x12000, scoped, tag = 'internal scratch']
  %s0 = inlined_call_operand.vmem [shape: f32[8,2,32], index: 0, kind: input, shape index: {}]
  %s1 = inlined_call_operand.vmem [shape: f32[2,8], index: 1, kind: input, shape index: {}]
  %s2 = inlined_call_operand.vmem [shape: f32[8,32], index: 2, kind: input, shape index: {}]
  %s3 = inlined_call_operand.hbm [shape: f32[8,2,8], index: 3, kind: output, shape index: {0}]
  %s4 = inlined_call_operand.hbm [shape: f32[2,8], index: 4, kind: output, shape index: {1}]
  %s5 = inlined_call_operand.vmem [shape: f32[2,8], index: 5, kind: output, shape index: {2}]
  %6 = xla_tuple %s3, %s4, %s5
  %s7 = sld [smem:[#allocation0]]
  $region65: #{model_forward.17} parent=0
    _
  %s9 = ssub.s32 1, %s7
  %s10 = scalar_select 0, %s9, %s7
  $region1: #{model_forward.17} parent=0
    #allocation2 [shape = 'u8[2048]{0}', space=vmem, size = 0x800, scoped, tag = 'output window, operand 0']
    #allocation3 [shape = 's32[2]{0}', space=sflag, size = 0x8, scoped, tag = 'scoped memory for model_forward.17']
    #allocation4 [shape = 'u8[1024]{0}', space=vmem, size = 0x400, scoped, tag = 'output window, operand 1, single buffered']
    #allocation5 [shape = 's32[1]{0}', space=sflag, size = 0x4, scoped, tag = 'scoped memory for model_forward.17']
    %11 = vsyncpa [#allocation3], 0
    %s12 = scalar_lea.sflag [#allocation3], 1
    %13 = vsyncpa %s12, 0
    %14 = vsyncpa [#allocation5], 0
    loop: start=0, step=1, limit=10
    $region2: #{model_forward.17} parent=1 // loop_pre_header
      _
    $region3: #{model_forward.17} parent=1 // loop_header
      %s16 = sphi 0, %s20
      %p17 = scmp.ge.s32.totalorder %s16, 10
      %s28 = sphi 0, %s30
      %s31 = sphi 0, %s28
      %s32 = sphi 0, %s31
      %s48 = sphi 0, %s32
      %s52 = sphi 0, %s52
      %s54 = sphi 0, %s52
      %s55 = sphi 0, %s54
      %s69 = sphi 0, %s55
      %s73 = sphi 0, %s73
      %s75 = sphi 0, %s73
      %s76 = sphi 0, %s75
      %s90 = sphi 0, %s76
      %s98 = sphi 0, %s100
      %s101 = sphi 0, %s98
      %s102 = sphi 0, %s101
      %s118 = sphi 0, %s102
      %s122 = sphi 0, %s122
      %s124 = sphi 0, %s122
      %s125 = sphi 0, %s124
      %s139 = sphi 0, %s125
      %s143 = sphi 0, %s143
      %s145 = sphi 0, %s143
      %s146 = sphi 0, %s145
      %s160 = sphi 0, %s146
    $region4: #{model_forward.17} parent=1 // loop_header_branch
      %19 = sbr.rel (%p17) target = $region8
    $region5: #{model_forward.17} parent=1 // loop_body
      %s21 = ssub.s32 %s16, 1
      %s22 = ssub.s32 %s16, 2
      %s23 = sadd.s32 %s16, 1
      %s24 = ssub.s32 7, %s16
      %s25 = ssub.s32 7, %s23
      %s26 = ssub.s32 %s24, %s25
      %p27 = scmp.eq.s32.totalorder %s26, 0
      %s29 = sadd.s32 %s28, 1
      %s30 = scalar_select %p27, %s28, %s29
      %p33 = pneg %p27
      %p34 = scmp.eq.s32.totalorder %s16, 7
      %p35 = por %p33, %p34
      %p36 = scmp.ne.s32.totalorder %s28, %s31
      %p37 = scmp.eq.s32.totalorder %s16, 0
      %p38 = por %p36, %p37
      %p39 = scmp.ne.s32.totalorder %s28, %s31
      %p40 = scmp.eq.s32.totalorder %s21, 7
      %p41 = por %p39, %p40
      %p42 = scmp.ne.s32.totalorder %s31, %s32
      %p43 = scmp.eq.s32.totalorder %s21, 0
      %p44 = por %p42, %p43
      %p45 = scmp.ne.s32.totalorder %s31, %s32
      %p46 = scmp.eq.s32.totalorder %s22, 7
      %p47 = por %p45, %p46
      %p49 = scmp.ne.s32.totalorder %s32, %s48
      %p50 = scmp.eq.s32.totalorder %s22, 0
      %p51 = por %p49, %p50
      %s53 = sadd.s32 %s52, 1
      %p56 = scmp.eq.s32.totalorder %s16, 7
      %p57 = scmp.ne.s32.totalorder %s52, %s54
      %p58 = scmp.eq.s32.totalorder %s16, 0
      %p59 = por %p57, %p58
      %p60 = scmp.ne.s32.totalorder %s52, %s54
      %p61 = scmp.eq.s32.totalorder %s21, 7
      %p62 = por %p60, %p61
      %p63 = scmp.ne.s32.totalorder %s54, %s55
      %p64 = scmp.eq.s32.totalorder %s21, 0
      %p65 = por %p63, %p64
      %p66 = scmp.ne.s32.totalorder %s54, %s55
      %p67 = scmp.eq.s32.totalorder %s22, 7
      %p68 = por %p66, %p67
      %p70 = scmp.ne.s32.totalorder %s55, %s69
      %p71 = scmp.eq.s32.totalorder %s22, 0
      %p72 = por %p70, %p71
      %s74 = sadd.s32 %s73, 1
      %p77 = scmp.eq.s32.totalorder %s16, 7
      %p78 = scmp.ne.s32.totalorder %s73, %s75
      %p79 = scmp.eq.s32.totalorder %s16, 0
      %p80 = por %p78, %p79
      %p81 = scmp.ne.s32.totalorder %s73, %s75
      %p82 = scmp.eq.s32.totalorder %s21, 7
      %p83 = por %p81, %p82
      %p84 = scmp.ne.s32.totalorder %s75, %s76
      %p85 = scmp.eq.s32.totalorder %s21, 0
      %p86 = por %p84, %p85
      %p87 = scmp.ne.s32.totalorder %s75, %s76
      %p88 = scmp.eq.s32.totalorder %s22, 7
      %p89 = por %p87, %p88
      %p91 = scmp.ne.s32.totalorder %s76, %s90
      %p92 = scmp.eq.s32.totalorder %s22, 0
      %p93 = por %p91, %p92
      %s94 = ssub.s32 7, %s16
      %s95 = ssub.s32 7, %s23
      %s96 = ssub.s32 %s94, %s95
      %p97 = scmp.eq.s32.totalorder %s96, 0
      %s99 = sadd.s32 %s98, 1
      %s100 = scalar_select %p97, %s98, %s99
      %p103 = pneg %p97
      %p104 = scmp.eq.s32.totalorder %s16, 7
      %p105 = por %p103, %p104
      %p106 = scmp.ne.s32.totalorder %s98, %s101
      %p107 = scmp.eq.s32.totalorder %s16, 0
      %p108 = por %p106, %p107
      %p109 = scmp.ne.s32.totalorder %s98, %s101
      %p110 = scmp.eq.s32.totalorder %s21, 7
      %p111 = por %p109, %p110
      %p112 = scmp.ne.s32.totalorder %s101, %s102
      %p113 = scmp.eq.s32.totalorder %s21, 0
      %p114 = por %p112, %p113
      %p115 = scmp.ne.s32.totalorder %s101, %s102
      %p116 = scmp.eq.s32.totalorder %s22, 7
      %p117 = por %p115, %p116
      %p119 = scmp.ne.s32.totalorder %s102, %s118
      %p120 = scmp.eq.s32.totalorder %s22, 0
      %p121 = por %p119, %p120
      %s123 = sadd.s32 %s122, 1
      %p126 = scmp.eq.s32.totalorder %s16, 7
      %p127 = scmp.ne.s32.totalorder %s122, %s124
      %p128 = scmp.eq.s32.totalorder %s16, 0
      %p129 = por %p127, %p128
      %p130 = scmp.ne.s32.totalorder %s122, %s124
      %p131 = scmp.eq.s32.totalorder %s21, 7
      %p132 = por %p130, %p131
      %p133 = scmp.ne.s32.totalorder %s124, %s125
      %p134 = scmp.eq.s32.totalorder %s21, 0
      %p135 = por %p133, %p134
      %p136 = scmp.ne.s32.totalorder %s124, %s125
      %p137 = scmp.eq.s32.totalorder %s22, 7
      %p138 = por %p136, %p137
      %p140 = scmp.ne.s32.totalorder %s125, %s139
      %p141 = scmp.eq.s32.totalorder %s22, 0
      %p142 = por %p140, %p141
      %s144 = sadd.s32 %s143, 1
      %p147 = scmp.eq.s32.totalorder %s16, 7
      %p148 = scmp.ne.s32.totalorder %s143, %s145
      %p149 = scmp.eq.s32.totalorder %s16, 0
      %p150 = por %p148, %p149
      %p151 = scmp.ne.s32.totalorder %s143, %s145
      %p152 = scmp.eq.s32.totalorder %s21, 7
      %p153 = por %p151, %p152
      %p154 = scmp.ne.s32.totalorder %s145, %s146
      %p155 = scmp.eq.s32.totalorder %s21, 0
      %p156 = por %p154, %p155
      %p157 = scmp.ne.s32.totalorder %s145, %s146
      %p158 = scmp.eq.s32.totalorder %s22, 7
      %p159 = por %p157, %p158
      %p161 = scmp.ne.s32.totalorder %s146, %s160
      %p162 = scmp.eq.s32.totalorder %s22, 0
      %p163 = por %p161, %p162
      %p164 = scmp.le.s32.totalorder 1, %s16
      %p165 = scmp.lt.s32.totalorder %s16, 9
      %p166 = pnand %p164, %p165
      %p167 = pneg %p166
      // Predicated region
      $region9: #{model_forward.17} parent=5 // pred_check
        _
      $region10: #{model_forward.17} parent=5 // pred_check_branch
        %169 = sbr.rel (%p166) target = $region12
      $region11: #{model_forward.17} parent=5 // pred_region
        %s170 = ssub.s32 %s16, 1
        // Predicated region
        $region13: #{model_forward.17} parent=11 // pred_check
          %p171 = pneg %p65
        $region14: #{model_forward.17} parent=11 // pred_check_branch
          %173 = sbr.rel (%p171) target = $region16
        $region15: #{model_forward.17} parent=11 // pred_region
          _
        $region16: #{model_forward.17} parent=11 // pred_fallthru
          _
        // Predicated region
        $region17: #{model_forward.17} parent=11 // pred_check
          %p174 = pneg %p86
        $region18: #{model_forward.17} parent=11 // pred_check_branch
          %176 = sbr.rel (%p174) target = $region20
        $region19: #{model_forward.17} parent=11 // pred_region
          _
        $region20: #{model_forward.17} parent=11 // pred_fallthru
          _
      $region12: #{model_forward.17} parent=5 // pred_fallthru
        _
      %p177 = scmp.lt.s32.totalorder %s16, 8
      // Predicated region
      $region21: #{model_forward.17} parent=5 // pred_check
        %p178 = pneg %p177
      $region22: #{model_forward.17} parent=5 // pred_check_branch
        %180 = sbr.rel (%p178) target = $region24
      $region23: #{model_forward.17} parent=5 // pred_region
        // Predicated region
        $region25: #{model_forward.17} parent=23 // pred_check
          %p181 = pneg %p38
        $region26: #{model_forward.17} parent=23 // pred_check_branch
          %183 = sbr.rel (%p181) target = $region28
        $region27: #{model_forward.17} parent=23 // pred_region
          %s184 = ssub.s32 7, %s16
          %p185 = scmp.lt.s32.totalorder %s184, 7
          %s186 = scalar_select %p185, %s184, 7
          %s187 = smul.addr %s186, 2
          %s188 = scalar_lea.vmem %s0, %s187
          %s189 = ssub.s32 7, %s16
        $region28: #{model_forward.17} parent=23 // pred_fallthru
          _
      $region24: #{model_forward.17} parent=5 // pred_fallthru
        _
      %p190 = scmp.le.s32.totalorder 1, %s16
      %p191 = scmp.lt.s32.totalorder %s16, 9
      %p192 = pnand %p190, %p191
      %p193 = pneg %p192
      // Predicated region
      $region29: #{model_forward.17} parent=5 // pred_check
        _
      $region30: #{model_forward.17} parent=5 // pred_check_branch
        %195 = sbr.rel (%p192) target = $region32
      $region31: #{model_forward.17} parent=5 // pred_region
        %s196 = ssub.s32 %s16, 1
        %s197 = ssub.s32 7, %s21
        %p198 = scmp.lt.s32.totalorder %s197, 7
        %s199 = scalar_select %p198, %s197, 7
        %s200 = smul.addr %s199, 2
        %s201 = scalar_lea.vmem %s0, %s200
        %p202 = pneg %p44
        %p203 = pneg %p41
        %p204 = pneg %p65
        %p205 = pneg %p62
        %p206 = pneg %p86
        %p207 = pneg %p83
        %p208 = pneg %p114
        %p209 = pneg %p111
        %s210 = sand.u32 %s101, 1
        %s211 = scalar_lea.sflag [#allocation3], %s210
        %s212 = sand.u32 %s101, 1
        %s213 = smul.addr %s212, 2
        %s214 = scalar_lea.vmem [#allocation2], %s213
        %p215 = pneg %p135
        %p216 = pneg %p132
        %p217 = pneg %p156
        %p218 = pneg %p153
        %s219 = ssub.s32 7, %s21
        %p220 = scmp.lt.s32.totalorder %s219, 7
        %s221 = scalar_select %p220, %s219, 7
        %s222 = smul.addr %s221, 2
        %s223 = scalar_lea.vmem %s0, %s222
        %s224 = ssub.s32 7, %s21
        %s225 = ssub.s32 7, %s21
        %p226 = scmp.eq.s32.totalorder %s21, 0
        // Predicated region
        $region33: #{model_forward.17} parent=31 // pred_check
          %p227 = pneg %p226
        $region34: #{model_forward.17} parent=31 // pred_check_branch
          %229 = sbr.rel (%p227) target = $region36
        $region35: #{model_forward.17} parent=31 // pred_region
          %vm230 = vcmask 58368
          %231 = vst.msk [vmem:[#allocation4] sm:$0x3] %vm230, 0.0
          %232 = vst.msk [vmem:[%s5] sm:$0x3] %vm230, 0.0
        $region36: #{model_forward.17} parent=31 // pred_fallthru
          _
        %v233 = vld [vmem:[#allocation4] sm:$0x3]
        %v234 = vld [vmem:[%s5] sm:$0x3]
        %v235 = vld [vmem:[%s223] sm:$0x3]
        %v236 = vld [vmem:[%s2] sm:$0xff]
        %vm237 = vcmask 64512
        %v239 = vsel %vm237, %v233, 0
        %241 = vmatprep.subr.mxu0 0.0
        %242 = vmatpush1.msra.mxu0 %v236
        %243 = vmatprep.subr.mxu0 0.0
        %244 = vmatpush1.msra.mxu0 0.0
        %245 = vmatprep.subr.mxu0 0.0
        %246 = vmatpush1.msra.mxu0 0.0
        %247 = vmatprep.subr.mxu0 0.0
        %248 = vmatpush1.msra.mxu0 0.0
        %249 = vmatprep.subr.mxu0 0.0
        %250 = vmatpush1.msra.mxu0 0.0
        %251 = vmatprep.subr.mxu0 0.0
        %252 = vmatpush1.msra.mxu0 0.0
        %253 = vmatprep.subr.mxu0 0.0
        %254 = vmatpush1.msra.mxu0 0.0
        %255 = vmatprep.subr.mxu0 0.0
        %256 = vmatpush1.msra.mxu0 0.0
        %257 = vmatprep.subr.mxu0 0.0
        %258 = vmatpush1.msra.mxu0 0.0
        %259 = vmatprep.subr.mxu0 0.0
        %260 = vmatpush1.msra.mxu0 0.0
        %261 = vmatprep.subr.mxu0 0.0
        %262 = vmatpush1.msra.mxu0 0.0
        %263 = vmatprep.subr.mxu0 0.0
        %264 = vmatpush1.msra.mxu0 0.0
        %265 = vmatprep.subr.mxu0 0.0
        %266 = vmatpush1.msra.mxu0 0.0
        %267 = vmatprep.subr.mxu0 0.0
        %268 = vmatpush1.msra.mxu0 0.0
        %269 = vmatprep.subr.mxu0 0.0
        %270 = vmatpush1.msra.mxu0 0.0
        %271 = vmatprep.subr.mxu0 0.0
        %272 = vmatpush1.msra.mxu0 0.0
        %273 = vmatprep.subr.mxu0 0.0
        %274 = vmatpush1.msra.mxu0 0.0
        %275 = vmatprep.subr.mxu0 0.0
        %276 = vmatpush1.msra.mxu0 0.0
        %277 = vmatprep.subr.mxu0 0.0
        %278 = vmatpush1.msra.mxu0 0.0
        %279 = vmatprep.subr.mxu0 0.0
        %280 = vmatpush1.msra.mxu0 0.0
        %281 = vmatprep.subr.mxu0 0.0
        %282 = vmatpush1.msra.mxu0 0.0
        %283 = vmatprep.subr.mxu0 0.0
        %284 = vmatpush1.msra.mxu0 0.0
        %285 = vmatprep.subr.mxu0 0.0
        %286 = vmatpush1.msra.mxu0 0.0
        %287 = vmatprep.subr.mxu0 0.0
        %288 = vmatpush1.msra.mxu0 0.0
        %289 = vmatprep.subr.mxu0 0.0
        %290 = vmatpush1.msra.mxu0 0.0
        %291 = vmatprep.subr.mxu0 0.0
        %292 = vmatpush1.msra.mxu0 0.0
        %293 = vmatprep.subr.mxu0 0.0
        %294 = vmatpush1.msra.mxu0 0.0
        %295 = vmatprep.subr.mxu0 0.0
        %296 = vmatpush1.msra.mxu0 0.0
        %297 = vmatprep.subr.mxu0 0.0
        %298 = vmatpush1.msra.mxu0 0.0
        %299 = vmatprep.subr.mxu0 0.0
        %300 = vmatpush1.msra.mxu0 0.0
        %301 = vmatprep.subr.mxu0 0.0
        %302 = vmatpush1.msra.mxu0 0.0
        %303 = vmatprep.subr.mxu0 0.0
        %304 = vmatpush1.msra.mxu0 0.0
        %305 = vmatprep.mubr.f32.mxu0 0.0
        %306 = vmatmul.mubr.f32.gmra.mrb[0].mxu0 %v239
        %v307 = vpop.f32.mrb[0].mxu0
        %v308 = vadd.f32 0.0, %v307
        %v309 = vpop.f32.mrb[0].mxu0
        %310 = vdwg.mxu0
        %v311 = vadd.f32 %v235, %v308
        %v312 = vxor.u32 %v311, 2147483648
        %v313 = vmul.f32 %v312, 1.442695
        %v314 = vpow.pop %v313
        %v315 = vadd.f32 %v314, 1.0
        %v316 = vrcp.pop %v315
        %v317 = vmul.f32 1.0, %v316
        %v318 = vtanh.pop %v311
        %320 = vrot.lane.b32.xlu0 %v234, 8
        %v321 = vpop.permute.xlu0 %320
        %v323 = vmul.f32 %v317, %v321
        %325 = vrot.lane.b32.xlu0 %v318, 112
        %v326 = vpop.permute.xlu0 %325
        %v328 = vmul.f32 %v317, %v326
        %330 = vrot.lane.b32.xlu0 %v328, 8
        %v331 = vpop.permute.xlu0 %330
        %v333 = vadd.f32 %v323, %v331
        %v334 = vtanh.pop %v333
        %336 = vrot.lane.b32.xlu0 %v334, 16
        %v337 = vpop.permute.xlu0 %336
        %v339 = vmul.f32 %v317, %v337
        %s340 = ssub.s32 7, %s21
        %v341 = vlaneseq
        %v342 = vand.u32 %v341, 127
        %v343 = vstv %s340
        %vm344 = vcmp.eq.s32.totalorder %v342, %v343
        %v345 = vld [vmem:[%s1] sm:$0x3]
        %v346 = vsel %vm344, %v345, 0.0
        %vm347 = vcmask 58368
        %v348 = vsel %vm347, %v346, 0.0
        %349 = vadd.xlane.f32.xlu0 %v348
        %v350 = vpop.xlane.xlu0 %349
        %vm351 = vcmp.gt.f32.partialorder %v350, 0.0
        %v352 = vsel %vm351, 1, 0
        %vm353 = vcmp.eq.s32.totalorder %v352, 1
        %354 = vrot.lane.b32.xlu0 %v233, 24
        %v355 = vpop.permute.xlu0 %354
        %v357 = vsel %vm353, %v339, %v355
        %v358 = vsel %vm353, %v333, %v321
        %360 = vrot.lane.b32.xlu0 %v357, 104
        %v361 = vpop.permute.xlu0 %360
        %363 = vst.msk [vmem:[#allocation4] sm:$0x3] %vm347, %v361
        %365 = vrot.lane.b32.xlu0 %v358, 120
        %v366 = vpop.permute.xlu0 %365
        %368 = vst.msk [vmem:[%s5] sm:$0x3] %vm347, %v366
        %v369 = vmul.f32 %v357, %v350
        %371 = vrot.lane.b32.xlu0 %v369, 104
        %v372 = vpop.permute.xlu0 %371
        %374 = vst.msk [vmem:[%s214] sm:$0x3] %vm347, %v372
        %s375 = sand.u32 %s101, 1
        %s376 = scalar_lea.sflag [#allocation3], %s375
        %s377 = sand.u32 %s101, 1
        %s378 = smul.addr %s377, 2
        %s379 = scalar_lea.vmem [#allocation2], %s378
        // Predicated region
        $region37: #{model_forward.17} parent=31 // pred_check
          %p380 = pneg %p111
        $region38: #{model_forward.17} parent=31 // pred_check_branch
          %382 = sbr.rel (%p380) target = $region40
        $region39: #{model_forward.17} parent=31 // pred_region
          %s383 = ssub.s32 7, %s21
          %s385 = ssub.s32 32, 32
          %386 = vsyncadd %s376, %s385
          %s387 = smul.addr %s383, 32
          %s388 = scalar_lea.hbm %s3, %s387
          %s390 = sshll.u32 %s379, 4
          %s391 = int_to_ptr.vmem [resolvable:$true] %s390
          %393 = dma.vmem_to_hbm [thread:$0]  %s391, 32, %s388, %s376
        $region40: #{model_forward.17} parent=31 // pred_fallthru
          _
        // Predicated region
        $region41: #{model_forward.17} parent=31 // pred_check
          %p394 = pneg %p132
        $region42: #{model_forward.17} parent=31 // pred_check_branch
          %396 = sbr.rel (%p394) target = $region44
        $region43: #{model_forward.17} parent=31 // pred_region
          %s398 = ssub.s32 32, 32
          %399 = vsyncadd [#allocation5], %s398
          %s401 = sshll.u32 [#allocation4], 4
          %s402 = int_to_ptr.vmem [resolvable:$true] %s401
          %404 = dma.vmem_to_hbm [thread:$0]  %s402, 32, %s4, [#allocation5]
        $region44: #{model_forward.17} parent=31 // pred_fallthru
          _
        // Predicated region
        $region45: #{model_forward.17} parent=31 // pred_check
          %p405 = pneg %p153
        $region46: #{model_forward.17} parent=31 // pred_check_branch
          %407 = sbr.rel (%p405) target = $region48
        $region47: #{model_forward.17} parent=31 // pred_region
          _
        $region48: #{model_forward.17} parent=31 // pred_fallthru
          _
        // Predicated region
        $region49: #{model_forward.17} parent=31 // pred_check
          %p408 = pneg %p132
        $region50: #{model_forward.17} parent=31 // pred_check_branch
          %410 = sbr.rel (%p408) target = $region52
        $region51: #{model_forward.17} parent=31 // pred_region
          %411 = dma.done [#allocation5], 32
        $region52: #{model_forward.17} parent=31 // pred_fallthru
          _
        // Predicated region
        $region53: #{model_forward.17} parent=31 // pred_check
          %p412 = pneg %p153
        $region54: #{model_forward.17} parent=31 // pred_check_branch
          %414 = sbr.rel (%p412) target = $region56
        $region55: #{model_forward.17} parent=31 // pred_region
          _
        $region56: #{model_forward.17} parent=31 // pred_fallthru
          _
      $region32: #{model_forward.17} parent=5 // pred_fallthru
        _
      %p415 = scmp.le.s32.totalorder 2, %s16
      // Predicated region
      $region57: #{model_forward.17} parent=5 // pred_check
        %p416 = pneg %p415
      $region58: #{model_forward.17} parent=5 // pred_check_branch
        %418 = sbr.rel (%p416) target = $region60
      $region59: #{model_forward.17} parent=5 // pred_region
        %s419 = ssub.s32 %s16, 2
        // Predicated region
        $region61: #{model_forward.17} parent=59 // pred_check
          %p420 = pneg %p117
        $region62: #{model_forward.17} parent=59 // pred_check_branch
          %422 = sbr.rel (%p420) target = $region64
        $region63: #{model_forward.17} parent=59 // pred_region
          %s423 = sand.u32 %s102, 1
          %s424 = scalar_lea.sflag [#allocation3], %s423
          %s425 = sand.u32 %s102, 1
          %s426 = smul.addr %s425, 2
          %s427 = scalar_lea.vmem [#allocation2], %s426
          %428 = dma.done %s424, 32
        $region64: #{model_forward.17} parent=59 // pred_fallthru
          _
      $region60: #{model_forward.17} parent=5 // pred_fallthru
        _
    $region6: #{model_forward.17} parent=1 // loop_footer
      %s20 = sadd.s32 1, %s16
    $region7: #{model_forward.17} parent=1 // loop_footer_branch
      %15 = sbr.rel target = $region3
    $region8: #{model_forward.17} parent=1 // loop_exit
      _
    %429 = vsyncpa [#allocation3], 1
    %s430 = scalar_lea.sflag [#allocation3], 1
    %431 = vsyncpa %s430, 1
    %432 = vsyncpa [#allocation5], 1

</llo_original>
